<compile_context>
chip_gen: v7x
topology: tpu7x:2x2x1
jax: 0.10.0
libtpu: 0.0.40
codegen_flags: <defaults>
</compile_context>

<pallas_src>
import functools

import jax
import jax.numpy as jnp
from jax import lax
from jax.experimental import pallas as pl
from jax.experimental.pallas import tpu as pltpu


def _round_up(x, m):
    return ((x + m - 1) // m) * m


def _pick_tile(n, candidates):
    """Largest candidate tile that evenly divides n, else the full extent."""
    for c in candidates:
        if n % c == 0:
            return c
    return n


def _vmem_limit_bytes():
    """Per-generation VMEM budget: ~3/4 of physical capacity (96 MiB on
    v5e/v6e's 128 MiB, 48 MiB on v7x's 64 MiB)."""
    cap = 128 * 1024 * 1024
    try:
        cap = int(pltpu.get_tpu_info().vmem_capacity_bytes)
    except Exception:
        pass
    return (cap * 3) // 4


# --------------------------------------------------------------------------
# QKV projection fused with the head split.
#   non-transposed: out[b, h, n, d]   (used for q — pre-scaled — and v)
#   transposed    : out[b, h, d, n]   (used for K, so scores need no relayout)
# --------------------------------------------------------------------------
def _proj_heads_kernel(x_ref, w_ref, b_ref, o_ref, *, scale, transposed):
    x = x_ref[0]                                            # (tm, C_in)
    if transposed:
        # w_ref is (C_out, C_in): contract the minor dim of both operands
        # (same MXU pattern as q @ k^T) -> (C_out, tm).  K lands directly in
        # per-head (d, tm) layout with no in-kernel transpose.
        acc = lax.dot_general(w_ref[...], x,
                              dimension_numbers=(((1,), (1,)), ((), ())),
                              preferred_element_type=jnp.float32)
    else:
        acc = jnp.dot(x, w_ref[...], preferred_element_type=jnp.float32)
    acc = acc + b_ref[...].astype(jnp.float32)
    if scale != 1.0:
        acc = acc * scale                                   # fold softmax scale into q
    num_heads = o_ref.shape[1]
    if transposed:
        d = acc.shape[0] // num_heads
        for h in range(num_heads):                          # static loop over heads
            o_ref[0, h] = acc[h * d:(h + 1) * d, :].astype(o_ref.dtype)
    else:
        d = acc.shape[1] // num_heads
        for h in range(num_heads):
            o_ref[0, h] = acc[:, h * d:(h + 1) * d].astype(o_ref.dtype)


def _proj_heads(x, w, b, *, num_heads, scale, transposed, vmem_limit):
    B, Np, C = x.shape
    d = C // num_heads
    tm = _pick_tile(Np, (256, 128))
    if transposed:
        out_shape = jax.ShapeDtypeStruct((B, num_heads, d, Np), x.dtype)
        out_spec = pl.BlockSpec((1, num_heads, d, tm), lambda bi, i: (bi, 0, 0, i))
    else:
        out_shape = jax.ShapeDtypeStruct((B, num_heads, Np, d), x.dtype)
        out_spec = pl.BlockSpec((1, num_heads, tm, d), lambda bi, i: (bi, 0, i, 0))
    kernel = functools.partial(_proj_heads_kernel, scale=scale, transposed=transposed)
    return pl.pallas_call(
        kernel,
        out_shape=out_shape,
        grid_spec=pltpu.PrefetchScalarGridSpec(
            num_scalar_prefetch=0,
            grid=(B, Np // tm),
            in_specs=[
                pl.BlockSpec((1, tm, C), lambda bi, i: (bi, i, 0)),   # row tile of x
                pl.BlockSpec(w.shape, lambda bi, i: (0, 0)),          # (C,C) weight, revisited
                pl.BlockSpec(b.shape, lambda bi, i: (0, 0)),          # bias, revisited
            ],
            out_specs=out_spec,
        ),
        compiler_params=pltpu.CompilerParams(
            dimension_semantics=("parallel", "parallel"),
            vmem_limit_bytes=vmem_limit),
    )(x, w, b)


# --------------------------------------------------------------------------
# Flash attention: grid (B, Nq tiles, Nk tiles), heads batched, online softmax.
# Output is head-merged and lane-dense: (B, N, C) with blocks (1, tq, C).
# --------------------------------------------------------------------------
def _flash_kernel(q_ref, kt_ref, v_ref, o_ref, m_sc, l_sc, acc_sc, *, n_valid, tk):
    ki = pl.program_id(2)

    @pl.when(ki == 0)
    def _():
        m_sc[...] = jnp.full_like(m_sc, -jnp.inf)
        l_sc[...] = jnp.zeros_like(l_sc)
        acc_sc[...] = jnp.zeros_like(acc_sc)

    q = q_ref[0]      # (H, tq, d), softmax scale already folded in
    kt = kt_ref[0]    # (H, d, tk), pre-transposed K
    v = v_ref[0]      # (H, tk, d)

    # Natural (tq, d) x (d, tk) scores per head, batched over heads (no scale
    # multiply, no K relayout in the kv inner loop).
    s = lax.dot_general(q, kt,
                        dimension_numbers=(((2,), (1,)), ((0,), (0,))),
                        preferred_element_type=jnp.float32)            # (H, tq, tk)

    if n_valid is not None:
        # Mask padded kv columns (sequence padded to a tile multiple).
        col = ki * tk + lax.broadcasted_iota(jnp.int32, s.shape, 2)
        s = jnp.where(col < n_valid, s, -jnp.inf)

    m_prev = m_sc[...]                                                  # (H, tq, 1)
    m_new = jnp.maximum(m_prev, jnp.max(s, axis=-1, keepdims=True))
    alpha = jnp.exp(m_prev - m_new)
    p = jnp.exp(s - m_new)                                              # (H, tq, tk)
    l_sc[...] = alpha * l_sc[...] + jnp.sum(p, axis=-1, keepdims=True)
    pv = lax.dot_general(p.astype(v.dtype), v,
                         dimension_numbers=(((2,), (1,)), ((0,), (0,))),
                         preferred_element_type=jnp.float32)            # (H, tq, d)
    acc_sc[...] = alpha * acc_sc[...] + pv
    m_sc[...] = m_new

    @pl.when(ki == pl.num_programs(2) - 1)
    def _():
        num_heads, _, d = acc_sc.shape
        inv_l = pl.reciprocal(l_sc[...], approx=False)    # exact; once per q tile
        out = acc_sc[...] * inv_l                         # (H, tq, d) f32
        # Head-merged, lane-dense (tq, C) store -> unmasked HBM writeback.
        for h in range(num_heads):
            o_ref[0, :, h * d:(h + 1) * d] = out[h].astype(o_ref.dtype)


def _flash_attention(q, kt, v, *, n_valid, vmem_limit):
    B, H, Np, d = q.shape
    C = H * d
    tq = _pick_tile(Np, (128,))          # capped to bound (H,tq,tk) f32 temporaries
    tk = _pick_tile(Np, (256, 128))
    kernel = functools.partial(_flash_kernel, n_valid=n_valid, tk=tk)
    return pl.pallas_call(
        kernel,
        out_shape=jax.ShapeDtypeStruct((B, Np, C), q.dtype),
        grid_spec=pltpu.PrefetchScalarGridSpec(
            num_scalar_prefetch=0,
            grid=(B, Np // tq, Np // tk),
            in_specs=[
                pl.BlockSpec((1, H, tq, d), lambda b, qi, ki: (b, 0, qi, 0)),
                pl.BlockSpec((1, H, d, tk), lambda b, qi, ki: (b, 0, 0, ki)),
                pl.BlockSpec((1, H, tk, d), lambda b, qi, ki: (b, 0, ki, 0)),
            ],
            out_specs=pl.BlockSpec((1, tq, C), lambda b, qi, ki: (b, qi, 0)),
            scratch_shapes=[
                pltpu.VMEM((H, tq, 1), jnp.float32),   # running max
                pltpu.VMEM((H, tq, 1), jnp.float32),   # running denominator
                pltpu.VMEM((H, tq, d), jnp.float32),   # output accumulator
            ],
        ),
        compiler_params=pltpu.CompilerParams(
            dimension_semantics=("parallel", "parallel", "arbitrary"),
            vmem_limit_bytes=vmem_limit),
    )(q, kt, v)


# --------------------------------------------------------------------------
# Column-tiled linear: out = x @ W + b.  Weight tile index depends only on the
# outer (column) grid axis, so it is revisited across the inner row axis.
# --------------------------------------------------------------------------
def _linear_kernel(x_ref, w_ref, b_ref, o_ref):
    acc = jnp.dot(x_ref[...], w_ref[...], preferred_element_type=jnp.float32)
    o_ref[...] = (acc + b_ref[...].astype(jnp.float32)).astype(o_ref.dtype)


def _linear(x2d, w, b, *, vmem_limit):
    M, K = x2d.shape
    Kw, Nout = w.shape
    assert K == Kw
    tm = _pick_tile(M, (512, 256, 128))
    tn = _pick_tile(Nout, (1024, 512, 256, 128))
    return pl.pallas_call(
        _linear_kernel,
        out_shape=jax.ShapeDtypeStruct((M, Nout), x2d.dtype),
        grid_spec=pltpu.PrefetchScalarGridSpec(
            num_scalar_prefetch=0,
            grid=(Nout // tn, M // tm),            # column axis outer, rows inner
            in_specs=[
                pl.BlockSpec((tm, K), lambda j, i: (i, 0)),
                pl.BlockSpec((K, tn), lambda j, i: (0, j)),   # constant across inner axis
                pl.BlockSpec((1, tn), lambda j, i: (0, j)),
            ],
            out_specs=pl.BlockSpec((tm, tn), lambda j, i: (i, j)),
        ),
        compiler_params=pltpu.CompilerParams(
            dimension_semantics=("parallel", "parallel"),
            vmem_limit_bytes=vmem_limit),
    )(x2d, w, b)


# --------------------------------------------------------------------------
# Full Attention forward.
# --------------------------------------------------------------------------
@functools.partial(jax.jit, static_argnames=("num_heads",))
def attention_forward(x, w_qkv, b_qkv, w_proj, b_proj, *, num_heads):
    B, N, C = x.shape
    assert C % num_heads == 0
    d = C // num_heads
    scale = float(d) ** -0.5
    vmem_limit = _vmem_limit_bytes()

    # Pad the sequence so attention tiles stay in the tuned regime; padded kv
    # columns are masked in-kernel, padded q rows are sliced off at the end.
    Np = _round_up(N, 128) if N >= 128 else _round_up(N, 8)
    xp = x if Np == N else jnp.pad(x, ((0, 0), (0, Np - N), (0, 0)))
    n_valid = None if Np == N else N

    # Weight-sized relayouts (in a real deployment these would be pre-computed
    # once at load time): per-group (C, C) weights, K weight pre-transposed.
    w_q = w_qkv[:, :C]
    w_kT = w_qkv[:, C:2 * C].T                  # (C_out, C_in)
    w_v = w_qkv[:, 2 * C:]
    b_q = b_qkv[:C].reshape(1, C)
    b_k = b_qkv[C:2 * C].reshape(C, 1)
    b_v = b_qkv[2 * C:].reshape(1, C)

    # 1) QKV projections fused with the head split (Pallas).
    q = _proj_heads(xp, w_q, b_q, num_heads=num_heads, scale=scale,
                    transposed=False, vmem_limit=vmem_limit)     # (B, H, Np, d), scaled
    kt = _proj_heads(xp, w_kT, b_k, num_heads=num_heads, scale=1.0,
                     transposed=True, vmem_limit=vmem_limit)     # (B, H, d, Np)
    v = _proj_heads(xp, w_v, b_v, num_heads=num_heads, scale=1.0,
                    transposed=False, vmem_limit=vmem_limit)     # (B, H, Np, d)

    # 2) Flash attention with lane-dense, head-merged output (Pallas).
    o = _flash_attention(q, kt, v, n_valid=n_valid, vmem_limit=vmem_limit)  # (B, Np, C)

    # 3) Output projection (Pallas, column-tiled).
    out = _linear(o.reshape(B * Np, C), w_proj, b_proj.reshape(1, C),
                  vmem_limit=vmem_limit)
    out = out.reshape(B, Np, C)
    return out if Np == N else out[:, :N, :]


def attention_reference(x, w_qkv, b_qkv, w_proj, b_proj, *, num_heads):
    # Plain-JAX reference mirroring the PyTorch forward (eval, no mask, no cache).
    B, N, C = x.shape
    d = C // num_heads
    qkv = jnp.einsum("bnc,ck->bnk", x, w_qkv) + b_qkv
    qkv = qkv.reshape(B, N, 3, num_heads, d).transpose(2, 0, 3, 1, 4)
    q, k, v = qkv[0], qkv[1], qkv[2]
    s = jnp.einsum("bhqd,bhkd->bhqk", q, k) / (d ** 0.5)
    p = jax.nn.softmax(s, axis=-1)
    o = jnp.einsum("bhqk,bhkd->bhqd", p, v)
    o = o.transpose(0, 2, 1, 3).reshape(B, N, C)
    return jnp.einsum("bnc,ck->bnk", o, w_proj) + b_proj


if __name__ == "__main__":
    num_heads = 4
    B, N, C = 2, 16, 32

    key = jax.random.PRNGKey(0)
    kx, kwq, kbq, kwp, kbp, kx2 = jax.random.split(key, 6)

    x = jax.random.normal(kx, (B, N, C), dtype=jnp.float32)
    w_qkv = jax.random.normal(kwq, (C, 3 * C), dtype=jnp.float32) * (C ** -0.5)
    b_qkv = jax.random.normal(kbq, (3 * C,), dtype=jnp.float32) * 0.02
    w_proj = jax.random.normal(kwp, (C, C), dtype=jnp.float32) * (C ** -0.5)
    b_proj = jax.random.normal(kbp, (C,), dtype=jnp.float32) * 0.02

    # float32 path.
    ref = attention_reference(x, w_qkv, b_qkv, w_proj, b_proj, num_heads=num_heads)
    out = jax.block_until_ready(
        attention_forward(x, w_qkv, b_qkv, w_proj, b_proj, num_heads=num_heads))
    assert out.shape == (B, N, C)
    assert jnp.allclose(out, ref, atol=2e-4, rtol=2e-4), "f32 mismatch vs reference"

    # Non-divisible sequence length -> wrapper pads N, kernel masks padded kv columns.
    N2 = 12
    x2 = jax.random.normal(kx2, (1, N2, C), dtype=jnp.float32)
    ref2 = attention_reference(x2, w_qkv, b_qkv, w_proj, b_proj, num_heads=num_heads)
    out2 = jax.block_until_ready(
        attention_forward(x2, w_qkv, b_qkv, w_proj, b_proj, num_heads=num_heads))
    assert out2.shape == (1, N2, C)
    assert jnp.allclose(out2, ref2, atol=2e-4, rtol=2e-4), "padded-N mismatch vs reference"

    # bf16 fast path: MXU operands bf16, f32 accumulation / softmax statistics.
    bf = lambda a: a.astype(jnp.bfloat16)
    out_bf = jax.block_until_ready(
        attention_forward(bf(x), bf(w_qkv), bf(b_qkv), bf(w_proj), bf(b_proj),
                          num_heads=num_heads))
    assert jnp.allclose(out_bf.astype(jnp.float32), ref, atol=1e-1, rtol=1e-1), \
        "bf16 mismatch vs reference"

    print("KERNEL_OK")
</pallas_src>

<mosaic_0001>
module attributes {stable_mosaic.version = 11 : i64} {
  func.func @_proj_heads_kernel(%arg0: i32, %arg1: i32, %arg2: memref<1x16x32xf32, #tpu.memory_space<vmem>>, %arg3: memref<32x32xf32, #tpu.memory_space<vmem>>, %arg4: memref<1x32xf32, #tpu.memory_space<vmem>>, %arg5: memref<1x4x16x8xf32, #tpu.memory_space<vmem>>) attributes {dimension_semantics = [#tpu.dimension_semantics<parallel>, #tpu.dimension_semantics<parallel>], iteration_bounds = array<i64: 2, 1>, scalar_prefetch = 0 : i64, scratch_operands = 0 : i64, tpu.core_type = #tpu.core_type<tc>, window_params = [{transform_indices = @transform_0, window_bounds = array<i64: 1, 16, 32>}, {pipeline_mode = #tpu.pipeline_mode<synchronous>, transform_indices = @transform_1, window_bounds = array<i64: 32, 32>}, {pipeline_mode = #tpu.pipeline_mode<synchronous>, transform_indices = @transform_2, window_bounds = array<i64: 1, 32>}, {transform_indices = @transform_3, window_bounds = array<i64: 1, 4, 16, 8>}]} {
    %c0 = arith.constant 0 : index
    %c0_0 = arith.constant 0 : index
    %c0_1 = arith.constant 0 : index
    %0 = vector.load %arg2[%c0, %c0_0, %c0_1] : memref<1x16x32xf32, #tpu.memory_space<vmem>>, vector<1x16x32xf32>
    %1 = vector.shape_cast %0 : vector<1x16x32xf32> to vector<16x32xf32>
    %c0_2 = arith.constant 0 : index
    %c0_3 = arith.constant 0 : index
    %2 = vector.load %arg3[%c0_2, %c0_3] : memref<32x32xf32, #tpu.memory_space<vmem>>, vector<32x32xf32>
    %cst = arith.constant dense<0.000000e+00> : vector<16x32xf32>
    %3 = tpu.matmul %1, %2, %cst {dimension_numbers = #tpu.dot_dimension_numbers<[1], [0], [0], [1], [0, 0, 1, 1], [], []>} : vector<16x32xf32>, vector<32x32xf32>, vector<16x32xf32> -> vector<16x32xf32>
    %c0_4 = arith.constant 0 : index
    %c0_5 = arith.constant 0 : index
    %4 = vector.load %arg4[%c0_4, %c0_5] : memref<1x32xf32, #tpu.memory_space<vmem>>, vector<1x32xf32>
    %5 = vector.broadcast %4 : vector<1x32xf32> to vector<16x32xf32>
    %6 = arith.addf %3, %5 : vector<16x32xf32>
    %cst_6 = arith.constant 0.353553385 : f32
    %7 = vector.broadcast %cst_6 : f32 to vector<16x32xf32>
    %8 = arith.mulf %6, %7 : vector<16x32xf32>
    %9 = vector.extract_strided_slice %8 {offsets = [0, 0], sizes = [16, 8], strides = [1, 1]} : vector<16x32xf32> to vector<16x8xf32>
    %c0_7 = arith.constant 0 : index
    %c0_8 = arith.constant 0 : index
    %c0_9 = arith.constant 0 : index
    %c0_10 = arith.constant 0 : index
    %10 = vector.load %arg5[%c0_7, %c0_8, %c0_9, %c0_10] : memref<1x4x16x8xf32, #tpu.memory_space<vmem>>, vector<1x1x16x8xf32>
    %11 = vector.shape_cast %10 : vector<1x1x16x8xf32> to vector<16x8xf32>
    %12 = vector.shape_cast %9 : vector<16x8xf32> to vector<1x1x16x8xf32>
    tpu.vector_store %arg5[%c0_7, %c0_8, %c0_9, %c0_10], %12 {strides = array<i32>} : memref<1x4x16x8xf32, #tpu.memory_space<vmem>>, vector<1x1x16x8xf32>,
    %13 = vector.extract_strided_slice %8 {offsets = [0, 8], sizes = [16, 8], strides = [1, 1]} : vector<16x32xf32> to vector<16x8xf32>
    %c0_11 = arith.constant 0 : index
    %c1 = arith.constant 1 : index
    %c0_12 = arith.constant 0 : index
    %c0_13 = arith.constant 0 : index
    %14 = vector.load %arg5[%c0_11, %c1, %c0_12, %c0_13] : memref<1x4x16x8xf32, #tpu.memory_space<vmem>>, vector<1x1x16x8xf32>
    %15 = vector.shape_cast %14 : vector<1x1x16x8xf32> to vector<16x8xf32>
    %16 = vector.shape_cast %13 : vector<16x8xf32> to vector<1x1x16x8xf32>
    tpu.vector_store %arg5[%c0_11, %c1, %c0_12, %c0_13], %16 {strides = array<i32>} : memref<1x4x16x8xf32, #tpu.memory_space<vmem>>, vector<1x1x16x8xf32>,
    %17 = vector.extract_strided_slice %8 {offsets = [0, 16], sizes = [16, 8], strides = [1, 1]} : vector<16x32xf32> to vector<16x8xf32>
    %c0_14 = arith.constant 0 : index
    %c2 = arith.constant 2 : index
    %c0_15 = arith.constant 0 : index
    %c0_16 = arith.constant 0 : index
    %18 = vector.load %arg5[%c0_14, %c2, %c0_15, %c0_16] : memref<1x4x16x8xf32, #tpu.memory_space<vmem>>, vector<1x1x16x8xf32>
    %19 = vector.shape_cast %18 : vector<1x1x16x8xf32> to vector<16x8xf32>
    %20 = vector.shape_cast %17 : vector<16x8xf32> to vector<1x1x16x8xf32>
    tpu.vector_store %arg5[%c0_14, %c2, %c0_15, %c0_16], %20 {strides = array<i32>} : memref<1x4x16x8xf32, #tpu.memory_space<vmem>>, vector<1x1x16x8xf32>,
    %21 = vector.extract_strided_slice %8 {offsets = [0, 24], sizes = [16, 8], strides = [1, 1]} : vector<16x32xf32> to vector<16x8xf32>
    %c0_17 = arith.constant 0 : index
    %c3 = arith.constant 3 : index
    %c0_18 = arith.constant 0 : index
    %c0_19 = arith.constant 0 : index
    %22 = vector.load %arg5[%c0_17, %c3, %c0_18, %c0_19] : memref<1x4x16x8xf32, #tpu.memory_space<vmem>>, vector<1x1x16x8xf32>
    %23 = vector.shape_cast %22 : vector<1x1x16x8xf32> to vector<16x8xf32>
    %24 = vector.shape_cast %21 : vector<16x8xf32> to vector<1x1x16x8xf32>
    tpu.vector_store %arg5[%c0_17, %c3, %c0_18, %c0_19], %24 {strides = array<i32>} : memref<1x4x16x8xf32, #tpu.memory_space<vmem>>, vector<1x1x16x8xf32>,
    return
  }
  func.func @transform_0(%arg0: i32, %arg1: i32) -> (i32, i32, i32) {
    %c0_i32 = arith.constant 0 : i32
    %c0_i32_0 = arith.constant 0 : i32
    return %arg0, %arg1, %c0_i32 : i32, i32, i32
  }
  func.func @transform_1(%arg0: i32, %arg1: i32) -> (i32, i32) {
    %c0_i32 = arith.constant 0 : i32
    %c0_i32_0 = arith.constant 0 : i32
    %c0_i32_1 = arith.constant 0 : i32
    return %c0_i32, %c0_i32_0 : i32, i32
  }
  func.func @transform_2(%arg0: i32, %arg1: i32) -> (i32, i32) {
    %c0_i32 = arith.constant 0 : i32
    %c0_i32_0 = arith.constant 0 : i32
    %c0_i32_1 = arith.constant 0 : i32
    return %c0_i32, %c0_i32_0 : i32, i32
  }
  func.func @transform_3(%arg0: i32, %arg1: i32) -> (i32, i32, i32, i32) {
    %c0_i32 = arith.constant 0 : i32
    %c0_i32_0 = arith.constant 0 : i32
    %c0_i32_1 = arith.constant 0 : i32
    return %arg0, %c0_i32, %arg1, %c0_i32_0 : i32, i32, i32, i32
  }
}

module attributes {stable_mosaic.version = 11 : i64} {
  func.func @_proj_heads_kernel(%arg0: i32, %arg1: i32, %arg2: memref<1x16x32xf32, #tpu.memory_space<vmem>>, %arg3: memref<32x32xf32, #tpu.memory_space<vmem>>, %arg4: memref<32x1xf32, #tpu.memory_space<vmem>>, %arg5: memref<1x4x8x16xf32, #tpu.memory_space<vmem>>) attributes {dimension_semantics = [#tpu.dimension_semantics<parallel>, #tpu.dimension_semantics<parallel>], iteration_bounds = array<i64: 2, 1>, scalar_prefetch = 0 : i64, scratch_operands = 0 : i64, tpu.core_type = #tpu.core_type<tc>, window_params = [{transform_indices = @transform_0, window_bounds = array<i64: 1, 16, 32>}, {pipeline_mode = #tpu.pipeline_mode<synchronous>, transform_indices = @transform_1, window_bounds = array<i64: 32, 32>}, {pipeline_mode = #tpu.pipeline_mode<synchronous>, transform_indices = @transform_2, window_bounds = array<i64: 32, 1>}, {transform_indices = @transform_3, window_bounds = array<i64: 1, 4, 8, 16>}]} {
    %c0 = arith.constant 0 : index
    %c0_0 = arith.constant 0 : index
    %c0_1 = arith.constant 0 : index
    %0 = vector.load %arg2[%c0, %c0_0, %c0_1] : memref<1x16x32xf32, #tpu.memory_space<vmem>>, vector<1x16x32xf32>
    %1 = vector.shape_cast %0 : vector<1x16x32xf32> to vector<16x32xf32>
    %c0_2 = arith.constant 0 : index
    %c0_3 = arith.constant 0 : index
    %2 = vector.load %arg3[%c0_2, %c0_3] : memref<32x32xf32, #tpu.memory_space<vmem>>, vector<32x32xf32>
    %cst = arith.constant dense<0.000000e+00> : vector<32x16xf32>
    %3 = tpu.matmul %2, %1, %cst {dimension_numbers = #tpu.dot_dimension_numbers<[1], [1], [0], [0], [0, 0, 1, 0], [], []>} : vector<32x32xf32>, vector<16x32xf32>, vector<32x16xf32> -> vector<32x16xf32>
    %c0_4 = arith.constant 0 : index
    %c0_5 = arith.constant 0 : index
    %4 = vector.load %arg4[%c0_4, %c0_5] : memref<32x1xf32, #tpu.memory_space<vmem>>, vector<32x1xf32>
    %5 = vector.broadcast %4 : vector<32x1xf32> to vector<32x16xf32>
    %6 = arith.addf %3, %5 : vector<32x16xf32>
    %7 = vector.extract_strided_slice %6 {offsets = [0, 0], sizes = [8, 16], strides = [1, 1]} : vector<32x16xf32> to vector<8x16xf32>
    %c0_6 = arith.constant 0 : index
    %c0_7 = arith.constant 0 : index
    %c0_8 = arith.constant 0 : index
    %c0_9 = arith.constant 0 : index
    %8 = vector.load %arg5[%c0_6, %c0_7, %c0_8, %c0_9] : memref<1x4x8x16xf32, #tpu.memory_space<vmem>>, vector<1x1x8x16xf32>
    %9 = vector.shape_cast %8 : vector<1x1x8x16xf32> to vector<8x16xf32>
    %10 = vector.shape_cast %7 : vector<8x16xf32> to vector<1x1x8x16xf32>
    tpu.vector_store %arg5[%c0_6, %c0_7, %c0_8, %c0_9], %10 {strides = array<i32>} : memref<1x4x8x16xf32, #tpu.memory_space<vmem>>, vector<1x1x8x16xf32>,
    %11 = vector.extract_strided_slice %6 {offsets = [8, 0], sizes = [8, 16], strides = [1, 1]} : vector<32x16xf32> to vector<8x16xf32>
    %c0_10 = arith.constant 0 : index
    %c1 = arith.constant 1 : index
    %c0_11 = arith.constant 0 : index
    %c0_12 = arith.constant 0 : index
    %12 = vector.load %arg5[%c0_10, %c1, %c0_11, %c0_12] : memref<1x4x8x16xf32, #tpu.memory_space<vmem>>, vector<1x1x8x16xf32>
    %13 = vector.shape_cast %12 : vector<1x1x8x16xf32> to vector<8x16xf32>
    %14 = vector.shape_cast %11 : vector<8x16xf32> to vector<1x1x8x16xf32>
    tpu.vector_store %arg5[%c0_10, %c1, %c0_11, %c0_12], %14 {strides = array<i32>} : memref<1x4x8x16xf32, #tpu.memory_space<vmem>>, vector<1x1x8x16xf32>,
    %15 = vector.extract_strided_slice %6 {offsets = [16, 0], sizes = [8, 16], strides = [1, 1]} : vector<32x16xf32> to vector<8x16xf32>
    %c0_13 = arith.constant 0 : index
    %c2 = arith.constant 2 : index
    %c0_14 = arith.constant 0 : index
    %c0_15 = arith.constant 0 : index
    %16 = vector.load %arg5[%c0_13, %c2, %c0_14, %c0_15] : memref<1x4x8x16xf32, #tpu.memory_space<vmem>>, vector<1x1x8x16xf32>
    %17 = vector.shape_cast %16 : vector<1x1x8x16xf32> to vector<8x16xf32>
    %18 = vector.shape_cast %15 : vector<8x16xf32> to vector<1x1x8x16xf32>
    tpu.vector_store %arg5[%c0_13, %c2, %c0_14, %c0_15], %18 {strides = array<i32>} : memref<1x4x8x16xf32, #tpu.memory_space<vmem>>, vector<1x1x8x16xf32>,
    %19 = vector.extract_strided_slice %6 {offsets = [24, 0], sizes = [8, 16], strides = [1, 1]} : vector<32x16xf32> to vector<8x16xf32>
    %c0_16 = arith.constant 0 : index
    %c3 = arith.constant 3 : index
    %c0_17 = arith.constant 0 : index
    %c0_18 = arith.constant 0 : index
    %20 = vector.load %arg5[%c0_16, %c3, %c0_17, %c0_18] : memref<1x4x8x16xf32, #tpu.memory_space<vmem>>, vector<1x1x8x16xf32>
    %21 = vector.shape_cast %20 : vector<1x1x8x16xf32> to vector<8x16xf32>
    %22 = vector.shape_cast %19 : vector<8x16xf32> to vector<1x1x8x16xf32>
    tpu.vector_store %arg5[%c0_16, %c3, %c0_17, %c0_18], %22 {strides = array<i32>} : memref<1x4x8x16xf32, #tpu.memory_space<vmem>>, vector<1x1x8x16xf32>,
    return
  }
  func.func @transform_0(%arg0: i32, %arg1: i32) -> (i32, i32, i32) {
    %c0_i32 = arith.constant 0 : i32
    %c0_i32_0 = arith.constant 0 : i32
    return %arg0, %arg1, %c0_i32 : i32, i32, i32
  }
  func.func @transform_1(%arg0: i32, %arg1: i32) -> (i32, i32) {
    %c0_i32 = arith.constant 0 : i32
    %c0_i32_0 = arith.constant 0 : i32
    %c0_i32_1 = arith.constant 0 : i32
    return %c0_i32, %c0_i32_0 : i32, i32
  }
  func.func @transform_2(%arg0: i32, %arg1: i32) -> (i32, i32) {
    %c0_i32 = arith.constant 0 : i32
    %c0_i32_0 = arith.constant 0 : i32
    %c0_i32_1 = arith.constant 0 : i32
    return %c0_i32, %c0_i32_0 : i32, i32
  }
  func.func @transform_3(%arg0: i32, %arg1: i32) -> (i32, i32, i32, i32) {
    %c0_i32 = arith.constant 0 : i32
    %c0_i32_0 = arith.constant 0 : i32
    %c0_i32_1 = arith.constant 0 : i32
    return %arg0, %c0_i32, %c0_i32_0, %arg1 : i32, i32, i32, i32
  }
}

module attributes {stable_mosaic.version = 11 : i64} {
  func.func @_proj_heads_kernel(%arg0: i32, %arg1: i32, %arg2: memref<1x16x32xf32, #tpu.memory_space<vmem>>, %arg3: memref<32x32xf32, #tpu.memory_space<vmem>>, %arg4: memref<1x32xf32, #tpu.memory_space<vmem>>, %arg5: memref<1x4x16x8xf32, #tpu.memory_space<vmem>>) attributes {dimension_semantics = [#tpu.dimension_semantics<parallel>, #tpu.dimension_semantics<parallel>], iteration_bounds = array<i64: 2, 1>, scalar_prefetch = 0 : i64, scratch_operands = 0 : i64, tpu.core_type = #tpu.core_type<tc>, window_params = [{transform_indices = @transform_0, window_bounds = array<i64: 1, 16, 32>}, {pipeline_mode = #tpu.pipeline_mode<synchronous>, transform_indices = @transform_1, window_bounds = array<i64: 32, 32>}, {pipeline_mode = #tpu.pipeline_mode<synchronous>, transform_indices = @transform_2, window_bounds = array<i64: 1, 32>}, {transform_indices = @transform_3, window_bounds = array<i64: 1, 4, 16, 8>}]} {
    %c0 = arith.constant 0 : index
    %c0_0 = arith.constant 0 : index
    %c0_1 = arith.constant 0 : index
    %0 = vector.load %arg2[%c0, %c0_0, %c0_1] : memref<1x16x32xf32, #tpu.memory_space<vmem>>, vector<1x16x32xf32>
    %1 = vector.shape_cast %0 : vector<1x16x32xf32> to vector<16x32xf32>
    %c0_2 = arith.constant 0 : index
    %c0_3 = arith.constant 0 : index
    %2 = vector.load %arg3[%c0_2, %c0_3] : memref<32x32xf32, #tpu.memory_space<vmem>>, vector<32x32xf32>
    %cst = arith.constant dense<0.000000e+00> : vector<16x32xf32>
    %3 = tpu.matmul %1, %2, %cst {dimension_numbers = #tpu.dot_dimension_numbers<[1], [0], [0], [1], [0, 0, 1, 1], [], []>} : vector<16x32xf32>, vector<32x32xf32>, vector<16x32xf32> -> vector<16x32xf32>
    %c0_4 = arith.constant 0 : index
    %c0_5 = arith.constant 0 : index
    %4 = vector.load %arg4[%c0_4, %c0_5] : memref<1x32xf32, #tpu.memory_space<vmem>>, vector<1x32xf32>
    %5 = vector.broadcast %4 : vector<1x32xf32> to vector<16x32xf32>
    %6 = arith.addf %3, %5 : vector<16x32xf32>
    %7 = vector.extract_strided_slice %6 {offsets = [0, 0], sizes = [16, 8], strides = [1, 1]} : vector<16x32xf32> to vector<16x8xf32>
    %c0_6 = arith.constant 0 : index
    %c0_7 = arith.constant 0 : index
    %c0_8 = arith.constant 0 : index
    %c0_9 = arith.constant 0 : index
    %8 = vector.load %arg5[%c0_6, %c0_7, %c0_8, %c0_9] : memref<1x4x16x8xf32, #tpu.memory_space<vmem>>, vector<1x1x16x8xf32>
    %9 = vector.shape_cast %8 : vector<1x1x16x8xf32> to vector<16x8xf32>
    %10 = vector.shape_cast %7 : vector<16x8xf32> to vector<1x1x16x8xf32>
    tpu.vector_store %arg5[%c0_6, %c0_7, %c0_8, %c0_9], %10 {strides = array<i32>} : memref<1x4x16x8xf32, #tpu.memory_space<vmem>>, vector<1x1x16x8xf32>,
    %11 = vector.extract_strided_slice %6 {offsets = [0, 8], sizes = [16, 8], strides = [1, 1]} : vector<16x32xf32> to vector<16x8xf32>
    %c0_10 = arith.constant 0 : index
    %c1 = arith.constant 1 : index
    %c0_11 = arith.constant 0 : index
    %c0_12 = arith.constant 0 : index
    %12 = vector.load %arg5[%c0_10, %c1, %c0_11, %c0_12] : memref<1x4x16x8xf32, #tpu.memory_space<vmem>>, vector<1x1x16x8xf32>
    %13 = vector.shape_cast %12 : vector<1x1x16x8xf32> to vector<16x8xf32>
    %14 = vector.shape_cast %11 : vector<16x8xf32> to vector<1x1x16x8xf32>
    tpu.vector_store %arg5[%c0_10, %c1, %c0_11, %c0_12], %14 {strides = array<i32>} : memref<1x4x16x8xf32, #tpu.memory_space<vmem>>, vector<1x1x16x8xf32>,
    %15 = vector.extract_strided_slice %6 {offsets = [0, 16], sizes = [16, 8], strides = [1, 1]} : vector<16x32xf32> to vector<16x8xf32>
    %c0_13 = arith.constant 0 : index
    %c2 = arith.constant 2 : index
    %c0_14 = arith.constant 0 : index
    %c0_15 = arith.constant 0 : index
    %16 = vector.load %arg5[%c0_13, %c2, %c0_14, %c0_15] : memref<1x4x16x8xf32, #tpu.memory_space<vmem>>, vector<1x1x16x8xf32>
    %17 = vector.shape_cast %16 : vector<1x1x16x8xf32> to vector<16x8xf32>
    %18 = vector.shape_cast %15 : vector<16x8xf32> to vector<1x1x16x8xf32>
    tpu.vector_store %arg5[%c0_13, %c2, %c0_14, %c0_15], %18 {strides = array<i32>} : memref<1x4x16x8xf32, #tpu.memory_space<vmem>>, vector<1x1x16x8xf32>,
    %19 = vector.extract_strided_slice %6 {offsets = [0, 24], sizes = [16, 8], strides = [1, 1]} : vector<16x32xf32> to vector<16x8xf32>
    %c0_16 = arith.constant 0 : index
    %c3 = arith.constant 3 : index
    %c0_17 = arith.constant 0 : index
    %c0_18 = arith.constant 0 : index
    %20 = vector.load %arg5[%c0_16, %c3, %c0_17, %c0_18] : memref<1x4x16x8xf32, #tpu.memory_space<vmem>>, vector<1x1x16x8xf32>
    %21 = vector.shape_cast %20 : vector<1x1x16x8xf32> to vector<16x8xf32>
    %22 = vector.shape_cast %19 : vector<16x8xf32> to vector<1x1x16x8xf32>
    tpu.vector_store %arg5[%c0_16, %c3, %c0_17, %c0_18], %22 {strides = array<i32>} : memref<1x4x16x8xf32, #tpu.memory_space<vmem>>, vector<1x1x16x8xf32>,
    return
  }
  func.func @transform_0(%arg0: i32, %arg1: i32) -> (i32, i32, i32) {
    %c0_i32 = arith.constant 0 : i32
    %c0_i32_0 = arith.constant 0 : i32
    return %arg0, %arg1, %c0_i32 : i32, i32, i32
  }
  func.func @transform_1(%arg0: i32, %arg1: i32) -> (i32, i32) {
    %c0_i32 = arith.constant 0 : i32
    %c0_i32_0 = arith.constant 0 : i32
    %c0_i32_1 = arith.constant 0 : i32
    return %c0_i32, %c0_i32_0 : i32, i32
  }
  func.func @transform_2(%arg0: i32, %arg1: i32) -> (i32, i32) {
    %c0_i32 = arith.constant 0 : i32
    %c0_i32_0 = arith.constant 0 : i32
    %c0_i32_1 = arith.constant 0 : i32
    return %c0_i32, %c0_i32_0 : i32, i32
  }
  func.func @transform_3(%arg0: i32, %arg1: i32) -> (i32, i32, i32, i32) {
    %c0_i32 = arith.constant 0 : i32
    %c0_i32_0 = arith.constant 0 : i32
    %c0_i32_1 = arith.constant 0 : i32
    return %arg0, %c0_i32, %arg1, %c0_i32_0 : i32, i32, i32, i32
  }
}

module attributes {stable_mosaic.version = 11 : i64} {
  func.func @_flash_kernel(%arg0: i32, %arg1: i32, %arg2: i32, %arg3: memref<1x4x16x8xf32, #tpu.memory_space<vmem>>, %arg4: memref<1x4x8x16xf32, #tpu.memory_space<vmem>>, %arg5: memref<1x4x16x8xf32, #tpu.memory_space<vmem>>, %arg6: memref<1x16x32xf32, #tpu.memory_space<vmem>>, %arg7: memref<4x16x1xf32, #tpu.memory_space<vmem>>, %arg8: memref<4x16x1xf32, #tpu.memory_space<vmem>>, %arg9: memref<4x16x8xf32, #tpu.memory_space<vmem>>) attributes {dimension_semantics = [#tpu.dimension_semantics<parallel>, #tpu.dimension_semantics<parallel>, #tpu.dimension_semantics<arbitrary>], iteration_bounds = array<i64: 2, 1, 1>, scalar_prefetch = 0 : i64, scratch_operands = 3 : i64, tpu.core_type = #tpu.core_type<tc>, window_params = [{transform_indices = @transform_0, window_bounds = array<i64: 1, 4, 16, 8>}, {transform_indices = @transform_1, window_bounds = array<i64: 1, 4, 8, 16>}, {transform_indices = @transform_2, window_bounds = array<i64: 1, 4, 16, 8>}, {transform_indices = @transform_3, window_bounds = array<i64: 1, 16, 32>}]} {
    %c0_i32 = arith.constant 0 : i32
    %0 = arith.cmpi eq, %arg2, %c0_i32 : i32
    %1 = arith.extui %0 : i1 to i32
    %c0_i32_0 = arith.constant 0 : i32
    %2 = arith.cmpi ne, %1, %c0_i32_0 : i32
    scf.if %2 {
      %cst_35 = arith.constant 0xFF800000 : f32
      %35 = vector.broadcast %cst_35 : f32 to vector<4x16x1xf32>
      %c0_36 = arith.constant 0 : index
      %c0_37 = arith.constant 0 : index
      %c0_38 = arith.constant 0 : index
      %36 = vector.load %arg7[%c0_36, %c0_37, %c0_38] : memref<4x16x1xf32, #tpu.memory_space<vmem>>, vector<4x16x1xf32>
      tpu.vector_store %arg7[%c0_36, %c0_37, %c0_38], %35 {strides = array<i32>} : memref<4x16x1xf32, #tpu.memory_space<vmem>>, vector<4x16x1xf32>,
      %cst_39 = arith.constant 0.000000e+00 : f32
      %37 = vector.broadcast %cst_39 : f32 to vector<4x16x1xf32>
      %c0_40 = arith.constant 0 : index
      %c0_41 = arith.constant 0 : index
      %c0_42 = arith.constant 0 : index
      %38 = vector.load %arg8[%c0_40, %c0_41, %c0_42] : memref<4x16x1xf32, #tpu.memory_space<vmem>>, vector<4x16x1xf32>
      tpu.vector_store %arg8[%c0_40, %c0_41, %c0_42], %37 {strides = array<i32>} : memref<4x16x1xf32, #tpu.memory_space<vmem>>, vector<4x16x1xf32>,
      %cst_43 = arith.constant 0.000000e+00 : f32
      %39 = vector.broadcast %cst_43 : f32 to vector<4x16x8xf32>
      %c0_44 = arith.constant 0 : index
      %c0_45 = arith.constant 0 : index
      %c0_46 = arith.constant 0 : index
      %40 = vector.load %arg9[%c0_44, %c0_45, %c0_46] : memref<4x16x8xf32, #tpu.memory_space<vmem>>, vector<4x16x8xf32>
      tpu.vector_store %arg9[%c0_44, %c0_45, %c0_46], %39 {strides = array<i32>} : memref<4x16x8xf32, #tpu.memory_space<vmem>>, vector<4x16x8xf32>,
    } else {
    }
    %c0 = arith.constant 0 : index
    %c0_1 = arith.constant 0 : index
    %c0_2 = arith.constant 0 : index
    %c0_3 = arith.constant 0 : index
    %3 = vector.load %arg3[%c0, %c0_1, %c0_2, %c0_3] : memref<1x4x16x8xf32, #tpu.memory_space<vmem>>, vector<1x4x16x8xf32>
    %4 = vector.shape_cast %3 : vector<1x4x16x8xf32> to vector<4x16x8xf32>
    %c0_4 = arith.constant 0 : index
    %c0_5 = arith.constant 0 : index
    %c0_6 = arith.constant 0 : index
    %c0_7 = arith.constant 0 : index
    %5 = vector.load %arg4[%c0_4, %c0_5, %c0_6, %c0_7] : memref<1x4x8x16xf32, #tpu.memory_space<vmem>>, vector<1x4x8x16xf32>
    %6 = vector.shape_cast %5 : vector<1x4x8x16xf32> to vector<4x8x16xf32>
    %c0_8 = arith.constant 0 : index
    %c0_9 = arith.constant 0 : index
    %c0_10 = arith.constant 0 : index
    %c0_11 = arith.constant 0 : index
    %7 = vector.load %arg5[%c0_8, %c0_9, %c0_10, %c0_11] : memref<1x4x16x8xf32, #tpu.memory_space<vmem>>, vector<1x4x16x8xf32>
    %8 = vector.shape_cast %7 : vector<1x4x16x8xf32> to vector<4x16x8xf32>
    %cst = arith.constant dense<0.000000e+00> : vector<4x16x16xf32>
    %9 = tpu.matmul %4, %6, %cst {dimension_numbers = #tpu.dot_dimension_numbers<[2], [1], [1], [2], [0, 0, 0, 1, 1, 2], [0], [0]>} : vector<4x16x8xf32>, vector<4x8x16xf32>, vector<4x16x16xf32> -> vector<4x16x16xf32>
    %c0_12 = arith.constant 0 : index
    %c0_13 = arith.constant 0 : index
    %c0_14 = arith.constant 0 : index
    %10 = vector.load %arg7[%c0_12, %c0_13, %c0_14] : memref<4x16x1xf32, #tpu.memory_space<vmem>>, vector<4x16x1xf32>
    %cst_15 = arith.constant dense<0xFF800000> : vector<4x16xf32>
    %11 = vector.multi_reduction <maximumf>, %9, %cst_15 [2] : vector<4x16x16xf32> to vector<4x16xf32>
    %12 = vector.shape_cast %11 : vector<4x16xf32> to vector<4x16x1xf32>
    %13 = arith.maximumf %10, %12 : vector<4x16x1xf32>
    %14 = arith.subf %10, %13 : vector<4x16x1xf32>
    %15 = math.exp %14 : vector<4x16x1xf32>
    %16 = vector.broadcast %13 : vector<4x16x1xf32> to vector<4x16x16xf32>
    %17 = arith.subf %9, %16 : vector<4x16x16xf32>
    %18 = math.exp %17 : vector<4x16x16xf32>
    %c0_16 = arith.constant 0 : index
    %c0_17 = arith.constant 0 : index
    %c0_18 = arith.constant 0 : index
    %19 = vector.load %arg8[%c0_16, %c0_17, %c0_18] : memref<4x16x1xf32, #tpu.memory_space<vmem>>, vector<4x16x1xf32>
    %20 = arith.mulf %15, %19 : vector<4x16x1xf32>
    %cst_19 = arith.constant dense<0.000000e+00> : vector<4x16xf32>
    %21 = vector.multi_reduction <add>, %18, %cst_19 [2] : vector<4x16x16xf32> to vector<4x16xf32>
    %22 = vector.shape_cast %21 : vector<4x16xf32> to vector<4x16x1xf32>
    %23 = arith.addf %20, %22 : vector<4x16x1xf32>
    %c0_20 = arith.constant 0 : index
    %c0_21 = arith.constant 0 : index
    %c0_22 = arith.constant 0 : index
    %24 = vector.load %arg8[%c0_20, %c0_21, %c0_22] : memref<4x16x1xf32, #tpu.memory_space<vmem>>, vector<4x16x1xf32>
    tpu.vector_store %arg8[%c0_20, %c0_21, %c0_22], %23 {strides = array<i32>} : memref<4x16x1xf32, #tpu.memory_space<vmem>>, vector<4x16x1xf32>,
    %cst_23 = arith.constant dense<0.000000e+00> : vector<4x16x8xf32>
    %25 = tpu.matmul %18, %8, %cst_23 {dimension_numbers = #tpu.dot_dimension_numbers<[2], [1], [1], [2], [0, 0, 0, 1, 1, 2], [0], [0]>} : vector<4x16x16xf32>, vector<4x16x8xf32>, vector<4x16x8xf32> -> vector<4x16x8xf32>
    %c0_24 = arith.constant 0 : index
    %c0_25 = arith.constant 0 : index
    %c0_26 = arith.constant 0 : index
    %26 = vector.load %arg9[%c0_24, %c0_25, %c0_26] : memref<4x16x8xf32, #tpu.memory_space<vmem>>, vector<4x16x8xf32>
    %27 = vector.broadcast %15 : vector<4x16x1xf32> to vector<4x16x8xf32>
    %28 = arith.mulf %27, %26 : vector<4x16x8xf32>
    %29 = arith.addf %28, %25 : vector<4x16x8xf32>
    %c0_27 = arith.constant 0 : index
    %c0_28 = arith.constant 0 : index
    %c0_29 = arith.constant 0 : index
    %30 = vector.load %arg9[%c0_27, %c0_28, %c0_29] : memref<4x16x8xf32, #tpu.memory_space<vmem>>, vector<4x16x8xf32>
    tpu.vector_store %arg9[%c0_27, %c0_28, %c0_29], %29 {strides = array<i32>} : memref<4x16x8xf32, #tpu.memory_space<vmem>>, vector<4x16x8xf32>,
    %c0_30 = arith.constant 0 : index
    %c0_31 = arith.constant 0 : index
    %c0_32 = arith.constant 0 : index
    %31 = vector.load %arg7[%c0_30, %c0_31, %c0_32] : memref<4x16x1xf32, #tpu.memory_space<vmem>>, vector<4x16x1xf32>
    tpu.vector_store %arg7[%c0_30, %c0_31, %c0_32], %13 {strides = array<i32>} : memref<4x16x1xf32, #tpu.memory_space<vmem>>, vector<4x16x1xf32>,
    %c0_i32_33 = arith.constant 0 : i32
    %32 = arith.cmpi eq, %arg2, %c0_i32_33 : i32
    %33 = arith.extui %32 : i1 to i32
    %c0_i32_34 = arith.constant 0 : i32
    %34 = arith.cmpi ne, %33, %c0_i32_34 : i32
    scf.if %34 {
      %c0_35 = arith.constant 0 : index
      %c0_36 = arith.constant 0 : index
      %c0_37 = arith.constant 0 : index
      %35 = vector.load %arg8[%c0_35, %c0_36, %c0_37] : memref<4x16x1xf32, #tpu.memory_space<vmem>>, vector<4x16x1xf32>
      %36 = tpu.reciprocal %35 : vector<4x16x1xf32> -> vector<4x16x1xf32>
      %c0_38 = arith.constant 0 : index
      %c0_39 = arith.constant 0 : index
      %c0_40 = arith.constant 0 : index
      %37 = vector.load %arg9[%c0_38, %c0_39, %c0_40] : memref<4x16x8xf32, #tpu.memory_space<vmem>>, vector<4x16x8xf32>
      %38 = vector.broadcast %36 : vector<4x16x1xf32> to vector<4x16x8xf32>
      %39 = arith.mulf %37, %38 : vector<4x16x8xf32>
      %40 = vector.extract_strided_slice %39 {offsets = [0, 0, 0], sizes = [1, 16, 8], strides = [1, 1, 1]} : vector<4x16x8xf32> to vector<1x16x8xf32>
      %41 = vector.shape_cast %40 : vector<1x16x8xf32> to vector<16x8xf32>
      %c0_41 = arith.constant 0 : index
      %c0_42 = arith.constant 0 : index
      %c0_43 = arith.constant 0 : index
      %42 = vector.load %arg6[%c0_41, %c0_42, %c0_43] : memref<1x16x32xf32, #tpu.memory_space<vmem>>, vector<1x16x8xf32>
      %43 = vector.shape_cast %42 : vector<1x16x8xf32> to vector<16x8xf32>
      %44 = vector.shape_cast %41 : vector<16x8xf32> to vector<1x16x8xf32>
      tpu.vector_store %arg6[%c0_41, %c0_42, %c0_43], %44 {strides = array<i32>} : memref<1x16x32xf32, #tpu.memory_space<vmem>>, vector<1x16x8xf32>,
      %45 = vector.extract_strided_slice %39 {offsets = [1, 0, 0], sizes = [1, 16, 8], strides = [1, 1, 1]} : vector<4x16x8xf32> to vector<1x16x8xf32>
      %46 = vector.shape_cast %45 : vector<1x16x8xf32> to vector<16x8xf32>
      %c0_44 = arith.constant 0 : index
      %c0_45 = arith.constant 0 : index
      %c8 = arith.constant 8 : index
      %47 = vector.load %arg6[%c0_44, %c0_45, %c8] : memref<1x16x32xf32, #tpu.memory_space<vmem>>, vector<1x16x8xf32>
      %48 = vector.shape_cast %47 : vector<1x16x8xf32> to vector<16x8xf32>
      %49 = vector.shape_cast %46 : vector<16x8xf32> to vector<1x16x8xf32>
      tpu.vector_store %arg6[%c0_44, %c0_45, %c8], %49 {strides = array<i32>} : memref<1x16x32xf32, #tpu.memory_space<vmem>>, vector<1x16x8xf32>,
      %50 = vector.extract_strided_slice %39 {offsets = [2, 0, 0], sizes = [1, 16, 8], strides = [1, 1, 1]} : vector<4x16x8xf32> to vector<1x16x8xf32>
      %51 = vector.shape_cast %50 : vector<1x16x8xf32> to vector<16x8xf32>
      %c0_46 = arith.constant 0 : index
      %c0_47 = arith.constant 0 : index
      %c16 = arith.constant 16 : index
      %52 = vector.load %arg6[%c0_46, %c0_47, %c16] : memref<1x16x32xf32, #tpu.memory_space<vmem>>, vector<1x16x8xf32>
      %53 = vector.shape_cast %52 : vector<1x16x8xf32> to vector<16x8xf32>
      %54 = vector.shape_cast %51 : vector<16x8xf32> to vector<1x16x8xf32>
      tpu.vector_store %arg6[%c0_46, %c0_47, %c16], %54 {strides = array<i32>} : memref<1x16x32xf32, #tpu.memory_space<vmem>>, vector<1x16x8xf32>,
      %55 = vector.extract_strided_slice %39 {offsets = [3, 0, 0], sizes = [1, 16, 8], strides = [1, 1, 1]} : vector<4x16x8xf32> to vector<1x16x8xf32>
      %56 = vector.shape_cast %55 : vector<1x16x8xf32> to vector<16x8xf32>
      %c0_48 = arith.constant 0 : index
      %c0_49 = arith.constant 0 : index
      %c24 = arith.constant 24 : index
      %57 = vector.load %arg6[%c0_48, %c0_49, %c24] : memref<1x16x32xf32, #tpu.memory_space<vmem>>, vector<1x16x8xf32>
      %58 = vector.shape_cast %57 : vector<1x16x8xf32> to vector<16x8xf32>
      %59 = vector.shape_cast %56 : vector<16x8xf32> to vector<1x16x8xf32>
      tpu.vector_store %arg6[%c0_48, %c0_49, %c24], %59 {strides = array<i32>} : memref<1x16x32xf32, #tpu.memory_space<vmem>>, vector<1x16x8xf32>,
    } else {
    }
    return
  }
  func.func @transform_0(%arg0: i32, %arg1: i32, %arg2: i32) -> (i32, i32, i32, i32) {
    %c0_i32 = arith.constant 0 : i32
    %c0_i32_0 = arith.constant 0 : i32
    %c0_i32_1 = arith.constant 0 : i32
    return %arg0, %c0_i32, %arg1, %c0_i32_0 : i32, i32, i32, i32
  }
  func.func @transform_1(%arg0: i32, %arg1: i32, %arg2: i32) -> (i32, i32, i32, i32) {
    %c0_i32 = arith.constant 0 : i32
    %c0_i32_0 = arith.constant 0 : i32
    %c0_i32_1 = arith.constant 0 : i32
    return %arg0, %c0_i32, %c0_i32_0, %arg2 : i32, i32, i32, i32
  }
  func.func @transform_2(%arg0: i32, %arg1: i32, %arg2: i32) -> (i32, i32, i32, i32) {
    %c0_i32 = arith.constant 0 : i32
    %c0_i32_0 = arith.constant 0 : i32
    %c0_i32_1 = arith.constant 0 : i32
    return %arg0, %c0_i32, %arg2, %c0_i32_0 : i32, i32, i32, i32
  }
  func.func @transform_3(%arg0: i32, %arg1: i32, %arg2: i32) -> (i32, i32, i32) {
    %c0_i32 = arith.constant 0 : i32
    %c0_i32_0 = arith.constant 0 : i32
    return %arg0, %arg1, %c0_i32 : i32, i32, i32
  }
}

module attributes {stable_mosaic.version = 11 : i64} {
  func.func @_linear_kernel(%arg0: i32, %arg1: i32, %arg2: memref<32x32xf32, #tpu.memory_space<vmem>>, %arg3: memref<32x32xf32, #tpu.memory_space<vmem>>, %arg4: memref<1x32xf32, #tpu.memory_space<vmem>>, %arg5: memref<32x32xf32, #tpu.memory_space<vmem>>) attributes {dimension_semantics = [#tpu.dimension_semantics<parallel>, #tpu.dimension_semantics<parallel>], iteration_bounds = array<i64: 1, 1>, scalar_prefetch = 0 : i64, scratch_operands = 0 : i64, tpu.core_type = #tpu.core_type<tc>, window_params = [{transform_indices = @transform_0, window_bounds = array<i64: 32, 32>}, {transform_indices = @transform_1, window_bounds = array<i64: 32, 32>}, {transform_indices = @transform_2, window_bounds = array<i64: 1, 32>}, {transform_indices = @transform_3, window_bounds = array<i64: 32, 32>}]} {
    %c0 = arith.constant 0 : index
    %c0_0 = arith.constant 0 : index
    %0 = vector.load %arg2[%c0, %c0_0] : memref<32x32xf32, #tpu.memory_space<vmem>>, vector<32x32xf32>
    %c0_1 = arith.constant 0 : index
    %c0_2 = arith.constant 0 : index
    %1 = vector.load %arg3[%c0_1, %c0_2] : memref<32x32xf32, #tpu.memory_space<vmem>>, vector<32x32xf32>
    %cst = arith.constant dense<0.000000e+00> : vector<32x32xf32>
    %2 = tpu.matmul %0, %1, %cst {dimension_numbers = #tpu.dot_dimension_numbers<[1], [0], [0], [1], [0, 0, 1, 1], [], []>} : vector<32x32xf32>, vector<32x32xf32>, vector<32x32xf32> -> vector<32x32xf32>
    %c0_3 = arith.constant 0 : index
    %c0_4 = arith.constant 0 : index
    %3 = vector.load %arg4[%c0_3, %c0_4] : memref<1x32xf32, #tpu.memory_space<vmem>>, vector<1x32xf32>
    %4 = vector.broadcast %3 : vector<1x32xf32> to vector<32x32xf32>
    %5 = arith.addf %2, %4 : vector<32x32xf32>
    %c0_5 = arith.constant 0 : index
    %c0_6 = arith.constant 0 : index
    %6 = vector.load %arg5[%c0_5, %c0_6] : memref<32x32xf32, #tpu.memory_space<vmem>>, vector<32x32xf32>
    tpu.vector_store %arg5[%c0_5, %c0_6], %5 {strides = array<i32>} : memref<32x32xf32, #tpu.memory_space<vmem>>, vector<32x32xf32>,
    return
  }
  func.func @transform_0(%arg0: i32, %arg1: i32) -> (i32, i32) {
    %c0_i32 = arith.constant 0 : i32
    %c0_i32_0 = arith.constant 0 : i32
    return %arg1, %c0_i32 : i32, i32
  }
  func.func @transform_1(%arg0: i32, %arg1: i32) -> (i32, i32) {
    %c0_i32 = arith.constant 0 : i32
    %c0_i32_0 = arith.constant 0 : i32
    return %c0_i32, %arg0 : i32, i32
  }
  func.func @transform_2(%arg0: i32, %arg1: i32) -> (i32, i32) {
    %c0_i32 = arith.constant 0 : i32
    %c0_i32_0 = arith.constant 0 : i32
    return %c0_i32, %arg0 : i32, i32
  }
  func.func @transform_3(%arg0: i32, %arg1: i32) -> (i32, i32) {
    %c0_i32 = arith.constant 0 : i32
    return %arg1, %arg0 : i32, i32
  }
}

</mosaic_0001>

<llo_original>
// kernel: attention_forward.6
$region0: #{attention_forward.6}
  #allocation0 [shape = 'u32[]', space=smem, size = 0x4, offset = 0x4, fixed_abs, tag = 'smem constant byte address 0x4 - core index']
  #allocation1 [shape = 'u32[144,128]{1,0:T(1,128)}', space=vmem, size = 0x12000, scoped, tag = 'internal scratch']
  %s0 = inlined_call_operand.hbm [shape: f32[2,16,32], index: 0, kind: input, shape index: {}]
  %s1 = inlined_call_operand.hbm [shape: f32[32,32], index: 1, kind: input, shape index: {}]
  %s2 = inlined_call_operand.hbm [shape: f32[32,1], index: 2, kind: input, shape index: {}]
  %s3 = inlined_call_operand.hbm [shape: f32[2,4,8,16], index: 3, kind: output, shape index: {}]
  %s4 = sld [smem:[#allocation0]]
  $region57: #{attention_forward.6} parent=0
    _
  %s6 = ssub.s32 1, %s4
  %s7 = scalar_select 0, %s6, %s4
  $region1: #{attention_forward.6} parent=0
    #allocation2 [shape = 'u8[16384]{0}', space=vmem, size = 0x4000, scoped, tag = 'input window, operand 0']
    #allocation3 [shape = 's32[2]{0}', space=sflag, size = 0x8, scoped, tag = 'scoped memory for attention_forward.6']
    #allocation4 [shape = 's32[2]{0}', space=sflag, size = 0x8, scoped, tag = 'scoped memory for attention_forward.6']
    #allocation5 [shape = 'u8[16384]{0}', space=vmem, size = 0x4000, scoped, tag = 'input window, operand 1, single buffered']
    #allocation6 [shape = 's32[1]{0}', space=sflag, size = 0x4, scoped, tag = 'scoped memory for attention_forward.6']
    #allocation7 [shape = 'u8[16384]{0}', space=vmem, size = 0x4000, scoped, tag = 'input window, operand 2, single buffered']
    #allocation8 [shape = 'u8[32768]{0}', space=vmem, size = 0x8000, scoped, tag = 'output window, operand 0']
    %8 = vsyncpa [#allocation3], 0
    %s9 = scalar_lea.sflag [#allocation3], 1
    %10 = vsyncpa %s9, 0
    %11 = vsyncpa [#allocation6], 0
    %12 = vsyncpa [#allocation4], 0
    %s13 = scalar_lea.sflag [#allocation4], 1
    %14 = vsyncpa %s13, 0
    loop: start=0, step=1, limit=4
    $region2: #{attention_forward.6} parent=1 // loop_pre_header
      _
    $region3: #{attention_forward.6} parent=1 // loop_header
      %s16 = sphi 0, %s20
      %p17 = scmp.ge.s32.totalorder %s16, 4
      %s23 = sphi 0, %s35
      %s24 = sphi 0, %s31
      %s25 = sphi 0, %s23
      %s26 = sphi 0, %s24
      %s27 = sphi 0, %s25
      %s28 = sphi 0, %s26
      %s40 = sphi 0, %s42
      %s43 = sphi 0, %s40
      %s44 = sphi 0, %s43
      %s60 = sphi 0, %s44
      %s64 = sphi 0, %s64
      %s66 = sphi 0, %s64
      %s67 = sphi 0, %s66
      %s81 = sphi 0, %s67
      %s85 = sphi 0, %s85
      %s87 = sphi 0, %s85
      %s88 = sphi 0, %s87
      %s102 = sphi 0, %s88
      %s110 = sphi 0, %s112
      %s113 = sphi 0, %s110
      %s114 = sphi 0, %s113
      %s130 = sphi 0, %s114
    $region4: #{attention_forward.6} parent=1 // loop_header_branch
      %19 = sbr.rel (%p17) target = $region8
    $region5: #{attention_forward.6} parent=1 // loop_body
      %s21 = ssub.s32 %s16, 1
      %s22 = ssub.s32 %s16, 2
      %s29 = sadd.s32 1, %s24
      %p30 = scmp.ge.s32.totalorder %s29, 1
      %s31 = scalar_select %p30, 0, %s29
      %s32 = sadd.s32 1, %s23
      %s33 = scalar_select %p30, %s32, %s23
      %p34 = scmp.ge.s32.totalorder %s33, 2
      %s35 = scalar_select %p34, 0, %s33
      %s36 = ssub.s32 %s23, %s35
      %s37 = ssub.s32 %s24, %s31
      %s38 = sor.u32 %s36, %s37
      %p39 = scmp.eq.s32.totalorder %s38, 0
      %s41 = sadd.s32 %s40, 1
      %s42 = scalar_select %p39, %s40, %s41
      %p45 = pneg %p39
      %p46 = scmp.eq.s32.totalorder %s16, 1
      %p47 = por %p45, %p46
      %p48 = scmp.ne.s32.totalorder %s40, %s43
      %p49 = scmp.eq.s32.totalorder %s16, 0
      %p50 = por %p48, %p49
      %p51 = scmp.ne.s32.totalorder %s40, %s43
      %p52 = scmp.eq.s32.totalorder %s21, 1
      %p53 = por %p51, %p52
      %p54 = scmp.ne.s32.totalorder %s43, %s44
      %p55 = scmp.eq.s32.totalorder %s21, 0
      %p56 = por %p54, %p55
      %p57 = scmp.ne.s32.totalorder %s43, %s44
      %p58 = scmp.eq.s32.totalorder %s22, 1
      %p59 = por %p57, %p58
      %p61 = scmp.ne.s32.totalorder %s44, %s60
      %p62 = scmp.eq.s32.totalorder %s22, 0
      %p63 = por %p61, %p62
      %s65 = sadd.s32 %s64, 1
      %p68 = scmp.eq.s32.totalorder %s16, 1
      %p69 = scmp.ne.s32.totalorder %s64, %s66
      %p70 = scmp.eq.s32.totalorder %s16, 0
      %p71 = por %p69, %p70
      %p72 = scmp.ne.s32.totalorder %s64, %s66
      %p73 = scmp.eq.s32.totalorder %s21, 1
      %p74 = por %p72, %p73
      %p75 = scmp.ne.s32.totalorder %s66, %s67
      %p76 = scmp.eq.s32.totalorder %s21, 0
      %p77 = por %p75, %p76
      %p78 = scmp.ne.s32.totalorder %s66, %s67
      %p79 = scmp.eq.s32.totalorder %s22, 1
      %p80 = por %p78, %p79
      %p82 = scmp.ne.s32.totalorder %s67, %s81
      %p83 = scmp.eq.s32.totalorder %s22, 0
      %p84 = por %p82, %p83
      %s86 = sadd.s32 %s85, 1
      %p89 = scmp.eq.s32.totalorder %s16, 1
      %p90 = scmp.ne.s32.totalorder %s85, %s87
      %p91 = scmp.eq.s32.totalorder %s16, 0
      %p92 = por %p90, %p91
      %p93 = scmp.ne.s32.totalorder %s85, %s87
      %p94 = scmp.eq.s32.totalorder %s21, 1
      %p95 = por %p93, %p94
      %p96 = scmp.ne.s32.totalorder %s87, %s88
      %p97 = scmp.eq.s32.totalorder %s21, 0
      %p98 = por %p96, %p97
      %p99 = scmp.ne.s32.totalorder %s87, %s88
      %p100 = scmp.eq.s32.totalorder %s22, 1
      %p101 = por %p99, %p100
      %p103 = scmp.ne.s32.totalorder %s88, %s102
      %p104 = scmp.eq.s32.totalorder %s22, 0
      %p105 = por %p103, %p104
      %s106 = ssub.s32 %s23, %s35
      %s107 = ssub.s32 %s24, %s31
      %s108 = sor.u32 %s106, %s107
      %p109 = scmp.eq.s32.totalorder %s108, 0
      %s111 = sadd.s32 %s110, 1
      %s112 = scalar_select %p109, %s110, %s111
      %p115 = pneg %p109
      %p116 = scmp.eq.s32.totalorder %s16, 1
      %p117 = por %p115, %p116
      %p118 = scmp.ne.s32.totalorder %s110, %s113
      %p119 = scmp.eq.s32.totalorder %s16, 0
      %p120 = por %p118, %p119
      %p121 = scmp.ne.s32.totalorder %s110, %s113
      %p122 = scmp.eq.s32.totalorder %s21, 1
      %p123 = por %p121, %p122
      %p124 = scmp.ne.s32.totalorder %s113, %s114
      %p125 = scmp.eq.s32.totalorder %s21, 0
      %p126 = por %p124, %p125
      %p127 = scmp.ne.s32.totalorder %s113, %s114
      %p128 = scmp.eq.s32.totalorder %s22, 1
      %p129 = por %p127, %p128
      %p131 = scmp.ne.s32.totalorder %s114, %s130
      %p132 = scmp.eq.s32.totalorder %s22, 0
      %p133 = por %p131, %p132
      %p134 = scmp.le.s32.totalorder 1, %s16
      %p135 = scmp.lt.s32.totalorder %s16, 3
      %p136 = pnand %p134, %p135
      %p137 = pneg %p136
      // Predicated region
      $region9: #{attention_forward.6} parent=5 // pred_check
        _
      $region10: #{attention_forward.6} parent=5 // pred_check_branch
        %139 = sbr.rel (%p136) target = $region12
      $region11: #{attention_forward.6} parent=5 // pred_region
        %s140 = ssub.s32 %s16, 1
        // Predicated region
        $region13: #{attention_forward.6} parent=11 // pred_check
          %p141 = pneg %p77
        $region14: #{attention_forward.6} parent=11 // pred_check_branch
          %143 = sbr.rel (%p141) target = $region16
        $region15: #{attention_forward.6} parent=11 // pred_region
          %s145 = ssub.s32 512, 512
          %146 = vsyncadd [#allocation6], %s145
          %s147 = sshll.u32 [#allocation5], 4
          %s148 = int_to_ptr.vmem [resolvable:$true] %s147
          %153 = dma.hbm_to_vmem [thread:$0]  %s1, 512, %s148, [#allocation6], 128, 128, 8
        $region16: #{attention_forward.6} parent=11 // pred_fallthru
          _
        // Predicated region
        $region17: #{attention_forward.6} parent=11 // pred_check
          %p154 = pneg %p98
        $region18: #{attention_forward.6} parent=11 // pred_check_branch
          %156 = sbr.rel (%p154) target = $region20
        $region19: #{attention_forward.6} parent=11 // pred_region
          %s158 = ssub.s32 512, 512
          %159 = vsyncadd [#allocation6], %s158
          %s160 = sshll.u32 [#allocation7], 4
          %s161 = int_to_ptr.vmem [resolvable:$true] %s160
          %166 = dma.hbm_to_vmem [thread:$0]  %s2, 512, %s161, [#allocation6], 128, 128, 8
        $region20: #{attention_forward.6} parent=11 // pred_fallthru
          _
      $region12: #{attention_forward.6} parent=5 // pred_fallthru
        _
      %p167 = scmp.lt.s32.totalorder %s16, 2
      // Predicated region
      $region21: #{attention_forward.6} parent=5 // pred_check
        %p168 = pneg %p167
      $region22: #{attention_forward.6} parent=5 // pred_check_branch
        %170 = sbr.rel (%p168) target = $region24
      $region23: #{attention_forward.6} parent=5 // pred_region
        // Predicated region
        $region25: #{attention_forward.6} parent=23 // pred_check
          %p171 = pneg %p50
        $region26: #{attention_forward.6} parent=23 // pred_check_branch
          %173 = sbr.rel (%p171) target = $region28
        $region27: #{attention_forward.6} parent=23 // pred_region
          %s174 = sand.u32 %s40, 1
          %s175 = scalar_lea.sflag [#allocation3], %s174
          %s176 = sand.u32 %s40, 1
          %s177 = smul.addr %s176, 16
          %s178 = scalar_lea.vmem [#allocation2], %s177
          %s179 = smul.u32 2, %s24
          %s181 = ssub.s32 256, 256
          %182 = vsyncadd %s175, %s181
          %s183 = smul.addr %s23, 2
          %s184 = sadd.s32 %s179, %s183
          %s185 = smul.addr %s184, 128
          %s186 = scalar_lea.hbm %s0, %s185
          %s187 = sshll.u32 %s178, 4
          %s188 = int_to_ptr.vmem [resolvable:$true] %s187
          %193 = dma.hbm_to_vmem [thread:$0]  %s186, 256, %s188, %s175, 128, 128, 8
        $region28: #{attention_forward.6} parent=23 // pred_fallthru
          _
      $region24: #{attention_forward.6} parent=5 // pred_fallthru
        _
      %p194 = scmp.le.s32.totalorder 1, %s16
      %p195 = scmp.lt.s32.totalorder %s16, 3
      %p196 = pnand %p194, %p195
      %p197 = pneg %p196
      // Predicated region
      $region29: #{attention_forward.6} parent=5 // pred_check
        _
      $region30: #{attention_forward.6} parent=5 // pred_check_branch
        %199 = sbr.rel (%p196) target = $region32
      $region31: #{attention_forward.6} parent=5 // pred_region
        %s200 = ssub.s32 %s16, 1
        %s201 = sand.u32 %s43, 1
        %s202 = scalar_lea.sflag [#allocation3], %s201
        %s203 = sand.u32 %s43, 1
        %s204 = smul.addr %s203, 16
        %s205 = scalar_lea.vmem [#allocation2], %s204
        // Predicated region
        $region33: #{attention_forward.6} parent=31 // pred_check
          %p206 = pneg %p56
        $region34: #{attention_forward.6} parent=31 // pred_check_branch
          %208 = sbr.rel (%p206) target = $region36
        $region35: #{attention_forward.6} parent=31 // pred_region
          %209 = dma.done %s202, 256
        $region36: #{attention_forward.6} parent=31 // pred_fallthru
          _
        // Predicated region
        $region37: #{attention_forward.6} parent=31 // pred_check
          %p210 = pneg %p77
        $region38: #{attention_forward.6} parent=31 // pred_check_branch
          %212 = sbr.rel (%p210) target = $region40
        $region39: #{attention_forward.6} parent=31 // pred_region
          %213 = dma.done [#allocation6], 512
        $region40: #{attention_forward.6} parent=31 // pred_fallthru
          _
        // Predicated region
        $region41: #{attention_forward.6} parent=31 // pred_check
          %p214 = pneg %p98
        $region42: #{attention_forward.6} parent=31 // pred_check_branch
          %216 = sbr.rel (%p214) target = $region44
        $region43: #{attention_forward.6} parent=31 // pred_region
          %217 = dma.done [#allocation6], 512
        $region44: #{attention_forward.6} parent=31 // pred_fallthru
          _
        %s218 = sand.u32 %s43, 1
        %s219 = scalar_lea.sflag [#allocation3], %s218
        %s220 = sand.u32 %s43, 1
        %s221 = smul.addr %s220, 16
        %s222 = scalar_lea.vmem [#allocation2], %s221
        %p223 = pneg %p56
        %p224 = pneg %p53
        %p225 = pneg %p77
        %p226 = pneg %p74
        %p227 = pneg %p98
        %p228 = pneg %p95
        %p229 = pneg %p126
        %p230 = pneg %p123
        %s231 = sand.u32 %s113, 1
        %s232 = scalar_lea.sflag [#allocation4], %s231
        %s233 = sand.u32 %s113, 1
        %s234 = smul.addr %s233, 32
        %s235 = scalar_lea.vmem [#allocation8], %s234
        %s236 = smul.u32 2, %s26
        %v237 = vld [vmem:[%s205] sm:$0xff]
        %v238 = vld [vmem:[%s205 + $0x8] sm:$0xff]
        %v239 = vld [vmem:[#allocation5] sm:$0xff]
        %v240 = vld [vmem:[#allocation5 + $0x8] sm:$0xff]
        %v241 = vld [vmem:[#allocation5 + $0x10] sm:$0xff]
        %v242 = vld [vmem:[#allocation5 + $0x18] sm:$0xff]
        %v243 = vld [vmem:[#allocation7] sm:$0xff]
        %v244 = vld [vmem:[#allocation7 + $0x8] sm:$0xff]
        %v245 = vld [vmem:[#allocation7 + $0x10] sm:$0xff]
        %v246 = vld [vmem:[#allocation7 + $0x18] sm:$0xff]
        %248 = vset.pattern.permute.xlu0 0
        %249 = vperm.xlu0 %248, %v243
        %v250 = vpop.permute.xlu0 %249
        %253 = vset.pattern.permute.xlu0 0
        %254 = vperm.xlu0 %253, %v244
        %v255 = vpop.permute.xlu0 %254
        %258 = vset.pattern.permute.xlu0 0
        %259 = vperm.xlu0 %258, %v245
        %v260 = vpop.permute.xlu0 %259
        %263 = vset.pattern.permute.xlu0 0
        %264 = vperm.xlu0 %263, %v246
        %v265 = vpop.permute.xlu0 %264
        %vm267 = vcmask 261120
        %v269 = vsel %vm267, %v239, 0
        %v272 = vsel %vm267, %v240, 0
        %v275 = vsel %vm267, %v241, 0
        %v278 = vsel %vm267, %v242, 0
        %v281 = vsel %vm267, %v237, 0
        %v284 = vsel %vm267, %v238, 0
        %286 = vmatprep.subr.mxu0 0.0
        %287 = vmatpush1.xpose.msra.mxu0 %v281
        %288 = vmatprep.subr.mxu0 0.0
        %289 = vmatpush1.xpose.msra.mxu0 %v284
        %290 = vmatprep.subr.mxu0 0.0
        %291 = vmatpush1.xpose.msra.mxu0 0.0
        %292 = vmatprep.subr.mxu0 0.0
        %293 = vmatpush1.xpose.msra.mxu0 0.0
        %294 = vmatprep.subr.mxu0 0.0
        %295 = vmatpush1.xpose.msra.mxu0 0.0
        %296 = vmatprep.subr.mxu0 0.0
        %297 = vmatpush1.xpose.msra.mxu0 0.0
        %298 = vmatprep.subr.mxu0 0.0
        %299 = vmatpush1.xpose.msra.mxu0 0.0
        %300 = vmatprep.subr.mxu0 0.0
        %301 = vmatpush1.xpose.msra.mxu0 0.0
        %302 = vmatprep.subr.mxu0 0.0
        %303 = vmatpush1.xpose.msra.mxu0 0.0
        %304 = vmatprep.subr.mxu0 0.0
        %305 = vmatpush1.xpose.msra.mxu0 0.0
        %306 = vmatprep.subr.mxu0 0.0
        %307 = vmatpush1.xpose.msra.mxu0 0.0
        %308 = vmatprep.subr.mxu0 0.0
        %309 = vmatpush1.xpose.msra.mxu0 0.0
        %310 = vmatprep.subr.mxu0 0.0
        %311 = vmatpush1.xpose.msra.mxu0 0.0
        %312 = vmatprep.subr.mxu0 0.0
        %313 = vmatpush1.xpose.msra.mxu0 0.0
        %314 = vmatprep.subr.mxu0 0.0
        %315 = vmatpush1.xpose.msra.mxu0 0.0
        %316 = vmatprep.subr.mxu0 0.0
        %317 = vmatpush1.xpose.msra.mxu0 0.0
        %318 = vmatprep.subr.mxu0 0.0
        %319 = vmatpush1.xpose.msra.mxu0 0.0
        %320 = vmatprep.subr.mxu0 0.0
        %321 = vmatpush1.xpose.msra.mxu0 0.0
        %322 = vmatprep.subr.mxu0 0.0
        %323 = vmatpush1.xpose.msra.mxu0 0.0
        %324 = vmatprep.subr.mxu0 0.0
        %325 = vmatpush1.xpose.msra.mxu0 0.0
        %326 = vmatprep.subr.mxu0 0.0
        %327 = vmatpush1.xpose.msra.mxu0 0.0
        %328 = vmatprep.subr.mxu0 0.0
        %329 = vmatpush1.xpose.msra.mxu0 0.0
        %330 = vmatprep.subr.mxu0 0.0
        %331 = vmatpush1.xpose.msra.mxu0 0.0
        %332 = vmatprep.subr.mxu0 0.0
        %333 = vmatpush1.xpose.msra.mxu0 0.0
        %334 = vmatprep.subr.mxu0 0.0
        %335 = vmatpush1.xpose.msra.mxu0 0.0
        %336 = vmatprep.subr.mxu0 0.0
        %337 = vmatpush1.xpose.msra.mxu0 0.0
        %338 = vmatprep.subr.mxu0 0.0
        %339 = vmatpush1.xpose.msra.mxu0 0.0
        %340 = vmatprep.subr.mxu0 0.0
        %341 = vmatpush1.xpose.msra.mxu0 0.0
        %342 = vmatprep.subr.mxu0 0.0
        %343 = vmatpush1.xpose.msra.mxu0 0.0
        %344 = vmatprep.subr.mxu0 0.0
        %345 = vmatpush1.xpose.msra.mxu0 0.0
        %346 = vmatprep.subr.mxu0 0.0
        %347 = vmatpush1.xpose.msra.mxu0 0.0
        %348 = vmatprep.subr.mxu0 0.0
        %349 = vmatpush1.xpose.msra.mxu0 0.0
        %350 = vmatprep.mubr.f32.mxu0 0.0
        %351 = vmatmul.mubr.f32.gmra.mrb[0].mxu0 %v269
        %v352 = vpop.f32.mrb[0].mxu0
        %v353 = vadd.f32 %v250, %v352
        %v354 = vpop.f32.mrb[0].mxu0
        %355 = vmatprep.mubr.f32.mxu0 0.0
        %356 = vmatmul.mubr.f32.gmra.mrb[0].mxu0 %v272
        %v357 = vpop.f32.mrb[0].mxu0
        %v358 = vadd.f32 %v255, %v357
        %v359 = vpop.f32.mrb[0].mxu0
        %360 = vmatprep.mubr.f32.mxu0 0.0
        %361 = vmatmul.mubr.f32.gmra.mrb[0].mxu0 %v275
        %v362 = vpop.f32.mrb[0].mxu0
        %v363 = vadd.f32 %v260, %v362
        %v364 = vpop.f32.mrb[0].mxu0
        %365 = vmatprep.mubr.f32.mxu0 0.0
        %366 = vmatmul.mubr.f32.gmra.mrb[0].mxu0 %v278
        %v367 = vpop.f32.mrb[0].mxu0
        %v368 = vadd.f32 %v265, %v367
        %v369 = vpop.f32.mrb[0].mxu0
        %370 = vdwg.mxu0
        %vm371 = vcmask 130048
        %372 = vst.msk [vmem:[%s235] sm:$0xff] %vm371, %v353
        %s373 = scalar_lea.vmem %s235, 8 [#allocation8]
        %374 = vst.msk [vmem:[%s373] sm:$0xff] %vm371, %v358
        %s375 = scalar_lea.vmem %s235, 16 [#allocation8]
        %376 = vst.msk [vmem:[%s375] sm:$0xff] %vm371, %v363
        %s377 = scalar_lea.vmem %s235, 24 [#allocation8]
        %378 = vst.msk [vmem:[%s377] sm:$0xff] %vm371, %v368
        %s379 = sand.u32 %s113, 1
        %s380 = scalar_lea.sflag [#allocation4], %s379
        %s381 = sand.u32 %s113, 1
        %s382 = smul.addr %s381, 32
        %s383 = scalar_lea.vmem [#allocation8], %s382
        // Predicated region
        $region45: #{attention_forward.6} parent=31 // pred_check
          %p384 = pneg %p123
        $region46: #{attention_forward.6} parent=31 // pred_check_branch
          %386 = sbr.rel (%p384) target = $region48
        $region47: #{attention_forward.6} parent=31 // pred_region
          %s388 = ssub.s32 512, 512
          %389 = vsyncadd %s380, %s388
          %s390 = smul.addr %s25, 4
          %s391 = sadd.s32 %s26, %s390
          %s392 = smul.addr %s391, 128
          %s393 = scalar_lea.hbm %s3, %s392
          %s394 = sshll.u32 %s383, 4
          %s395 = int_to_ptr.vmem [resolvable:$true] %s394
          %400 = dma.vmem_to_hbm [thread:$0]  %s395, 512, %s393, %s380, 128, 128, 8
        $region48: #{attention_forward.6} parent=31 // pred_fallthru
          _
      $region32: #{attention_forward.6} parent=5 // pred_fallthru
        _
      %p401 = scmp.le.s32.totalorder 2, %s16
      // Predicated region
      $region49: #{attention_forward.6} parent=5 // pred_check
        %p402 = pneg %p401
      $region50: #{attention_forward.6} parent=5 // pred_check_branch
        %404 = sbr.rel (%p402) target = $region52
      $region51: #{attention_forward.6} parent=5 // pred_region
        %s405 = ssub.s32 %s16, 2
        // Predicated region
        $region53: #{attention_forward.6} parent=51 // pred_check
          %p406 = pneg %p129
        $region54: #{attention_forward.6} parent=51 // pred_check_branch
          %408 = sbr.rel (%p406) target = $region56
        $region55: #{attention_forward.6} parent=51 // pred_region
          %s409 = sand.u32 %s114, 1
          %s410 = scalar_lea.sflag [#allocation4], %s409
          %s411 = sand.u32 %s114, 1
          %s412 = smul.addr %s411, 32
          %s413 = scalar_lea.vmem [#allocation8], %s412
          %414 = dma.done %s410, 512
        $region56: #{attention_forward.6} parent=51 // pred_fallthru
          _
      $region52: #{attention_forward.6} parent=5 // pred_fallthru
        _
    $region6: #{attention_forward.6} parent=1 // loop_footer
      %s20 = sadd.s32 1, %s16
    $region7: #{attention_forward.6} parent=1 // loop_footer_branch
      %15 = sbr.rel target = $region3
    $region8: #{attention_forward.6} parent=1 // loop_exit
      _
    %415 = vsyncpa [#allocation3], 1
    %s416 = scalar_lea.sflag [#allocation3], 1
    %417 = vsyncpa %s416, 1
    %418 = vsyncpa [#allocation6], 1
    %419 = vsyncpa [#allocation4], 1
    %s420 = scalar_lea.sflag [#allocation4], 1
    %421 = vsyncpa %s420, 1

// kernel: attention_forward.7
$region0: #{attention_forward.7}
  #allocation0 [shape = 'u32[]', space=smem, size = 0x4, offset = 0x4, fixed_abs, tag = 'smem constant byte address 0x4 - core index']
  #allocation1 [shape = 'u32[144,128]{1,0:T(1,128)}', space=vmem, size = 0x12000, scoped, tag = 'internal scratch']
  %s0 = inlined_call_operand.hbm [shape: f32[2,16,32], index: 0, kind: input, shape index: {}]
  %s1 = inlined_call_operand.hbm [shape: f32[32,32], index: 1, kind: input, shape index: {}]
  %s2 = inlined_call_operand.hbm [shape: f32[1,32], index: 2, kind: input, shape index: {}]
  %s3 = inlined_call_operand.hbm [shape: f32[2,4,16,8], index: 3, kind: output, shape index: {}]
  %s4 = sld [smem:[#allocation0]]
  $region57: #{attention_forward.7} parent=0
    _
  %s6 = ssub.s32 1, %s4
  %s7 = scalar_select 0, %s6, %s4
  $region1: #{attention_forward.7} parent=0
    #allocation2 [shape = 'u8[16384]{0}', space=vmem, size = 0x4000, scoped, tag = 'input window, operand 0']
    #allocation3 [shape = 's32[2]{0}', space=sflag, size = 0x8, scoped, tag = 'scoped memory for attention_forward.7']
    #allocation4 [shape = 's32[2]{0}', space=sflag, size = 0x8, scoped, tag = 'scoped memory for attention_forward.7']
    #allocation5 [shape = 'u8[16384]{0}', space=vmem, size = 0x4000, scoped, tag = 'input window, operand 1, single buffered']
    #allocation6 [shape = 's32[1]{0}', space=sflag, size = 0x4, scoped, tag = 'scoped memory for attention_forward.7']
    #allocation7 [shape = 'u8[512]{0}', space=vmem, size = 0x400, scoped, tag = 'input window, operand 2, single buffered']
    #allocation8 [shape = 'u8[65536]{0}', space=vmem, size = 0x10000, scoped, tag = 'output window, operand 0']
    %8 = vsyncpa [#allocation3], 0
    %s9 = scalar_lea.sflag [#allocation3], 1
    %10 = vsyncpa %s9, 0
    %11 = vsyncpa [#allocation6], 0
    %12 = vsyncpa [#allocation4], 0
    %s13 = scalar_lea.sflag [#allocation4], 1
    %14 = vsyncpa %s13, 0
    loop: start=0, step=1, limit=4
    $region2: #{attention_forward.7} parent=1 // loop_pre_header
      _
    $region3: #{attention_forward.7} parent=1 // loop_header
      %s16 = sphi 0, %s20
      %p17 = scmp.ge.s32.totalorder %s16, 4
      %s23 = sphi 0, %s35
      %s24 = sphi 0, %s31
      %s25 = sphi 0, %s23
      %s26 = sphi 0, %s24
      %s27 = sphi 0, %s25
      %s28 = sphi 0, %s26
      %s40 = sphi 0, %s42
      %s43 = sphi 0, %s40
      %s44 = sphi 0, %s43
      %s60 = sphi 0, %s44
      %s64 = sphi 0, %s64
      %s66 = sphi 0, %s64
      %s67 = sphi 0, %s66
      %s81 = sphi 0, %s67
      %s85 = sphi 0, %s85
      %s87 = sphi 0, %s85
      %s88 = sphi 0, %s87
      %s102 = sphi 0, %s88
      %s110 = sphi 0, %s112
      %s113 = sphi 0, %s110
      %s114 = sphi 0, %s113
      %s130 = sphi 0, %s114
    $region4: #{attention_forward.7} parent=1 // loop_header_branch
      %19 = sbr.rel (%p17) target = $region8
    $region5: #{attention_forward.7} parent=1 // loop_body
      %s21 = ssub.s32 %s16, 1
      %s22 = ssub.s32 %s16, 2
      %s29 = sadd.s32 1, %s24
      %p30 = scmp.ge.s32.totalorder %s29, 1
      %s31 = scalar_select %p30, 0, %s29
      %s32 = sadd.s32 1, %s23
      %s33 = scalar_select %p30, %s32, %s23
      %p34 = scmp.ge.s32.totalorder %s33, 2
      %s35 = scalar_select %p34, 0, %s33
      %s36 = ssub.s32 %s23, %s35
      %s37 = ssub.s32 %s24, %s31
      %s38 = sor.u32 %s36, %s37
      %p39 = scmp.eq.s32.totalorder %s38, 0
      %s41 = sadd.s32 %s40, 1
      %s42 = scalar_select %p39, %s40, %s41
      %p45 = pneg %p39
      %p46 = scmp.eq.s32.totalorder %s16, 1
      %p47 = por %p45, %p46
      %p48 = scmp.ne.s32.totalorder %s40, %s43
      %p49 = scmp.eq.s32.totalorder %s16, 0
      %p50 = por %p48, %p49
      %p51 = scmp.ne.s32.totalorder %s40, %s43
      %p52 = scmp.eq.s32.totalorder %s21, 1
      %p53 = por %p51, %p52
      %p54 = scmp.ne.s32.totalorder %s43, %s44
      %p55 = scmp.eq.s32.totalorder %s21, 0
      %p56 = por %p54, %p55
      %p57 = scmp.ne.s32.totalorder %s43, %s44
      %p58 = scmp.eq.s32.totalorder %s22, 1
      %p59 = por %p57, %p58
      %p61 = scmp.ne.s32.totalorder %s44, %s60
      %p62 = scmp.eq.s32.totalorder %s22, 0
      %p63 = por %p61, %p62
      %s65 = sadd.s32 %s64, 1
      %p68 = scmp.eq.s32.totalorder %s16, 1
      %p69 = scmp.ne.s32.totalorder %s64, %s66
      %p70 = scmp.eq.s32.totalorder %s16, 0
      %p71 = por %p69, %p70
      %p72 = scmp.ne.s32.totalorder %s64, %s66
      %p73 = scmp.eq.s32.totalorder %s21, 1
      %p74 = por %p72, %p73
      %p75 = scmp.ne.s32.totalorder %s66, %s67
      %p76 = scmp.eq.s32.totalorder %s21, 0
      %p77 = por %p75, %p76
      %p78 = scmp.ne.s32.totalorder %s66, %s67
      %p79 = scmp.eq.s32.totalorder %s22, 1
      %p80 = por %p78, %p79
      %p82 = scmp.ne.s32.totalorder %s67, %s81
      %p83 = scmp.eq.s32.totalorder %s22, 0
      %p84 = por %p82, %p83
      %s86 = sadd.s32 %s85, 1
      %p89 = scmp.eq.s32.totalorder %s16, 1
      %p90 = scmp.ne.s32.totalorder %s85, %s87
      %p91 = scmp.eq.s32.totalorder %s16, 0
      %p92 = por %p90, %p91
      %p93 = scmp.ne.s32.totalorder %s85, %s87
      %p94 = scmp.eq.s32.totalorder %s21, 1
      %p95 = por %p93, %p94
      %p96 = scmp.ne.s32.totalorder %s87, %s88
      %p97 = scmp.eq.s32.totalorder %s21, 0
      %p98 = por %p96, %p97
      %p99 = scmp.ne.s32.totalorder %s87, %s88
      %p100 = scmp.eq.s32.totalorder %s22, 1
      %p101 = por %p99, %p100
      %p103 = scmp.ne.s32.totalorder %s88, %s102
      %p104 = scmp.eq.s32.totalorder %s22, 0
      %p105 = por %p103, %p104
      %s106 = ssub.s32 %s23, %s35
      %s107 = ssub.s32 %s24, %s31
      %s108 = sor.u32 %s106, %s107
      %p109 = scmp.eq.s32.totalorder %s108, 0
      %s111 = sadd.s32 %s110, 1
      %s112 = scalar_select %p109, %s110, %s111
      %p115 = pneg %p109
      %p116 = scmp.eq.s32.totalorder %s16, 1
      %p117 = por %p115, %p116
      %p118 = scmp.ne.s32.totalorder %s110, %s113
      %p119 = scmp.eq.s32.totalorder %s16, 0
      %p120 = por %p118, %p119
      %p121 = scmp.ne.s32.totalorder %s110, %s113
      %p122 = scmp.eq.s32.totalorder %s21, 1
      %p123 = por %p121, %p122
      %p124 = scmp.ne.s32.totalorder %s113, %s114
      %p125 = scmp.eq.s32.totalorder %s21, 0
      %p126 = por %p124, %p125
      %p127 = scmp.ne.s32.totalorder %s113, %s114
      %p128 = scmp.eq.s32.totalorder %s22, 1
      %p129 = por %p127, %p128
      %p131 = scmp.ne.s32.totalorder %s114, %s130
      %p132 = scmp.eq.s32.totalorder %s22, 0
      %p133 = por %p131, %p132
      %p134 = scmp.le.s32.totalorder 1, %s16
      %p135 = scmp.lt.s32.totalorder %s16, 3
      %p136 = pnand %p134, %p135
      %p137 = pneg %p136
      // Predicated region
      $region9: #{attention_forward.7} parent=5 // pred_check
        _
      $region10: #{attention_forward.7} parent=5 // pred_check_branch
        %139 = sbr.rel (%p136) target = $region12
      $region11: #{attention_forward.7} parent=5 // pred_region
        %s140 = ssub.s32 %s16, 1
        // Predicated region
        $region13: #{attention_forward.7} parent=11 // pred_check
          %p141 = pneg %p77
        $region14: #{attention_forward.7} parent=11 // pred_check_branch
          %143 = sbr.rel (%p141) target = $region16
        $region15: #{attention_forward.7} parent=11 // pred_region
          %s145 = ssub.s32 512, 512
          %146 = vsyncadd [#allocation6], %s145
          %s147 = sshll.u32 [#allocation5], 4
          %s148 = int_to_ptr.vmem [resolvable:$true] %s147
          %153 = dma.hbm_to_vmem [thread:$0]  %s1, 512, %s148, [#allocation6], 128, 128, 8
        $region16: #{attention_forward.7} parent=11 // pred_fallthru
          _
        // Predicated region
        $region17: #{attention_forward.7} parent=11 // pred_check
          %p154 = pneg %p98
        $region18: #{attention_forward.7} parent=11 // pred_check_branch
          %156 = sbr.rel (%p154) target = $region20
        $region19: #{attention_forward.7} parent=11 // pred_region
          %s158 = ssub.s32 16, 16
          %159 = vsyncadd [#allocation6], %s158
          %s161 = sshll.u32 [#allocation7], 4
          %s162 = int_to_ptr.vmem [resolvable:$true] %s161
          %164 = dma.hbm_to_vmem [thread:$0]  %s2, 16, %s162, [#allocation6]
        $region20: #{attention_forward.7} parent=11 // pred_fallthru
          _
      $region12: #{attention_forward.7} parent=5 // pred_fallthru
        _
      %p165 = scmp.lt.s32.totalorder %s16, 2
      // Predicated region
      $region21: #{attention_forward.7} parent=5 // pred_check
        %p166 = pneg %p165
      $region22: #{attention_forward.7} parent=5 // pred_check_branch
        %168 = sbr.rel (%p166) target = $region24
      $region23: #{attention_forward.7} parent=5 // pred_region
        // Predicated region
        $region25: #{attention_forward.7} parent=23 // pred_check
          %p169 = pneg %p50
        $region26: #{attention_forward.7} parent=23 // pred_check_branch
          %171 = sbr.rel (%p169) target = $region28
        $region27: #{attention_forward.7} parent=23 // pred_region
          %s172 = sand.u32 %s40, 1
          %s173 = scalar_lea.sflag [#allocation3], %s172
          %s174 = sand.u32 %s40, 1
          %s175 = smul.addr %s174, 16
          %s176 = scalar_lea.vmem [#allocation2], %s175
          %s177 = smul.u32 2, %s24
          %s179 = ssub.s32 256, 256
          %180 = vsyncadd %s173, %s179
          %s181 = smul.addr %s23, 2
          %s182 = sadd.s32 %s177, %s181
          %s183 = smul.addr %s182, 128
          %s184 = scalar_lea.hbm %s0, %s183
          %s185 = sshll.u32 %s176, 4
          %s186 = int_to_ptr.vmem [resolvable:$true] %s185
          %191 = dma.hbm_to_vmem [thread:$0]  %s184, 256, %s186, %s173, 128, 128, 8
        $region28: #{attention_forward.7} parent=23 // pred_fallthru
          _
      $region24: #{attention_forward.7} parent=5 // pred_fallthru
        _
      %p192 = scmp.le.s32.totalorder 1, %s16
      %p193 = scmp.lt.s32.totalorder %s16, 3
      %p194 = pnand %p192, %p193
      %p195 = pneg %p194
      // Predicated region
      $region29: #{attention_forward.7} parent=5 // pred_check
        _
      $region30: #{attention_forward.7} parent=5 // pred_check_branch
        %197 = sbr.rel (%p194) target = $region32
      $region31: #{attention_forward.7} parent=5 // pred_region
        %s198 = ssub.s32 %s16, 1
        %s199 = sand.u32 %s43, 1
        %s200 = scalar_lea.sflag [#allocation3], %s199
        %s201 = sand.u32 %s43, 1
        %s202 = smul.addr %s201, 16
        %s203 = scalar_lea.vmem [#allocation2], %s202
        // Predicated region
        $region33: #{attention_forward.7} parent=31 // pred_check
          %p204 = pneg %p56
        $region34: #{attention_forward.7} parent=31 // pred_check_branch
          %206 = sbr.rel (%p204) target = $region36
        $region35: #{attention_forward.7} parent=31 // pred_region
          %207 = dma.done %s200, 256
        $region36: #{attention_forward.7} parent=31 // pred_fallthru
          _
        // Predicated region
        $region37: #{attention_forward.7} parent=31 // pred_check
          %p208 = pneg %p77
        $region38: #{attention_forward.7} parent=31 // pred_check_branch
          %210 = sbr.rel (%p208) target = $region40
        $region39: #{attention_forward.7} parent=31 // pred_region
          %211 = dma.done [#allocation6], 512
        $region40: #{attention_forward.7} parent=31 // pred_fallthru
          _
        // Predicated region
        $region41: #{attention_forward.7} parent=31 // pred_check
          %p212 = pneg %p98
        $region42: #{attention_forward.7} parent=31 // pred_check_branch
          %214 = sbr.rel (%p212) target = $region44
        $region43: #{attention_forward.7} parent=31 // pred_region
          %215 = dma.done [#allocation6], 16
        $region44: #{attention_forward.7} parent=31 // pred_fallthru
          _
        %s216 = sand.u32 %s43, 1
        %s217 = scalar_lea.sflag [#allocation3], %s216
        %s218 = sand.u32 %s43, 1
        %s219 = smul.addr %s218, 16
        %s220 = scalar_lea.vmem [#allocation2], %s219
        %p221 = pneg %p56
        %p222 = pneg %p53
        %p223 = pneg %p77
        %p224 = pneg %p74
        %p225 = pneg %p98
        %p226 = pneg %p95
        %p227 = pneg %p126
        %p228 = pneg %p123
        %s229 = sand.u32 %s113, 1
        %s230 = scalar_lea.sflag [#allocation4], %s229
        %s231 = sand.u32 %s113, 1
        %s232 = smul.addr %s231, 64
        %s233 = scalar_lea.vmem [#allocation8], %s232
        %s234 = smul.u32 2, %s26
        %s235 = smul.u32 2, %s26
        %v236 = vld [vmem:[%s203] sm:$0xff]
        %v237 = vld [vmem:[%s203 + $0x8] sm:$0xff]
        %v238 = vld [vmem:[#allocation5] sm:$0xff]
        %v239 = vld [vmem:[#allocation5 + $0x8] sm:$0xff]
        %v240 = vld [vmem:[#allocation5 + $0x10] sm:$0xff]
        %v241 = vld [vmem:[#allocation5 + $0x18] sm:$0xff]
        %v242 = vld [vmem:[#allocation7] sm:$0x1]
        %v244 = vlaneseq
        %v245 = vshrl.u32 %v244, 7
        %v246 = vsub.s32 0, %v245
        %v247 = vrot.slane %v242, %v246
        %vm249 = vcmask 261120
        %v251 = vsel %vm249, %v236, 0
        %v254 = vsel %vm249, %v237, 0
        %256 = vmatprep.subr.mxu0 0.0
        %257 = vmatpush1.msra.mxu0 %v238
        %258 = vmatprep.subr.mxu0 0.0
        %259 = vmatpush1.msra.mxu0 %v239
        %260 = vmatprep.subr.mxu0 0.0
        %261 = vmatpush1.msra.mxu0 %v240
        %262 = vmatprep.subr.mxu0 0.0
        %263 = vmatpush1.msra.mxu0 %v241
        %264 = vmatprep.subr.mxu0 0.0
        %265 = vmatpush1.msra.mxu0 0.0
        %266 = vmatprep.subr.mxu0 0.0
        %267 = vmatpush1.msra.mxu0 0.0
        %268 = vmatprep.subr.mxu0 0.0
        %269 = vmatpush1.msra.mxu0 0.0
        %270 = vmatprep.subr.mxu0 0.0
        %271 = vmatpush1.msra.mxu0 0.0
        %272 = vmatprep.subr.mxu0 0.0
        %273 = vmatpush1.msra.mxu0 0.0
        %274 = vmatprep.subr.mxu0 0.0
        %275 = vmatpush1.msra.mxu0 0.0
        %276 = vmatprep.subr.mxu0 0.0
        %277 = vmatpush1.msra.mxu0 0.0
        %278 = vmatprep.subr.mxu0 0.0
        %279 = vmatpush1.msra.mxu0 0.0
        %280 = vmatprep.subr.mxu0 0.0
        %281 = vmatpush1.msra.mxu0 0.0
        %282 = vmatprep.subr.mxu0 0.0
        %283 = vmatpush1.msra.mxu0 0.0
        %284 = vmatprep.subr.mxu0 0.0
        %285 = vmatpush1.msra.mxu0 0.0
        %286 = vmatprep.subr.mxu0 0.0
        %287 = vmatpush1.msra.mxu0 0.0
        %288 = vmatprep.subr.mxu0 0.0
        %289 = vmatpush1.msra.mxu0 0.0
        %290 = vmatprep.subr.mxu0 0.0
        %291 = vmatpush1.msra.mxu0 0.0
        %292 = vmatprep.subr.mxu0 0.0
        %293 = vmatpush1.msra.mxu0 0.0
        %294 = vmatprep.subr.mxu0 0.0
        %295 = vmatpush1.msra.mxu0 0.0
        %296 = vmatprep.subr.mxu0 0.0
        %297 = vmatpush1.msra.mxu0 0.0
        %298 = vmatprep.subr.mxu0 0.0
        %299 = vmatpush1.msra.mxu0 0.0
        %300 = vmatprep.subr.mxu0 0.0
        %301 = vmatpush1.msra.mxu0 0.0
        %302 = vmatprep.subr.mxu0 0.0
        %303 = vmatpush1.msra.mxu0 0.0
        %304 = vmatprep.subr.mxu0 0.0
        %305 = vmatpush1.msra.mxu0 0.0
        %306 = vmatprep.subr.mxu0 0.0
        %307 = vmatpush1.msra.mxu0 0.0
        %308 = vmatprep.subr.mxu0 0.0
        %309 = vmatpush1.msra.mxu0 0.0
        %310 = vmatprep.subr.mxu0 0.0
        %311 = vmatpush1.msra.mxu0 0.0
        %312 = vmatprep.subr.mxu0 0.0
        %313 = vmatpush1.msra.mxu0 0.0
        %314 = vmatprep.subr.mxu0 0.0
        %315 = vmatpush1.msra.mxu0 0.0
        %316 = vmatprep.subr.mxu0 0.0
        %317 = vmatpush1.msra.mxu0 0.0
        %318 = vmatprep.subr.mxu0 0.0
        %319 = vmatpush1.msra.mxu0 0.0
        %320 = vmatprep.mubr.f32.mxu0 0.0
        %321 = vmatmul.mubr.f32.gmra.mrb[0].mxu0 %v251
        %v322 = vpop.f32.mrb[0].mxu0
        %v323 = vadd.f32 %v247, %v322
        %v324 = vpop.f32.mrb[0].mxu0
        %325 = vmatprep.mubr.f32.mxu0 0.0
        %326 = vmatmul.mubr.f32.gmra.mrb[0].mxu0 %v254
        %v327 = vpop.f32.mrb[0].mxu0
        %v328 = vadd.f32 %v247, %v327
        %v329 = vpop.f32.mrb[0].mxu0
        %330 = vdwg.mxu0
        %vm331 = vcmask 64512
        %332 = vst.msk [vmem:[%s233] sm:$0xff] %vm331, %v323
        %333 = vst.msk [vmem:[%s233 + $0x8] sm:$0xff] %vm331, %v328
        %336 = vrot.lane.b32.xlu0 %v323, 120
        %v337 = vpop.permute.xlu0 %336
        %338 = vrot.lane.b32.xlu0 %v328, 120
        %v339 = vpop.permute.xlu0 %338
        %s342 = scalar_lea.vmem %s233, 16 [#allocation8]
        %343 = vst.msk [vmem:[%s342] sm:$0xff] %vm331, %v337
        %344 = vst.msk [vmem:[%s342 + $0x8] sm:$0xff] %vm331, %v339
        %345 = vrot.lane.b32.xlu0 %v323, 112
        %v346 = vpop.permute.xlu0 %345
        %347 = vrot.lane.b32.xlu0 %v328, 112
        %v348 = vpop.permute.xlu0 %347
        %s351 = scalar_lea.vmem %s233, 32 [#allocation8]
        %352 = vst.msk [vmem:[%s351] sm:$0xff] %vm331, %v346
        %353 = vst.msk [vmem:[%s351 + $0x8] sm:$0xff] %vm331, %v348
        %354 = vrot.lane.b32.xlu0 %v323, 104
        %v355 = vpop.permute.xlu0 %354
        %356 = vrot.lane.b32.xlu0 %v328, 104
        %v357 = vpop.permute.xlu0 %356
        %s360 = scalar_lea.vmem %s233, 48 [#allocation8]
        %361 = vst.msk [vmem:[%s360] sm:$0xff] %vm331, %v355
        %362 = vst.msk [vmem:[%s360 + $0x8] sm:$0xff] %vm331, %v357
        %s363 = sand.u32 %s113, 1
        %s364 = scalar_lea.sflag [#allocation4], %s363
        %s365 = sand.u32 %s113, 1
        %s366 = smul.addr %s365, 64
        %s367 = scalar_lea.vmem [#allocation8], %s366
        // Predicated region
        $region45: #{attention_forward.7} parent=31 // pred_check
          %p368 = pneg %p123
        $region46: #{attention_forward.7} parent=31 // pred_check_branch
          %370 = sbr.rel (%p368) target = $region48
        $region47: #{attention_forward.7} parent=31 // pred_region
          %s371 = smul.u32 2, %s26
          %s373 = ssub.s32 1024, 1024
          %374 = vsyncadd %s364, %s373
          %s375 = smul.addr %s25, 8
          %s376 = sadd.s32 %s371, %s375
          %s377 = smul.addr %s376, 128
          %s378 = scalar_lea.hbm %s3, %s377
          %s379 = sshll.u32 %s367, 4
          %s380 = int_to_ptr.vmem [resolvable:$true] %s379
          %385 = dma.vmem_to_hbm [thread:$0]  %s380, 1024, %s378, %s364, 128, 128, 8
        $region48: #{attention_forward.7} parent=31 // pred_fallthru
          _
      $region32: #{attention_forward.7} parent=5 // pred_fallthru
        _
      %p386 = scmp.le.s32.totalorder 2, %s16
      // Predicated region
      $region49: #{attention_forward.7} parent=5 // pred_check
        %p387 = pneg %p386
      $region50: #{attention_forward.7} parent=5 // pred_check_branch
        %389 = sbr.rel (%p387) target = $region52
      $region51: #{attention_forward.7} parent=5 // pred_region
        %s390 = ssub.s32 %s16, 2
        // Predicated region
        $region53: #{attention_forward.7} parent=51 // pred_check
          %p391 = pneg %p129
        $region54: #{attention_forward.7} parent=51 // pred_check_branch
          %393 = sbr.rel (%p391) target = $region56
        $region55: #{attention_forward.7} parent=51 // pred_region
          %s394 = sand.u32 %s114, 1
          %s395 = scalar_lea.sflag [#allocation4], %s394
          %s396 = sand.u32 %s114, 1
          %s397 = smul.addr %s396, 64
          %s398 = scalar_lea.vmem [#allocation8], %s397
          %399 = dma.done %s395, 1024
        $region56: #{attention_forward.7} parent=51 // pred_fallthru
          _
      $region52: #{attention_forward.7} parent=5 // pred_fallthru
        _
    $region6: #{attention_forward.7} parent=1 // loop_footer
      %s20 = sadd.s32 1, %s16
    $region7: #{attention_forward.7} parent=1 // loop_footer_branch
      %15 = sbr.rel target = $region3
    $region8: #{attention_forward.7} parent=1 // loop_exit
      _
    %400 = vsyncpa [#allocation3], 1
    %s401 = scalar_lea.sflag [#allocation3], 1
    %402 = vsyncpa %s401, 1
    %403 = vsyncpa [#allocation6], 1
    %404 = vsyncpa [#allocation4], 1
    %s405 = scalar_lea.sflag [#allocation4], 1
    %406 = vsyncpa %s405, 1

// kernel: attention_forward.5
$region0: #{attention_forward.5}
  #allocation0 [shape = 'u32[]', space=smem, size = 0x4, offset = 0x4, fixed_abs, tag = 'smem constant byte address 0x4 - core index']
  #allocation1 [shape = 'u32[144,128]{1,0:T(1,128)}', space=vmem, size = 0x12000, scoped, tag = 'internal scratch']
  %s0 = inlined_call_operand.hbm [shape: f32[2,16,32], index: 0, kind: input, shape index: {}]
  %s1 = inlined_call_operand.hbm [shape: f32[32,32], index: 1, kind: input, shape index: {}]
  %s2 = inlined_call_operand.hbm [shape: f32[1,32], index: 2, kind: input, shape index: {}]
  %s3 = inlined_call_operand.hbm [shape: f32[2,4,16,8], index: 3, kind: output, shape index: {}]
  %s4 = sld [smem:[#allocation0]]
  $region57: #{attention_forward.5} parent=0
    _
  %s6 = ssub.s32 1, %s4
  %s7 = scalar_select 0, %s6, %s4
  $region1: #{attention_forward.5} parent=0
    #allocation2 [shape = 'u8[16384]{0}', space=vmem, size = 0x4000, scoped, tag = 'input window, operand 0']
    #allocation3 [shape = 's32[2]{0}', space=sflag, size = 0x8, scoped, tag = 'scoped memory for attention_forward.5']
    #allocation4 [shape = 's32[2]{0}', space=sflag, size = 0x8, scoped, tag = 'scoped memory for attention_forward.5']
    #allocation5 [shape = 'u8[16384]{0}', space=vmem, size = 0x4000, scoped, tag = 'input window, operand 1, single buffered']
    #allocation6 [shape = 's32[1]{0}', space=sflag, size = 0x4, scoped, tag = 'scoped memory for attention_forward.5']
    #allocation7 [shape = 'u8[512]{0}', space=vmem, size = 0x400, scoped, tag = 'input window, operand 2, single buffered']
    #allocation8 [shape = 'u8[65536]{0}', space=vmem, size = 0x10000, scoped, tag = 'output window, operand 0']
    %8 = vsyncpa [#allocation3], 0
    %s9 = scalar_lea.sflag [#allocation3], 1
    %10 = vsyncpa %s9, 0
    %11 = vsyncpa [#allocation6], 0
    %12 = vsyncpa [#allocation4], 0
    %s13 = scalar_lea.sflag [#allocation4], 1
    %14 = vsyncpa %s13, 0
    loop: start=0, step=1, limit=4
    $region2: #{attention_forward.5} parent=1 // loop_pre_header
      _
    $region3: #{attention_forward.5} parent=1 // loop_header
      %s16 = sphi 0, %s20
      %p17 = scmp.ge.s32.totalorder %s16, 4
      %s23 = sphi 0, %s35
      %s24 = sphi 0, %s31
      %s25 = sphi 0, %s23
      %s26 = sphi 0, %s24
      %s27 = sphi 0, %s25
      %s28 = sphi 0, %s26
      %s40 = sphi 0, %s42
      %s43 = sphi 0, %s40
      %s44 = sphi 0, %s43
      %s60 = sphi 0, %s44
      %s64 = sphi 0, %s64
      %s66 = sphi 0, %s64
      %s67 = sphi 0, %s66
      %s81 = sphi 0, %s67
      %s85 = sphi 0, %s85
      %s87 = sphi 0, %s85
      %s88 = sphi 0, %s87
      %s102 = sphi 0, %s88
      %s110 = sphi 0, %s112
      %s113 = sphi 0, %s110
      %s114 = sphi 0, %s113
      %s130 = sphi 0, %s114
    $region4: #{attention_forward.5} parent=1 // loop_header_branch
      %19 = sbr.rel (%p17) target = $region8
    $region5: #{attention_forward.5} parent=1 // loop_body
      %s21 = ssub.s32 %s16, 1
      %s22 = ssub.s32 %s16, 2
      %s29 = sadd.s32 1, %s24
      %p30 = scmp.ge.s32.totalorder %s29, 1
      %s31 = scalar_select %p30, 0, %s29
      %s32 = sadd.s32 1, %s23
      %s33 = scalar_select %p30, %s32, %s23
      %p34 = scmp.ge.s32.totalorder %s33, 2
      %s35 = scalar_select %p34, 0, %s33
      %s36 = ssub.s32 %s23, %s35
      %s37 = ssub.s32 %s24, %s31
      %s38 = sor.u32 %s36, %s37
      %p39 = scmp.eq.s32.totalorder %s38, 0
      %s41 = sadd.s32 %s40, 1
      %s42 = scalar_select %p39, %s40, %s41
      %p45 = pneg %p39
      %p46 = scmp.eq.s32.totalorder %s16, 1
      %p47 = por %p45, %p46
      %p48 = scmp.ne.s32.totalorder %s40, %s43
      %p49 = scmp.eq.s32.totalorder %s16, 0
      %p50 = por %p48, %p49
      %p51 = scmp.ne.s32.totalorder %s40, %s43
      %p52 = scmp.eq.s32.totalorder %s21, 1
      %p53 = por %p51, %p52
      %p54 = scmp.ne.s32.totalorder %s43, %s44
      %p55 = scmp.eq.s32.totalorder %s21, 0
      %p56 = por %p54, %p55
      %p57 = scmp.ne.s32.totalorder %s43, %s44
      %p58 = scmp.eq.s32.totalorder %s22, 1
      %p59 = por %p57, %p58
      %p61 = scmp.ne.s32.totalorder %s44, %s60
      %p62 = scmp.eq.s32.totalorder %s22, 0
      %p63 = por %p61, %p62
      %s65 = sadd.s32 %s64, 1
      %p68 = scmp.eq.s32.totalorder %s16, 1
      %p69 = scmp.ne.s32.totalorder %s64, %s66
      %p70 = scmp.eq.s32.totalorder %s16, 0
      %p71 = por %p69, %p70
      %p72 = scmp.ne.s32.totalorder %s64, %s66
      %p73 = scmp.eq.s32.totalorder %s21, 1
      %p74 = por %p72, %p73
      %p75 = scmp.ne.s32.totalorder %s66, %s67
      %p76 = scmp.eq.s32.totalorder %s21, 0
      %p77 = por %p75, %p76
      %p78 = scmp.ne.s32.totalorder %s66, %s67
      %p79 = scmp.eq.s32.totalorder %s22, 1
      %p80 = por %p78, %p79
      %p82 = scmp.ne.s32.totalorder %s67, %s81
      %p83 = scmp.eq.s32.totalorder %s22, 0
      %p84 = por %p82, %p83
      %s86 = sadd.s32 %s85, 1
      %p89 = scmp.eq.s32.totalorder %s16, 1
      %p90 = scmp.ne.s32.totalorder %s85, %s87
      %p91 = scmp.eq.s32.totalorder %s16, 0
      %p92 = por %p90, %p91
      %p93 = scmp.ne.s32.totalorder %s85, %s87
      %p94 = scmp.eq.s32.totalorder %s21, 1
      %p95 = por %p93, %p94
      %p96 = scmp.ne.s32.totalorder %s87, %s88
      %p97 = scmp.eq.s32.totalorder %s21, 0
      %p98 = por %p96, %p97
      %p99 = scmp.ne.s32.totalorder %s87, %s88
      %p100 = scmp.eq.s32.totalorder %s22, 1
      %p101 = por %p99, %p100
      %p103 = scmp.ne.s32.totalorder %s88, %s102
      %p104 = scmp.eq.s32.totalorder %s22, 0
      %p105 = por %p103, %p104
      %s106 = ssub.s32 %s23, %s35
      %s107 = ssub.s32 %s24, %s31
      %s108 = sor.u32 %s106, %s107
      %p109 = scmp.eq.s32.totalorder %s108, 0
      %s111 = sadd.s32 %s110, 1
      %s112 = scalar_select %p109, %s110, %s111
      %p115 = pneg %p109
      %p116 = scmp.eq.s32.totalorder %s16, 1
      %p117 = por %p115, %p116
      %p118 = scmp.ne.s32.totalorder %s110, %s113
      %p119 = scmp.eq.s32.totalorder %s16, 0
      %p120 = por %p118, %p119
      %p121 = scmp.ne.s32.totalorder %s110, %s113
      %p122 = scmp.eq.s32.totalorder %s21, 1
      %p123 = por %p121, %p122
      %p124 = scmp.ne.s32.totalorder %s113, %s114
      %p125 = scmp.eq.s32.totalorder %s21, 0
      %p126 = por %p124, %p125
      %p127 = scmp.ne.s32.totalorder %s113, %s114
      %p128 = scmp.eq.s32.totalorder %s22, 1
      %p129 = por %p127, %p128
      %p131 = scmp.ne.s32.totalorder %s114, %s130
      %p132 = scmp.eq.s32.totalorder %s22, 0
      %p133 = por %p131, %p132
      %p134 = scmp.le.s32.totalorder 1, %s16
      %p135 = scmp.lt.s32.totalorder %s16, 3
      %p136 = pnand %p134, %p135
      %p137 = pneg %p136
      // Predicated region
      $region9: #{attention_forward.5} parent=5 // pred_check
        _
      $region10: #{attention_forward.5} parent=5 // pred_check_branch
        %139 = sbr.rel (%p136) target = $region12
      $region11: #{attention_forward.5} parent=5 // pred_region
        %s140 = ssub.s32 %s16, 1
        // Predicated region
        $region13: #{attention_forward.5} parent=11 // pred_check
          %p141 = pneg %p77
        $region14: #{attention_forward.5} parent=11 // pred_check_branch
          %143 = sbr.rel (%p141) target = $region16
        $region15: #{attention_forward.5} parent=11 // pred_region
          %s145 = ssub.s32 512, 512
          %146 = vsyncadd [#allocation6], %s145
          %s147 = sshll.u32 [#allocation5], 4
          %s148 = int_to_ptr.vmem [resolvable:$true] %s147
          %153 = dma.hbm_to_vmem [thread:$0]  %s1, 512, %s148, [#allocation6], 128, 128, 8
        $region16: #{attention_forward.5} parent=11 // pred_fallthru
          _
        // Predicated region
        $region17: #{attention_forward.5} parent=11 // pred_check
          %p154 = pneg %p98
        $region18: #{attention_forward.5} parent=11 // pred_check_branch
          %156 = sbr.rel (%p154) target = $region20
        $region19: #{attention_forward.5} parent=11 // pred_region
          %s158 = ssub.s32 16, 16
          %159 = vsyncadd [#allocation6], %s158
          %s161 = sshll.u32 [#allocation7], 4
          %s162 = int_to_ptr.vmem [resolvable:$true] %s161
          %164 = dma.hbm_to_vmem [thread:$0]  %s2, 16, %s162, [#allocation6]
        $region20: #{attention_forward.5} parent=11 // pred_fallthru
          _
      $region12: #{attention_forward.5} parent=5 // pred_fallthru
        _
      %p165 = scmp.lt.s32.totalorder %s16, 2
      // Predicated region
      $region21: #{attention_forward.5} parent=5 // pred_check
        %p166 = pneg %p165
      $region22: #{attention_forward.5} parent=5 // pred_check_branch
        %168 = sbr.rel (%p166) target = $region24
      $region23: #{attention_forward.5} parent=5 // pred_region
        // Predicated region
        $region25: #{attention_forward.5} parent=23 // pred_check
          %p169 = pneg %p50
        $region26: #{attention_forward.5} parent=23 // pred_check_branch
          %171 = sbr.rel (%p169) target = $region28
        $region27: #{attention_forward.5} parent=23 // pred_region
          %s172 = sand.u32 %s40, 1
          %s173 = scalar_lea.sflag [#allocation3], %s172
          %s174 = sand.u32 %s40, 1
          %s175 = smul.addr %s174, 16
          %s176 = scalar_lea.vmem [#allocation2], %s175
          %s177 = smul.u32 2, %s24
          %s179 = ssub.s32 256, 256
          %180 = vsyncadd %s173, %s179
          %s181 = smul.addr %s23, 2
          %s182 = sadd.s32 %s177, %s181
          %s183 = smul.addr %s182, 128
          %s184 = scalar_lea.hbm %s0, %s183
          %s185 = sshll.u32 %s176, 4
          %s186 = int_to_ptr.vmem [resolvable:$true] %s185
          %191 = dma.hbm_to_vmem [thread:$0]  %s184, 256, %s186, %s173, 128, 128, 8
        $region28: #{attention_forward.5} parent=23 // pred_fallthru
          _
      $region24: #{attention_forward.5} parent=5 // pred_fallthru
        _
      %p192 = scmp.le.s32.totalorder 1, %s16
      %p193 = scmp.lt.s32.totalorder %s16, 3
      %p194 = pnand %p192, %p193
      %p195 = pneg %p194
      // Predicated region
      $region29: #{attention_forward.5} parent=5 // pred_check
        _
      $region30: #{attention_forward.5} parent=5 // pred_check_branch
        %197 = sbr.rel (%p194) target = $region32
      $region31: #{attention_forward.5} parent=5 // pred_region
        %s198 = ssub.s32 %s16, 1
        %s199 = sand.u32 %s43, 1
        %s200 = scalar_lea.sflag [#allocation3], %s199
        %s201 = sand.u32 %s43, 1
        %s202 = smul.addr %s201, 16
        %s203 = scalar_lea.vmem [#allocation2], %s202
        // Predicated region
        $region33: #{attention_forward.5} parent=31 // pred_check
          %p204 = pneg %p56
        $region34: #{attention_forward.5} parent=31 // pred_check_branch
          %206 = sbr.rel (%p204) target = $region36
        $region35: #{attention_forward.5} parent=31 // pred_region
          %207 = dma.done %s200, 256
        $region36: #{attention_forward.5} parent=31 // pred_fallthru
          _
        // Predicated region
        $region37: #{attention_forward.5} parent=31 // pred_check
          %p208 = pneg %p77
        $region38: #{attention_forward.5} parent=31 // pred_check_branch
          %210 = sbr.rel (%p208) target = $region40
        $region39: #{attention_forward.5} parent=31 // pred_region
          %211 = dma.done [#allocation6], 512
        $region40: #{attention_forward.5} parent=31 // pred_fallthru
          _
        // Predicated region
        $region41: #{attention_forward.5} parent=31 // pred_check
          %p212 = pneg %p98
        $region42: #{attention_forward.5} parent=31 // pred_check_branch
          %214 = sbr.rel (%p212) target = $region44
        $region43: #{attention_forward.5} parent=31 // pred_region
          %215 = dma.done [#allocation6], 16
        $region44: #{attention_forward.5} parent=31 // pred_fallthru
          _
        %s216 = sand.u32 %s43, 1
        %s217 = scalar_lea.sflag [#allocation3], %s216
        %s218 = sand.u32 %s43, 1
        %s219 = smul.addr %s218, 16
        %s220 = scalar_lea.vmem [#allocation2], %s219
        %p221 = pneg %p56
        %p222 = pneg %p53
        %p223 = pneg %p77
        %p224 = pneg %p74
        %p225 = pneg %p98
        %p226 = pneg %p95
        %p227 = pneg %p126
        %p228 = pneg %p123
        %s229 = sand.u32 %s113, 1
        %s230 = scalar_lea.sflag [#allocation4], %s229
        %s231 = sand.u32 %s113, 1
        %s232 = smul.addr %s231, 64
        %s233 = scalar_lea.vmem [#allocation8], %s232
        %s234 = smul.u32 2, %s26
        %s235 = smul.u32 2, %s26
        %v236 = vld [vmem:[%s203] sm:$0xff]
        %v237 = vld [vmem:[%s203 + $0x8] sm:$0xff]
        %v238 = vld [vmem:[#allocation5] sm:$0xff]
        %v239 = vld [vmem:[#allocation5 + $0x8] sm:$0xff]
        %v240 = vld [vmem:[#allocation5 + $0x10] sm:$0xff]
        %v241 = vld [vmem:[#allocation5 + $0x18] sm:$0xff]
        %v242 = vld [vmem:[#allocation7] sm:$0x1]
        %v244 = vlaneseq
        %v245 = vshrl.u32 %v244, 7
        %v246 = vsub.s32 0, %v245
        %v247 = vrot.slane %v242, %v246
        %vm249 = vcmask 261120
        %v251 = vsel %vm249, %v236, 0
        %v254 = vsel %vm249, %v237, 0
        %256 = vmatprep.subr.mxu0 0.0
        %257 = vmatpush1.msra.mxu0 %v238
        %258 = vmatprep.subr.mxu0 0.0
        %259 = vmatpush1.msra.mxu0 %v239
        %260 = vmatprep.subr.mxu0 0.0
        %261 = vmatpush1.msra.mxu0 %v240
        %262 = vmatprep.subr.mxu0 0.0
        %263 = vmatpush1.msra.mxu0 %v241
        %264 = vmatprep.subr.mxu0 0.0
        %265 = vmatpush1.msra.mxu0 0.0
        %266 = vmatprep.subr.mxu0 0.0
        %267 = vmatpush1.msra.mxu0 0.0
        %268 = vmatprep.subr.mxu0 0.0
        %269 = vmatpush1.msra.mxu0 0.0
        %270 = vmatprep.subr.mxu0 0.0
        %271 = vmatpush1.msra.mxu0 0.0
        %272 = vmatprep.subr.mxu0 0.0
        %273 = vmatpush1.msra.mxu0 0.0
        %274 = vmatprep.subr.mxu0 0.0
        %275 = vmatpush1.msra.mxu0 0.0
        %276 = vmatprep.subr.mxu0 0.0
        %277 = vmatpush1.msra.mxu0 0.0
        %278 = vmatprep.subr.mxu0 0.0
        %279 = vmatpush1.msra.mxu0 0.0
        %280 = vmatprep.subr.mxu0 0.0
        %281 = vmatpush1.msra.mxu0 0.0
        %282 = vmatprep.subr.mxu0 0.0
        %283 = vmatpush1.msra.mxu0 0.0
        %284 = vmatprep.subr.mxu0 0.0
        %285 = vmatpush1.msra.mxu0 0.0
        %286 = vmatprep.subr.mxu0 0.0
        %287 = vmatpush1.msra.mxu0 0.0
        %288 = vmatprep.subr.mxu0 0.0
        %289 = vmatpush1.msra.mxu0 0.0
        %290 = vmatprep.subr.mxu0 0.0
        %291 = vmatpush1.msra.mxu0 0.0
        %292 = vmatprep.subr.mxu0 0.0
        %293 = vmatpush1.msra.mxu0 0.0
        %294 = vmatprep.subr.mxu0 0.0
        %295 = vmatpush1.msra.mxu0 0.0
        %296 = vmatprep.subr.mxu0 0.0
        %297 = vmatpush1.msra.mxu0 0.0
        %298 = vmatprep.subr.mxu0 0.0
        %299 = vmatpush1.msra.mxu0 0.0
        %300 = vmatprep.subr.mxu0 0.0
        %301 = vmatpush1.msra.mxu0 0.0
        %302 = vmatprep.subr.mxu0 0.0
        %303 = vmatpush1.msra.mxu0 0.0
        %304 = vmatprep.subr.mxu0 0.0
        %305 = vmatpush1.msra.mxu0 0.0
        %306 = vmatprep.subr.mxu0 0.0
        %307 = vmatpush1.msra.mxu0 0.0
        %308 = vmatprep.subr.mxu0 0.0
        %309 = vmatpush1.msra.mxu0 0.0
        %310 = vmatprep.subr.mxu0 0.0
        %311 = vmatpush1.msra.mxu0 0.0
        %312 = vmatprep.subr.mxu0 0.0
        %313 = vmatpush1.msra.mxu0 0.0
        %314 = vmatprep.subr.mxu0 0.0
        %315 = vmatpush1.msra.mxu0 0.0
        %316 = vmatprep.subr.mxu0 0.0
        %317 = vmatpush1.msra.mxu0 0.0
        %318 = vmatprep.subr.mxu0 0.0
        %319 = vmatpush1.msra.mxu0 0.0
        %320 = vmatprep.mubr.f32.mxu0 0.0
        %321 = vmatmul.mubr.f32.gmra.mrb[0].mxu0 %v251
        %v322 = vpop.f32.mrb[0].mxu0
        %v323 = vadd.f32 %v247, %v322
        %v324 = vpop.f32.mrb[0].mxu0
        %325 = vmatprep.mubr.f32.mxu0 0.0
        %326 = vmatmul.mubr.f32.gmra.mrb[0].mxu0 %v254
        %v327 = vpop.f32.mrb[0].mxu0
        %v328 = vadd.f32 %v247, %v327
        %v329 = vpop.f32.mrb[0].mxu0
        %330 = vdwg.mxu0
        %v331 = vmul.f32 %v323, 0.35355338
        %v332 = vmul.f32 %v328, 0.35355338
        %vm333 = vcmask 64512
        %334 = vst.msk [vmem:[%s233] sm:$0xff] %vm333, %v331
        %335 = vst.msk [vmem:[%s233 + $0x8] sm:$0xff] %vm333, %v332
        %338 = vrot.lane.b32.xlu0 %v331, 120
        %v339 = vpop.permute.xlu0 %338
        %340 = vrot.lane.b32.xlu0 %v332, 120
        %v341 = vpop.permute.xlu0 %340
        %s344 = scalar_lea.vmem %s233, 16 [#allocation8]
        %345 = vst.msk [vmem:[%s344] sm:$0xff] %vm333, %v339
        %346 = vst.msk [vmem:[%s344 + $0x8] sm:$0xff] %vm333, %v341
        %347 = vrot.lane.b32.xlu0 %v331, 112
        %v348 = vpop.permute.xlu0 %347
        %349 = vrot.lane.b32.xlu0 %v332, 112
        %v350 = vpop.permute.xlu0 %349
        %s353 = scalar_lea.vmem %s233, 32 [#allocation8]
        %354 = vst.msk [vmem:[%s353] sm:$0xff] %vm333, %v348
        %355 = vst.msk [vmem:[%s353 + $0x8] sm:$0xff] %vm333, %v350
        %356 = vrot.lane.b32.xlu0 %v331, 104
        %v357 = vpop.permute.xlu0 %356
        %358 = vrot.lane.b32.xlu0 %v332, 104
        %v359 = vpop.permute.xlu0 %358
        %s362 = scalar_lea.vmem %s233, 48 [#allocation8]
        %363 = vst.msk [vmem:[%s362] sm:$0xff] %vm333, %v357
        %364 = vst.msk [vmem:[%s362 + $0x8] sm:$0xff] %vm333, %v359
        %s365 = sand.u32 %s113, 1
        %s366 = scalar_lea.sflag [#allocation4], %s365
        %s367 = sand.u32 %s113, 1
        %s368 = smul.addr %s367, 64
        %s369 = scalar_lea.vmem [#allocation8], %s368
        // Predicated region
        $region45: #{attention_forward.5} parent=31 // pred_check
          %p370 = pneg %p123
        $region46: #{attention_forward.5} parent=31 // pred_check_branch
          %372 = sbr.rel (%p370) target = $region48
        $region47: #{attention_forward.5} parent=31 // pred_region
          %s373 = smul.u32 2, %s26
          %s375 = ssub.s32 1024, 1024
          %376 = vsyncadd %s366, %s375
          %s377 = smul.addr %s25, 8
          %s378 = sadd.s32 %s373, %s377
          %s379 = smul.addr %s378, 128
          %s380 = scalar_lea.hbm %s3, %s379
          %s381 = sshll.u32 %s369, 4
          %s382 = int_to_ptr.vmem [resolvable:$true] %s381
          %387 = dma.vmem_to_hbm [thread:$0]  %s382, 1024, %s380, %s366, 128, 128, 8
        $region48: #{attention_forward.5} parent=31 // pred_fallthru
          _
      $region32: #{attention_forward.5} parent=5 // pred_fallthru
        _
      %p388 = scmp.le.s32.totalorder 2, %s16
      // Predicated region
      $region49: #{attention_forward.5} parent=5 // pred_check
        %p389 = pneg %p388
      $region50: #{attention_forward.5} parent=5 // pred_check_branch
        %391 = sbr.rel (%p389) target = $region52
      $region51: #{attention_forward.5} parent=5 // pred_region
        %s392 = ssub.s32 %s16, 2
        // Predicated region
        $region53: #{attention_forward.5} parent=51 // pred_check
          %p393 = pneg %p129
        $region54: #{attention_forward.5} parent=51 // pred_check_branch
          %395 = sbr.rel (%p393) target = $region56
        $region55: #{attention_forward.5} parent=51 // pred_region
          %s396 = sand.u32 %s114, 1
          %s397 = scalar_lea.sflag [#allocation4], %s396
          %s398 = sand.u32 %s114, 1
          %s399 = smul.addr %s398, 64
          %s400 = scalar_lea.vmem [#allocation8], %s399
          %401 = dma.done %s397, 1024
        $region56: #{attention_forward.5} parent=51 // pred_fallthru
          _
      $region52: #{attention_forward.5} parent=5 // pred_fallthru
        _
    $region6: #{attention_forward.5} parent=1 // loop_footer
      %s20 = sadd.s32 1, %s16
    $region7: #{attention_forward.5} parent=1 // loop_footer_branch
      %15 = sbr.rel target = $region3
    $region8: #{attention_forward.5} parent=1 // loop_exit
      _
    %402 = vsyncpa [#allocation3], 1
    %s403 = scalar_lea.sflag [#allocation3], 1
    %404 = vsyncpa %s403, 1
    %405 = vsyncpa [#allocation6], 1
    %406 = vsyncpa [#allocation4], 1
    %s407 = scalar_lea.sflag [#allocation4], 1
    %408 = vsyncpa %s407, 1

// kernel: attention_forward.9
$region0: #{attention_forward.9}
  #allocation0 [shape = 'u32[]', space=smem, size = 0x4, offset = 0x4, fixed_abs, tag = 'smem constant byte address 0x4 - core index']
  #allocation1 [shape = 'u32[144,128]{1,0:T(1,128)}', space=vmem, size = 0x12000, scoped, tag = 'internal scratch']
  %s0 = inlined_call_operand.hbm [shape: f32[32,32], index: 0, kind: input, shape index: {}]
  %s1 = inlined_call_operand.hbm [shape: f32[32,32], index: 1, kind: input, shape index: {}]
  %s2 = inlined_call_operand.hbm [shape: f32[1,32], index: 2, kind: input, shape index: {}]
  %s3 = inlined_call_operand.hbm [shape: f32[32,32], index: 3, kind: output, shape index: {}]
  %s4 = sld [smem:[#allocation0]]
  $region34: #{attention_forward.9} parent=0
    _
  %s6 = ssub.s32 1, %s4
  %s7 = scalar_select 0, %s6, %s4
  $region1: #{attention_forward.9} parent=0
    #allocation2 [shape = 'u8[16384]{0}', space=vmem, size = 0x4000, scoped, tag = 'input window, operand 0, single buffered']
    #allocation3 [shape = 's32[1]{0}', space=sflag, size = 0x4, scoped, tag = 'scoped memory for attention_forward.9']
    #allocation4 [shape = 's32[1]{0}', space=sflag, size = 0x4, scoped, tag = 'scoped memory for attention_forward.9']
    #allocation5 [shape = 'u8[16384]{0}', space=vmem, size = 0x4000, scoped, tag = 'input window, operand 1, single buffered']
    #allocation6 [shape = 's32[1]{0}', space=sflag, size = 0x4, scoped, tag = 'scoped memory for attention_forward.9']
    #allocation7 [shape = 'u8[512]{0}', space=vmem, size = 0x400, scoped, tag = 'input window, operand 2, single buffered']
    #allocation8 [shape = 'u8[16384]{0}', space=vmem, size = 0x4000, scoped, tag = 'output window, operand 0, single buffered']
    %8 = vsyncpa [#allocation3], 0
    %9 = vsyncpa [#allocation6], 0
    %10 = vsyncpa [#allocation4], 0
    // Predicated region
    $region2: #{attention_forward.9} parent=1 // pred_check
      _
    $region3: #{attention_forward.9} parent=1 // pred_check_branch
      %12 = sbr.rel (0) target = $region5
    $region4: #{attention_forward.9} parent=1 // pred_region
      %s14 = ssub.s32 512, 512
      %15 = vsyncadd [#allocation3], %s14
      %s16 = sshll.u32 [#allocation2], 4
      %s17 = int_to_ptr.vmem [resolvable:$true] %s16
      %22 = dma.hbm_to_vmem [thread:$0]  %s0, 512, %s17, [#allocation3], 128, 128, 8
    $region5: #{attention_forward.9} parent=1 // pred_fallthru
      _
    // Predicated region
    $region6: #{attention_forward.9} parent=1 // pred_check
      _
    $region7: #{attention_forward.9} parent=1 // pred_check_branch
      %24 = sbr.rel (0) target = $region9
    $region8: #{attention_forward.9} parent=1 // pred_region
      %s26 = ssub.s32 512, 512
      %27 = vsyncadd [#allocation6], %s26
      %s28 = sshll.u32 [#allocation5], 4
      %s29 = int_to_ptr.vmem [resolvable:$true] %s28
      %34 = dma.hbm_to_vmem [thread:$0]  %s1, 512, %s29, [#allocation6], 128, 128, 8
    $region9: #{attention_forward.9} parent=1 // pred_fallthru
      _
    // Predicated region
    $region10: #{attention_forward.9} parent=1 // pred_check
      _
    $region11: #{attention_forward.9} parent=1 // pred_check_branch
      %36 = sbr.rel (0) target = $region13
    $region12: #{attention_forward.9} parent=1 // pred_region
      %s38 = ssub.s32 16, 16
      %39 = vsyncadd [#allocation6], %s38
      %s41 = sshll.u32 [#allocation7], 4
      %s42 = int_to_ptr.vmem [resolvable:$true] %s41
      %44 = dma.hbm_to_vmem [thread:$0]  %s2, 16, %s42, [#allocation6]
    $region13: #{attention_forward.9} parent=1 // pred_fallthru
      _
    // Predicated region
    $region14: #{attention_forward.9} parent=1 // pred_check
      _
    $region15: #{attention_forward.9} parent=1 // pred_check_branch
      %46 = sbr.rel (0) target = $region17
    $region16: #{attention_forward.9} parent=1 // pred_region
      %47 = dma.done [#allocation3], 512
    $region17: #{attention_forward.9} parent=1 // pred_fallthru
      _
    // Predicated region
    $region18: #{attention_forward.9} parent=1 // pred_check
      _
    $region19: #{attention_forward.9} parent=1 // pred_check_branch
      %49 = sbr.rel (0) target = $region21
    $region20: #{attention_forward.9} parent=1 // pred_region
      %50 = dma.done [#allocation6], 512
    $region21: #{attention_forward.9} parent=1 // pred_fallthru
      _
    // Predicated region
    $region22: #{attention_forward.9} parent=1 // pred_check
      _
    $region23: #{attention_forward.9} parent=1 // pred_check_branch
      %52 = sbr.rel (0) target = $region25
    $region24: #{attention_forward.9} parent=1 // pred_region
      %53 = dma.done [#allocation6], 16
    $region25: #{attention_forward.9} parent=1 // pred_fallthru
      _
    %v54 = vld [vmem:[#allocation2] sm:$0xff]
    %v55 = vld [vmem:[#allocation2 + $0x8] sm:$0xff]
    %v56 = vld [vmem:[#allocation2 + $0x10] sm:$0xff]
    %v57 = vld [vmem:[#allocation2 + $0x18] sm:$0xff]
    %v58 = vld [vmem:[#allocation5] sm:$0xff]
    %v59 = vld [vmem:[#allocation5 + $0x8] sm:$0xff]
    %v60 = vld [vmem:[#allocation5 + $0x10] sm:$0xff]
    %v61 = vld [vmem:[#allocation5 + $0x18] sm:$0xff]
    %v62 = vld [vmem:[#allocation7] sm:$0x1]
    %v64 = vlaneseq
    %v65 = vshrl.u32 %v64, 7
    %v66 = vsub.s32 0, %v65
    %v67 = vrot.slane %v62, %v66
    %vm69 = vcmask 261120
    %v71 = vsel %vm69, %v54, 0
    %v74 = vsel %vm69, %v55, 0
    %v77 = vsel %vm69, %v56, 0
    %v80 = vsel %vm69, %v57, 0
    %82 = vmatprep.subr.mxu0 0.0
    %83 = vmatpush1.msra.mxu0 %v58
    %84 = vmatprep.subr.mxu0 0.0
    %85 = vmatpush1.msra.mxu0 %v59
    %86 = vmatprep.subr.mxu0 0.0
    %87 = vmatpush1.msra.mxu0 %v60
    %88 = vmatprep.subr.mxu0 0.0
    %89 = vmatpush1.msra.mxu0 %v61
    %90 = vmatprep.subr.mxu0 0.0
    %91 = vmatpush1.msra.mxu0 0.0
    %92 = vmatprep.subr.mxu0 0.0
    %93 = vmatpush1.msra.mxu0 0.0
    %94 = vmatprep.subr.mxu0 0.0
    %95 = vmatpush1.msra.mxu0 0.0
    %96 = vmatprep.subr.mxu0 0.0
    %97 = vmatpush1.msra.mxu0 0.0
    %98 = vmatprep.subr.mxu0 0.0
    %99 = vmatpush1.msra.mxu0 0.0
    %100 = vmatprep.subr.mxu0 0.0
    %101 = vmatpush1.msra.mxu0 0.0
    %102 = vmatprep.subr.mxu0 0.0
    %103 = vmatpush1.msra.mxu0 0.0
    %104 = vmatprep.subr.mxu0 0.0
    %105 = vmatpush1.msra.mxu0 0.0
    %106 = vmatprep.subr.mxu0 0.0
    %107 = vmatpush1.msra.mxu0 0.0
    %108 = vmatprep.subr.mxu0 0.0
    %109 = vmatpush1.msra.mxu0 0.0
    %110 = vmatprep.subr.mxu0 0.0
    %111 = vmatpush1.msra.mxu0 0.0
    %112 = vmatprep.subr.mxu0 0.0
    %113 = vmatpush1.msra.mxu0 0.0
    %114 = vmatprep.subr.mxu0 0.0
    %115 = vmatpush1.msra.mxu0 0.0
    %116 = vmatprep.subr.mxu0 0.0
    %117 = vmatpush1.msra.mxu0 0.0
    %118 = vmatprep.subr.mxu0 0.0
    %119 = vmatpush1.msra.mxu0 0.0
    %120 = vmatprep.subr.mxu0 0.0
    %121 = vmatpush1.msra.mxu0 0.0
    %122 = vmatprep.subr.mxu0 0.0
    %123 = vmatpush1.msra.mxu0 0.0
    %124 = vmatprep.subr.mxu0 0.0
    %125 = vmatpush1.msra.mxu0 0.0
    %126 = vmatprep.subr.mxu0 0.0
    %127 = vmatpush1.msra.mxu0 0.0
    %128 = vmatprep.subr.mxu0 0.0
    %129 = vmatpush1.msra.mxu0 0.0
    %130 = vmatprep.subr.mxu0 0.0
    %131 = vmatpush1.msra.mxu0 0.0
    %132 = vmatprep.subr.mxu0 0.0
    %133 = vmatpush1.msra.mxu0 0.0
    %134 = vmatprep.subr.mxu0 0.0
    %135 = vmatpush1.msra.mxu0 0.0
    %136 = vmatprep.subr.mxu0 0.0
    %137 = vmatpush1.msra.mxu0 0.0
    %138 = vmatprep.subr.mxu0 0.0
    %139 = vmatpush1.msra.mxu0 0.0
    %140 = vmatprep.subr.mxu0 0.0
    %141 = vmatpush1.msra.mxu0 0.0
    %142 = vmatprep.subr.mxu0 0.0
    %143 = vmatpush1.msra.mxu0 0.0
    %144 = vmatprep.subr.mxu0 0.0
    %145 = vmatpush1.msra.mxu0 0.0
    %146 = vmatprep.mubr.f32.mxu0 0.0
    %147 = vmatmul.mubr.f32.gmra.mrb[0].mxu0 %v71
    %v148 = vpop.f32.mrb[0].mxu0
    %v149 = vadd.f32 %v67, %v148
    %v150 = vpop.f32.mrb[0].mxu0
    %151 = vmatprep.mubr.f32.mxu0 0.0
    %152 = vmatmul.mubr.f32.gmra.mrb[0].mxu0 %v74
    %v153 = vpop.f32.mrb[0].mxu0
    %v154 = vadd.f32 %v67, %v153
    %v155 = vpop.f32.mrb[0].mxu0
    %156 = vmatprep.mubr.f32.mxu0 0.0
    %157 = vmatmul.mubr.f32.gmra.mrb[0].mxu0 %v77
    %v158 = vpop.f32.mrb[0].mxu0
    %v159 = vadd.f32 %v67, %v158
    %v160 = vpop.f32.mrb[0].mxu0
    %161 = vmatprep.mubr.f32.mxu0 0.0
    %162 = vmatmul.mubr.f32.gmra.mrb[0].mxu0 %v80
    %v163 = vpop.f32.mrb[0].mxu0
    %v164 = vadd.f32 %v67, %v163
    %v165 = vpop.f32.mrb[0].mxu0
    %166 = vdwg.mxu0
    %167 = vst.msk [vmem:[#allocation8] sm:$0xff] %vm69, %v149
    %168 = vst.msk [vmem:[#allocation8 + $0x8] sm:$0xff] %vm69, %v154
    %169 = vst.msk [vmem:[#allocation8 + $0x10] sm:$0xff] %vm69, %v159
    %170 = vst.msk [vmem:[#allocation8 + $0x18] sm:$0xff] %vm69, %v164
    // Predicated region
    $region26: #{attention_forward.9} parent=1 // pred_check
      _
    $region27: #{attention_forward.9} parent=1 // pred_check_branch
      %172 = sbr.rel (0) target = $region29
    $region28: #{attention_forward.9} parent=1 // pred_region
      %s174 = ssub.s32 512, 512
      %175 = vsyncadd [#allocation4], %s174
      %s176 = sshll.u32 [#allocation8], 4
      %s177 = int_to_ptr.vmem [resolvable:$true] %s176
      %182 = dma.vmem_to_hbm [thread:$0]  %s177, 512, %s3, [#allocation4], 128, 128, 8
    $region29: #{attention_forward.9} parent=1 // pred_fallthru
      _
    // Predicated region
    $region30: #{attention_forward.9} parent=1 // pred_check
      _
    $region31: #{attention_forward.9} parent=1 // pred_check_branch
      %184 = sbr.rel (0) target = $region33
    $region32: #{attention_forward.9} parent=1 // pred_region
      %185 = dma.done [#allocation4], 512
    $region33: #{attention_forward.9} parent=1 // pred_fallthru
      _
    %186 = vsyncpa [#allocation3], 1
    %187 = vsyncpa [#allocation6], 1
    %188 = vsyncpa [#allocation4], 1

// kernel: attention_forward.8
$region0: #{attention_forward.8}
  #allocation0 [shape = 'u32[]', space=smem, size = 0x4, offset = 0x4, fixed_abs, tag = 'smem constant byte address 0x4 - core index']
  #allocation1 [shape = 'u32[144,128]{1,0:T(1,128)}', space=vmem, size = 0x12000, scoped, tag = 'internal scratch']
  #allocation2 [shape = 'f32[4,16,1]{2,1,0:T(8,128)}', space=vmem, size = 0x8000, scoped, tag = 'scratch operand']
  #allocation3 [shape = 'f32[4,16,1]{2,1,0:T(8,128)}', space=vmem, size = 0x8000, scoped, tag = 'scratch operand']
  #allocation4 [shape = 'f32[4,16,8]{2,1,0:T(8,128)}', space=vmem, size = 0x8000, scoped, tag = 'scratch operand']
  %s0 = inlined_call_operand.hbm [shape: f32[2,4,16,8], index: 0, kind: input, shape index: {}]
  %s1 = inlined_call_operand.hbm [shape: f32[2,4,8,16], index: 1, kind: input, shape index: {}]
  %s2 = inlined_call_operand.hbm [shape: f32[2,4,16,8], index: 2, kind: input, shape index: {}]
  %s3 = inlined_call_operand.hbm [shape: f32[2,16,32], index: 3, kind: output, shape index: {}]
  %s4 = sld [smem:[#allocation0]]
  $region65: #{attention_forward.8} parent=0
    _
  %s6 = ssub.s32 1, %s4
  %s7 = scalar_select 0, %s6, %s4
  $region1: #{attention_forward.8} parent=0
    #allocation5 [shape = 'u8[65536]{0}', space=vmem, size = 0x10000, scoped, tag = 'input window, operand 0']
    #allocation6 [shape = 's32[2]{0}', space=sflag, size = 0x8, scoped, tag = 'scoped memory for attention_forward.8']
    #allocation7 [shape = 's32[2]{0}', space=sflag, size = 0x8, scoped, tag = 'scoped memory for attention_forward.8']
    #allocation8 [shape = 'u8[32768]{0}', space=vmem, size = 0x8000, scoped, tag = 'input window, operand 1']
    #allocation9 [shape = 's32[2]{0}', space=sflag, size = 0x8, scoped, tag = 'scoped memory for attention_forward.8']
    #allocation10 [shape = 'u8[65536]{0}', space=vmem, size = 0x10000, scoped, tag = 'input window, operand 2']
    #allocation11 [shape = 'u8[16384]{0}', space=vmem, size = 0x4000, scoped, tag = 'output window, operand 0']
    %8 = vsyncpa [#allocation6], 0
    %s9 = scalar_lea.sflag [#allocation6], 1
    %10 = vsyncpa %s9, 0
    %11 = vsyncpa [#allocation9], 0
    %s12 = scalar_lea.sflag [#allocation9], 1
    %13 = vsyncpa %s12, 0
    %14 = vsyncpa [#allocation7], 0
    %s15 = scalar_lea.sflag [#allocation7], 1
    %16 = vsyncpa %s15, 0
    loop: start=0, step=1, limit=4
    $region2: #{attention_forward.8} parent=1 // loop_pre_header
      _
    $region3: #{attention_forward.8} parent=1 // loop_header
      %s18 = sphi 0, %s22
      %p19 = scmp.ge.s32.totalorder %s18, 4
      %s25 = sphi 0, %s44
      %s26 = sphi 0, %s40
      %s27 = sphi 0, %s36
      %s28 = sphi 0, %s25
      %s29 = sphi 0, %s26
      %s30 = sphi 0, %s27
      %s31 = sphi 0, %s28
      %s32 = sphi 0, %s29
      %s33 = sphi 0, %s30
      %s49 = sphi 0, %s51
      %s52 = sphi 0, %s49
      %s53 = sphi 0, %s52
      %s69 = sphi 0, %s53
      %s77 = sphi 0, %s79
      %s80 = sphi 0, %s77
      %s81 = sphi 0, %s80
      %s97 = sphi 0, %s81
      %s105 = sphi 0, %s107
      %s108 = sphi 0, %s105
      %s109 = sphi 0, %s108
      %s125 = sphi 0, %s109
      %s133 = sphi 0, %s135
      %s136 = sphi 0, %s133
      %s137 = sphi 0, %s136
      %s153 = sphi 0, %s137
    $region4: #{attention_forward.8} parent=1 // loop_header_branch
      %21 = sbr.rel (%p19) target = $region8
    $region5: #{attention_forward.8} parent=1 // loop_body
      %s23 = ssub.s32 %s18, 1
      %s24 = ssub.s32 %s18, 2
      %s34 = sadd.s32 1, %s27
      %p35 = scmp.ge.s32.totalorder %s34, 1
      %s36 = scalar_select %p35, 0, %s34
      %s37 = sadd.s32 1, %s26
      %s38 = scalar_select %p35, %s37, %s26
      %p39 = scmp.ge.s32.totalorder %s38, 1
      %s40 = scalar_select %p39, 0, %s38
      %s41 = sadd.s32 1, %s25
      %s42 = scalar_select %p39, %s41, %s25
      %p43 = scmp.ge.s32.totalorder %s42, 2
      %s44 = scalar_select %p43, 0, %s42
      %s45 = ssub.s32 %s25, %s44
      %s46 = ssub.s32 %s26, %s40
      %s47 = sor.u32 %s45, %s46
      %p48 = scmp.eq.s32.totalorder %s47, 0
      %s50 = sadd.s32 %s49, 1
      %s51 = scalar_select %p48, %s49, %s50
      %p54 = pneg %p48
      %p55 = scmp.eq.s32.totalorder %s18, 1
      %p56 = por %p54, %p55
      %p57 = scmp.ne.s32.totalorder %s49, %s52
      %p58 = scmp.eq.s32.totalorder %s18, 0
      %p59 = por %p57, %p58
      %p60 = scmp.ne.s32.totalorder %s49, %s52
      %p61 = scmp.eq.s32.totalorder %s23, 1
      %p62 = por %p60, %p61
      %p63 = scmp.ne.s32.totalorder %s52, %s53
      %p64 = scmp.eq.s32.totalorder %s23, 0
      %p65 = por %p63, %p64
      %p66 = scmp.ne.s32.totalorder %s52, %s53
      %p67 = scmp.eq.s32.totalorder %s24, 1
      %p68 = por %p66, %p67
      %p70 = scmp.ne.s32.totalorder %s53, %s69
      %p71 = scmp.eq.s32.totalorder %s24, 0
      %p72 = por %p70, %p71
      %s73 = ssub.s32 %s25, %s44
      %s74 = ssub.s32 %s27, %s36
      %s75 = sor.u32 %s73, %s74
      %p76 = scmp.eq.s32.totalorder %s75, 0
      %s78 = sadd.s32 %s77, 1
      %s79 = scalar_select %p76, %s77, %s78
      %p82 = pneg %p76
      %p83 = scmp.eq.s32.totalorder %s18, 1
      %p84 = por %p82, %p83
      %p85 = scmp.ne.s32.totalorder %s77, %s80
      %p86 = scmp.eq.s32.totalorder %s18, 0
      %p87 = por %p85, %p86
      %p88 = scmp.ne.s32.totalorder %s77, %s80
      %p89 = scmp.eq.s32.totalorder %s23, 1
      %p90 = por %p88, %p89
      %p91 = scmp.ne.s32.totalorder %s80, %s81
      %p92 = scmp.eq.s32.totalorder %s23, 0
      %p93 = por %p91, %p92
      %p94 = scmp.ne.s32.totalorder %s80, %s81
      %p95 = scmp.eq.s32.totalorder %s24, 1
      %p96 = por %p94, %p95
      %p98 = scmp.ne.s32.totalorder %s81, %s97
      %p99 = scmp.eq.s32.totalorder %s24, 0
      %p100 = por %p98, %p99
      %s101 = ssub.s32 %s25, %s44
      %s102 = ssub.s32 %s27, %s36
      %s103 = sor.u32 %s101, %s102
      %p104 = scmp.eq.s32.totalorder %s103, 0
      %s106 = sadd.s32 %s105, 1
      %s107 = scalar_select %p104, %s105, %s106
      %p110 = pneg %p104
      %p111 = scmp.eq.s32.totalorder %s18, 1
      %p112 = por %p110, %p111
      %p113 = scmp.ne.s32.totalorder %s105, %s108
      %p114 = scmp.eq.s32.totalorder %s18, 0
      %p115 = por %p113, %p114
      %p116 = scmp.ne.s32.totalorder %s105, %s108
      %p117 = scmp.eq.s32.totalorder %s23, 1
      %p118 = por %p116, %p117
      %p119 = scmp.ne.s32.totalorder %s108, %s109
      %p120 = scmp.eq.s32.totalorder %s23, 0
      %p121 = por %p119, %p120
      %p122 = scmp.ne.s32.totalorder %s108, %s109
      %p123 = scmp.eq.s32.totalorder %s24, 1
      %p124 = por %p122, %p123
      %p126 = scmp.ne.s32.totalorder %s109, %s125
      %p127 = scmp.eq.s32.totalorder %s24, 0
      %p128 = por %p126, %p127
      %s129 = ssub.s32 %s25, %s44
      %s130 = ssub.s32 %s26, %s40
      %s131 = sor.u32 %s129, %s130
      %p132 = scmp.eq.s32.totalorder %s131, 0
      %s134 = sadd.s32 %s133, 1
      %s135 = scalar_select %p132, %s133, %s134
      %p138 = pneg %p132
      %p139 = scmp.eq.s32.totalorder %s18, 1
      %p140 = por %p138, %p139
      %p141 = scmp.ne.s32.totalorder %s133, %s136
      %p142 = scmp.eq.s32.totalorder %s18, 0
      %p143 = por %p141, %p142
      %p144 = scmp.ne.s32.totalorder %s133, %s136
      %p145 = scmp.eq.s32.totalorder %s23, 1
      %p146 = por %p144, %p145
      %p147 = scmp.ne.s32.totalorder %s136, %s137
      %p148 = scmp.eq.s32.totalorder %s23, 0
      %p149 = por %p147, %p148
      %p150 = scmp.ne.s32.totalorder %s136, %s137
      %p151 = scmp.eq.s32.totalorder %s24, 1
      %p152 = por %p150, %p151
      %p154 = scmp.ne.s32.totalorder %s137, %s153
      %p155 = scmp.eq.s32.totalorder %s24, 0
      %p156 = por %p154, %p155
      %p157 = scmp.le.s32.totalorder 1, %s18
      %p158 = scmp.lt.s32.totalorder %s18, 3
      %p159 = pnand %p157, %p158
      %p160 = pneg %p159
      // Predicated region
      $region9: #{attention_forward.8} parent=5 // pred_check
        _
      $region10: #{attention_forward.8} parent=5 // pred_check_branch
        %162 = sbr.rel (%p159) target = $region12
      $region11: #{attention_forward.8} parent=5 // pred_region
        %s163 = ssub.s32 %s18, 1
      $region12: #{attention_forward.8} parent=5 // pred_fallthru
        _
      %p164 = scmp.lt.s32.totalorder %s18, 2
      // Predicated region
      $region13: #{attention_forward.8} parent=5 // pred_check
        %p165 = pneg %p164
      $region14: #{attention_forward.8} parent=5 // pred_check_branch
        %167 = sbr.rel (%p165) target = $region16
      $region15: #{attention_forward.8} parent=5 // pred_region
        // Predicated region
        $region17: #{attention_forward.8} parent=15 // pred_check
          %p168 = pneg %p59
        $region18: #{attention_forward.8} parent=15 // pred_check_branch
          %170 = sbr.rel (%p168) target = $region20
        $region19: #{attention_forward.8} parent=15 // pred_region
          %s171 = sand.u32 %s49, 1
          %s172 = scalar_lea.sflag [#allocation6], %s171
          %s173 = sand.u32 %s49, 1
          %s174 = smul.addr %s173, 64
          %s175 = scalar_lea.vmem [#allocation5], %s174
          %s176 = smul.u32 2, %s26
          %s178 = ssub.s32 1024, 1024
          %179 = vsyncadd %s172, %s178
          %s180 = smul.addr %s25, 8
          %s181 = sadd.s32 %s176, %s180
          %s182 = smul.addr %s181, 128
          %s183 = scalar_lea.hbm %s0, %s182
          %s184 = sshll.u32 %s175, 4
          %s185 = int_to_ptr.vmem [resolvable:$true] %s184
          %190 = dma.hbm_to_vmem [thread:$0]  %s183, 1024, %s185, %s172, 128, 128, 8
        $region20: #{attention_forward.8} parent=15 // pred_fallthru
          _
        // Predicated region
        $region21: #{attention_forward.8} parent=15 // pred_check
          %p191 = pneg %p87
        $region22: #{attention_forward.8} parent=15 // pred_check_branch
          %193 = sbr.rel (%p191) target = $region24
        $region23: #{attention_forward.8} parent=15 // pred_region
          %s194 = sand.u32 %s18, 1
          %s195 = scalar_lea.sflag [#allocation9], %s194
          %s196 = sand.u32 %s77, 1
          %s197 = smul.addr %s196, 32
          %s198 = scalar_lea.vmem [#allocation8], %s197
          %s200 = ssub.s32 512, 512
          %201 = vsyncadd %s195, %s200
          %s202 = smul.addr %s25, 4
          %s203 = sadd.s32 %s27, %s202
          %s204 = smul.addr %s203, 128
          %s205 = scalar_lea.hbm %s1, %s204
          %s206 = sshll.u32 %s198, 4
          %s207 = int_to_ptr.vmem [resolvable:$true] %s206
          %212 = dma.hbm_to_vmem [thread:$0]  %s205, 512, %s207, %s195, 128, 128, 8
        $region24: #{attention_forward.8} parent=15 // pred_fallthru
          _
        // Predicated region
        $region25: #{attention_forward.8} parent=15 // pred_check
          %p213 = pneg %p115
        $region26: #{attention_forward.8} parent=15 // pred_check_branch
          %215 = sbr.rel (%p213) target = $region28
        $region27: #{attention_forward.8} parent=15 // pred_region
          %s216 = sand.u32 %s18, 1
          %s217 = scalar_lea.sflag [#allocation9], %s216
          %s218 = sand.u32 %s105, 1
          %s219 = smul.addr %s218, 64
          %s220 = scalar_lea.vmem [#allocation10], %s219
          %s221 = smul.u32 2, %s27
          %s223 = ssub.s32 1024, 1024
          %224 = vsyncadd %s217, %s223
          %s225 = smul.addr %s25, 8
          %s226 = sadd.s32 %s221, %s225
          %s227 = smul.addr %s226, 128
          %s228 = scalar_lea.hbm %s2, %s227
          %s229 = sshll.u32 %s220, 4
          %s230 = int_to_ptr.vmem [resolvable:$true] %s229
          %235 = dma.hbm_to_vmem [thread:$0]  %s228, 1024, %s230, %s217, 128, 128, 8
        $region28: #{attention_forward.8} parent=15 // pred_fallthru
          _
      $region16: #{attention_forward.8} parent=5 // pred_fallthru
        _
      %p236 = scmp.le.s32.totalorder 1, %s18
      %p237 = scmp.lt.s32.totalorder %s18, 3
      %p238 = pnand %p236, %p237
      %p239 = pneg %p238
      // Predicated region
      $region29: #{attention_forward.8} parent=5 // pred_check
        _
      $region30: #{attention_forward.8} parent=5 // pred_check_branch
        %241 = sbr.rel (%p238) target = $region32
      $region31: #{attention_forward.8} parent=5 // pred_region
        %s242 = ssub.s32 %s18, 1
        %s243 = sand.u32 %s52, 1
        %s244 = scalar_lea.sflag [#allocation6], %s243
        %s245 = sand.u32 %s52, 1
        %s246 = smul.addr %s245, 64
        %s247 = scalar_lea.vmem [#allocation5], %s246
        // Predicated region
        $region33: #{attention_forward.8} parent=31 // pred_check
          %p248 = pneg %p65
        $region34: #{attention_forward.8} parent=31 // pred_check_branch
          %250 = sbr.rel (%p248) target = $region36
        $region35: #{attention_forward.8} parent=31 // pred_region
          %251 = dma.done %s244, 1024
        $region36: #{attention_forward.8} parent=31 // pred_fallthru
          _
        %s252 = sand.u32 %s23, 1
        %s253 = scalar_lea.sflag [#allocation9], %s252
        %s254 = sand.u32 %s80, 1
        %s255 = smul.addr %s254, 32
        %s256 = scalar_lea.vmem [#allocation8], %s255
        // Predicated region
        $region37: #{attention_forward.8} parent=31 // pred_check
          %p257 = pneg %p93
        $region38: #{attention_forward.8} parent=31 // pred_check_branch
          %259 = sbr.rel (%p257) target = $region40
        $region39: #{attention_forward.8} parent=31 // pred_region
          %260 = dma.done %s253, 512
        $region40: #{attention_forward.8} parent=31 // pred_fallthru
          _
        %s261 = sand.u32 %s23, 1
        %s262 = scalar_lea.sflag [#allocation9], %s261
        %s263 = sand.u32 %s108, 1
        %s264 = smul.addr %s263, 64
        %s265 = scalar_lea.vmem [#allocation10], %s264
        // Predicated region
        $region41: #{attention_forward.8} parent=31 // pred_check
          %p266 = pneg %p121
        $region42: #{attention_forward.8} parent=31 // pred_check_branch
          %268 = sbr.rel (%p266) target = $region44
        $region43: #{attention_forward.8} parent=31 // pred_region
          %269 = dma.done %s262, 1024
        $region44: #{attention_forward.8} parent=31 // pred_fallthru
          _
        %s270 = sand.u32 %s52, 1
        %s271 = scalar_lea.sflag [#allocation6], %s270
        %s272 = sand.u32 %s52, 1
        %s273 = smul.addr %s272, 64
        %s274 = scalar_lea.vmem [#allocation5], %s273
        %p275 = pneg %p65
        %p276 = pneg %p62
        %s277 = sand.u32 %s23, 1
        %s278 = scalar_lea.sflag [#allocation9], %s277
        %s279 = sand.u32 %s80, 1
        %s280 = smul.addr %s279, 32
        %s281 = scalar_lea.vmem [#allocation8], %s280
        %p282 = pneg %p93
        %p283 = pneg %p90
        %s284 = sand.u32 %s23, 1
        %s285 = scalar_lea.sflag [#allocation9], %s284
        %s286 = sand.u32 %s108, 1
        %s287 = smul.addr %s286, 64
        %s288 = scalar_lea.vmem [#allocation10], %s287
        %p289 = pneg %p121
        %p290 = pneg %p118
        %p291 = pneg %p149
        %p292 = pneg %p146
        %s293 = sand.u32 %s136, 1
        %s294 = scalar_lea.sflag [#allocation7], %s293
        %s295 = sand.u32 %s136, 1
        %s296 = smul.addr %s295, 16
        %s297 = scalar_lea.vmem [#allocation11], %s296
        %s298 = smul.u32 2, %s29
        %s299 = smul.u32 2, %s30
        %s300 = smul.u32 2, %s29
        %p301 = scmp.eq.s32.totalorder %s30, 0
        // Predicated region
        $region45: #{attention_forward.8} parent=31 // pred_check
          %p302 = pneg %p301
        $region46: #{attention_forward.8} parent=31 // pred_check_branch
          %304 = sbr.rel (%p302) target = $region48
        $region47: #{attention_forward.8} parent=31 // pred_region
          %vm305 = vcmask 7168
          %306 = vst.msk [vmem:[#allocation2] sm:$0xff] %vm305, -inf
          %307 = vst.msk [vmem:[#allocation2 + $0x8] sm:$0xff] %vm305, -inf
          %308 = vst.msk [vmem:[#allocation2 + $0x10] sm:$0xff] %vm305, -inf
          %309 = vst.msk [vmem:[#allocation2 + $0x18] sm:$0xff] %vm305, -inf
          %310 = vst.msk [vmem:[#allocation2 + $0x20] sm:$0xff] %vm305, -inf
          %311 = vst.msk [vmem:[#allocation2 + $0x28] sm:$0xff] %vm305, -inf
          %312 = vst.msk [vmem:[#allocation2 + $0x30] sm:$0xff] %vm305, -inf
          %313 = vst.msk [vmem:[#allocation2 + $0x38] sm:$0xff] %vm305, -inf
          %314 = vst.msk [vmem:[#allocation3] sm:$0xff] %vm305, 0.0
          %315 = vst.msk [vmem:[#allocation3 + $0x8] sm:$0xff] %vm305, 0.0
          %316 = vst.msk [vmem:[#allocation3 + $0x10] sm:$0xff] %vm305, 0.0
          %317 = vst.msk [vmem:[#allocation3 + $0x18] sm:$0xff] %vm305, 0.0
          %318 = vst.msk [vmem:[#allocation3 + $0x20] sm:$0xff] %vm305, 0.0
          %319 = vst.msk [vmem:[#allocation3 + $0x28] sm:$0xff] %vm305, 0.0
          %320 = vst.msk [vmem:[#allocation3 + $0x30] sm:$0xff] %vm305, 0.0
          %321 = vst.msk [vmem:[#allocation3 + $0x38] sm:$0xff] %vm305, 0.0
          %vm322 = vcmask 64512
          %323 = vst.msk [vmem:[#allocation4] sm:$0xff] %vm322, 0.0
          %324 = vst.msk [vmem:[#allocation4 + $0x8] sm:$0xff] %vm322, 0.0
          %325 = vst.msk [vmem:[#allocation4 + $0x10] sm:$0xff] %vm322, 0.0
          %326 = vst.msk [vmem:[#allocation4 + $0x18] sm:$0xff] %vm322, 0.0
          %327 = vst.msk [vmem:[#allocation4 + $0x20] sm:$0xff] %vm322, 0.0
          %328 = vst.msk [vmem:[#allocation4 + $0x28] sm:$0xff] %vm322, 0.0
          %329 = vst.msk [vmem:[#allocation4 + $0x30] sm:$0xff] %vm322, 0.0
          %330 = vst.msk [vmem:[#allocation4 + $0x38] sm:$0xff] %vm322, 0.0
        $region48: #{attention_forward.8} parent=31 // pred_fallthru
          _
        %v331 = vld [vmem:[%s247] sm:$0xff]
        %v332 = vld [vmem:[%s247 + $0x8] sm:$0xff]
        %v333 = vld [vmem:[%s247 + $0x10] sm:$0xff]
        %v334 = vld [vmem:[%s247 + $0x18] sm:$0xff]
        %v335 = vld [vmem:[%s247 + $0x20] sm:$0xff]
        %v336 = vld [vmem:[%s247 + $0x28] sm:$0xff]
        %v337 = vld [vmem:[%s247 + $0x30] sm:$0xff]
        %v338 = vld [vmem:[%s247 + $0x38] sm:$0xff]
        %v339 = vld [vmem:[%s256] sm:$0xff]
        %v340 = vld [vmem:[%s256 + $0x8] sm:$0xff]
        %v341 = vld [vmem:[%s256 + $0x10] sm:$0xff]
        %v342 = vld [vmem:[%s256 + $0x18] sm:$0xff]
        %v343 = vld [vmem:[%s265] sm:$0xff]
        %v344 = vld [vmem:[%s265 + $0x8] sm:$0xff]
        %v345 = vld [vmem:[%s265 + $0x10] sm:$0xff]
        %v346 = vld [vmem:[%s265 + $0x18] sm:$0xff]
        %v347 = vld [vmem:[%s265 + $0x20] sm:$0xff]
        %v348 = vld [vmem:[%s265 + $0x28] sm:$0xff]
        %v349 = vld [vmem:[%s265 + $0x30] sm:$0xff]
        %v350 = vld [vmem:[%s265 + $0x38] sm:$0xff]
        %vm351 = vcmask 64512
        %v353 = vsel %vm351, %v331, 0
        %v356 = vsel %vm351, %v332, 0
        %358 = vmatprep.subr.mxu0 0.0
        %359 = vmatpush1.msra.mxu0 %v339
        %360 = vmatprep.subr.mxu0 0.0
        %361 = vmatpush1.msra.mxu0 0.0
        %362 = vmatprep.subr.mxu0 0.0
        %363 = vmatpush1.msra.mxu0 0.0
        %364 = vmatprep.subr.mxu0 0.0
        %365 = vmatpush1.msra.mxu0 0.0
        %366 = vmatprep.subr.mxu0 0.0
        %367 = vmatpush1.msra.mxu0 0.0
        %368 = vmatprep.subr.mxu0 0.0
        %369 = vmatpush1.msra.mxu0 0.0
        %370 = vmatprep.subr.mxu0 0.0
        %371 = vmatpush1.msra.mxu0 0.0
        %372 = vmatprep.subr.mxu0 0.0
        %373 = vmatpush1.msra.mxu0 0.0
        %374 = vmatprep.subr.mxu0 0.0
        %375 = vmatpush1.msra.mxu0 0.0
        %376 = vmatprep.subr.mxu0 0.0
        %377 = vmatpush1.msra.mxu0 0.0
        %378 = vmatprep.subr.mxu0 0.0
        %379 = vmatpush1.msra.mxu0 0.0
        %380 = vmatprep.subr.mxu0 0.0
        %381 = vmatpush1.msra.mxu0 0.0
        %382 = vmatprep.subr.mxu0 0.0
        %383 = vmatpush1.msra.mxu0 0.0
        %384 = vmatprep.subr.mxu0 0.0
        %385 = vmatpush1.msra.mxu0 0.0
        %386 = vmatprep.subr.mxu0 0.0
        %387 = vmatpush1.msra.mxu0 0.0
        %388 = vmatprep.subr.mxu0 0.0
        %389 = vmatpush1.msra.mxu0 0.0
        %390 = vmatprep.subr.mxu0 0.0
        %391 = vmatpush1.msra.mxu0 0.0
        %392 = vmatprep.subr.mxu0 0.0
        %393 = vmatpush1.msra.mxu0 0.0
        %394 = vmatprep.subr.mxu0 0.0
        %395 = vmatpush1.msra.mxu0 0.0
        %396 = vmatprep.subr.mxu0 0.0
        %397 = vmatpush1.msra.mxu0 0.0
        %398 = vmatprep.subr.mxu0 0.0
        %399 = vmatpush1.msra.mxu0 0.0
        %400 = vmatprep.subr.mxu0 0.0
        %401 = vmatpush1.msra.mxu0 0.0
        %402 = vmatprep.subr.mxu0 0.0
        %403 = vmatpush1.msra.mxu0 0.0
        %404 = vmatprep.subr.mxu0 0.0
        %405 = vmatpush1.msra.mxu0 0.0
        %406 = vmatprep.subr.mxu0 0.0
        %407 = vmatpush1.msra.mxu0 0.0
        %408 = vmatprep.subr.mxu0 0.0
        %409 = vmatpush1.msra.mxu0 0.0
        %410 = vmatprep.subr.mxu0 0.0
        %411 = vmatpush1.msra.mxu0 0.0
        %412 = vmatprep.subr.mxu0 0.0
        %413 = vmatpush1.msra.mxu0 0.0
        %414 = vmatprep.subr.mxu0 0.0
        %415 = vmatpush1.msra.mxu0 0.0
        %416 = vmatprep.subr.mxu0 0.0
        %417 = vmatpush1.msra.mxu0 0.0
        %418 = vmatprep.subr.mxu0 0.0
        %419 = vmatpush1.msra.mxu0 0.0
        %420 = vmatprep.subr.mxu0 0.0
        %421 = vmatpush1.msra.mxu0 0.0
        %422 = vmatprep.mubr.f32.mxu0 0.0
        %423 = vmatmul.mubr.f32.gmra.mrb[0].mxu0 %v353
        %v424 = vpop.f32.mrb[0].mxu0
        %v425 = vadd.f32 0.0, %v424
        %v426 = vpop.f32.mrb[0].mxu0
        %427 = vmatprep.mubr.f32.mxu0 0.0
        %428 = vmatmul.mubr.f32.gmra.mrb[0].mxu0 %v356
        %v429 = vpop.f32.mrb[0].mxu0
        %v430 = vadd.f32 0.0, %v429
        %v431 = vpop.f32.mrb[0].mxu0
        %432 = vdwg.mxu0
        %v434 = vsel %vm351, %v333, 0
        %v437 = vsel %vm351, %v334, 0
        %439 = vmatprep.subr.mxu0 0.0
        %440 = vmatpush1.msra.mxu0 %v340
        %441 = vmatprep.subr.mxu0 0.0
        %442 = vmatpush1.msra.mxu0 0.0
        %443 = vmatprep.subr.mxu0 0.0
        %444 = vmatpush1.msra.mxu0 0.0
        %445 = vmatprep.subr.mxu0 0.0
        %446 = vmatpush1.msra.mxu0 0.0
        %447 = vmatprep.subr.mxu0 0.0
        %448 = vmatpush1.msra.mxu0 0.0
        %449 = vmatprep.subr.mxu0 0.0
        %450 = vmatpush1.msra.mxu0 0.0
        %451 = vmatprep.subr.mxu0 0.0
        %452 = vmatpush1.msra.mxu0 0.0
        %453 = vmatprep.subr.mxu0 0.0
        %454 = vmatpush1.msra.mxu0 0.0
        %455 = vmatprep.subr.mxu0 0.0
        %456 = vmatpush1.msra.mxu0 0.0
        %457 = vmatprep.subr.mxu0 0.0
        %458 = vmatpush1.msra.mxu0 0.0
        %459 = vmatprep.subr.mxu0 0.0
        %460 = vmatpush1.msra.mxu0 0.0
        %461 = vmatprep.subr.mxu0 0.0
        %462 = vmatpush1.msra.mxu0 0.0
        %463 = vmatprep.subr.mxu0 0.0
        %464 = vmatpush1.msra.mxu0 0.0
        %465 = vmatprep.subr.mxu0 0.0
        %466 = vmatpush1.msra.mxu0 0.0
        %467 = vmatprep.subr.mxu0 0.0
        %468 = vmatpush1.msra.mxu0 0.0
        %469 = vmatprep.subr.mxu0 0.0
        %470 = vmatpush1.msra.mxu0 0.0
        %471 = vmatprep.subr.mxu0 0.0
        %472 = vmatpush1.msra.mxu0 0.0
        %473 = vmatprep.subr.mxu0 0.0
        %474 = vmatpush1.msra.mxu0 0.0
        %475 = vmatprep.subr.mxu0 0.0
        %476 = vmatpush1.msra.mxu0 0.0
        %477 = vmatprep.subr.mxu0 0.0
        %478 = vmatpush1.msra.mxu0 0.0
        %479 = vmatprep.subr.mxu0 0.0
        %480 = vmatpush1.msra.mxu0 0.0
        %481 = vmatprep.subr.mxu0 0.0
        %482 = vmatpush1.msra.mxu0 0.0
        %483 = vmatprep.subr.mxu0 0.0
        %484 = vmatpush1.msra.mxu0 0.0
        %485 = vmatprep.subr.mxu0 0.0
        %486 = vmatpush1.msra.mxu0 0.0
        %487 = vmatprep.subr.mxu0 0.0
        %488 = vmatpush1.msra.mxu0 0.0
        %489 = vmatprep.subr.mxu0 0.0
        %490 = vmatpush1.msra.mxu0 0.0
        %491 = vmatprep.subr.mxu0 0.0
        %492 = vmatpush1.msra.mxu0 0.0
        %493 = vmatprep.subr.mxu0 0.0
        %494 = vmatpush1.msra.mxu0 0.0
        %495 = vmatprep.subr.mxu0 0.0
        %496 = vmatpush1.msra.mxu0 0.0
        %497 = vmatprep.subr.mxu0 0.0
        %498 = vmatpush1.msra.mxu0 0.0
        %499 = vmatprep.subr.mxu0 0.0
        %500 = vmatpush1.msra.mxu0 0.0
        %501 = vmatprep.subr.mxu0 0.0
        %502 = vmatpush1.msra.mxu0 0.0
        %503 = vmatprep.mubr.f32.mxu0 0.0
        %504 = vmatmul.mubr.f32.gmra.mrb[0].mxu0 %v434
        %v505 = vpop.f32.mrb[0].mxu0
        %v506 = vadd.f32 0.0, %v505
        %v507 = vpop.f32.mrb[0].mxu0
        %508 = vmatprep.mubr.f32.mxu0 0.0
        %509 = vmatmul.mubr.f32.gmra.mrb[0].mxu0 %v437
        %v510 = vpop.f32.mrb[0].mxu0
        %v511 = vadd.f32 0.0, %v510
        %v512 = vpop.f32.mrb[0].mxu0
        %513 = vdwg.mxu0
        %v515 = vsel %vm351, %v335, 0
        %v518 = vsel %vm351, %v336, 0
        %520 = vmatprep.subr.mxu0 0.0
        %521 = vmatpush1.msra.mxu0 %v341
        %522 = vmatprep.subr.mxu0 0.0
        %523 = vmatpush1.msra.mxu0 0.0
        %524 = vmatprep.subr.mxu0 0.0
        %525 = vmatpush1.msra.mxu0 0.0
        %526 = vmatprep.subr.mxu0 0.0
        %527 = vmatpush1.msra.mxu0 0.0
        %528 = vmatprep.subr.mxu0 0.0
        %529 = vmatpush1.msra.mxu0 0.0
        %530 = vmatprep.subr.mxu0 0.0
        %531 = vmatpush1.msra.mxu0 0.0
        %532 = vmatprep.subr.mxu0 0.0
        %533 = vmatpush1.msra.mxu0 0.0
        %534 = vmatprep.subr.mxu0 0.0
        %535 = vmatpush1.msra.mxu0 0.0
        %536 = vmatprep.subr.mxu0 0.0
        %537 = vmatpush1.msra.mxu0 0.0
        %538 = vmatprep.subr.mxu0 0.0
        %539 = vmatpush1.msra.mxu0 0.0
        %540 = vmatprep.subr.mxu0 0.0
        %541 = vmatpush1.msra.mxu0 0.0
        %542 = vmatprep.subr.mxu0 0.0
        %543 = vmatpush1.msra.mxu0 0.0
        %544 = vmatprep.subr.mxu0 0.0
        %545 = vmatpush1.msra.mxu0 0.0
        %546 = vmatprep.subr.mxu0 0.0
        %547 = vmatpush1.msra.mxu0 0.0
        %548 = vmatprep.subr.mxu0 0.0
        %549 = vmatpush1.msra.mxu0 0.0
        %550 = vmatprep.subr.mxu0 0.0
        %551 = vmatpush1.msra.mxu0 0.0
        %552 = vmatprep.subr.mxu0 0.0
        %553 = vmatpush1.msra.mxu0 0.0
        %554 = vmatprep.subr.mxu0 0.0
        %555 = vmatpush1.msra.mxu0 0.0
        %556 = vmatprep.subr.mxu0 0.0
        %557 = vmatpush1.msra.mxu0 0.0
        %558 = vmatprep.subr.mxu0 0.0
        %559 = vmatpush1.msra.mxu0 0.0
        %560 = vmatprep.subr.mxu0 0.0
        %561 = vmatpush1.msra.mxu0 0.0
        %562 = vmatprep.subr.mxu0 0.0
        %563 = vmatpush1.msra.mxu0 0.0
        %564 = vmatprep.subr.mxu0 0.0
        %565 = vmatpush1.msra.mxu0 0.0
        %566 = vmatprep.subr.mxu0 0.0
        %567 = vmatpush1.msra.mxu0 0.0
        %568 = vmatprep.subr.mxu0 0.0
        %569 = vmatpush1.msra.mxu0 0.0
        %570 = vmatprep.subr.mxu0 0.0
        %571 = vmatpush1.msra.mxu0 0.0
        %572 = vmatprep.subr.mxu0 0.0
        %573 = vmatpush1.msra.mxu0 0.0
        %574 = vmatprep.subr.mxu0 0.0
        %575 = vmatpush1.msra.mxu0 0.0
        %576 = vmatprep.subr.mxu0 0.0
        %577 = vmatpush1.msra.mxu0 0.0
        %578 = vmatprep.subr.mxu0 0.0
        %579 = vmatpush1.msra.mxu0 0.0
        %580 = vmatprep.subr.mxu0 0.0
        %581 = vmatpush1.msra.mxu0 0.0
        %582 = vmatprep.subr.mxu0 0.0
        %583 = vmatpush1.msra.mxu0 0.0
        %584 = vmatprep.mubr.f32.mxu0 0.0
        %585 = vmatmul.mubr.f32.gmra.mrb[0].mxu0 %v515
        %v586 = vpop.f32.mrb[0].mxu0
        %v587 = vadd.f32 0.0, %v586
        %v588 = vpop.f32.mrb[0].mxu0
        %589 = vmatprep.mubr.f32.mxu0 0.0
        %590 = vmatmul.mubr.f32.gmra.mrb[0].mxu0 %v518
        %v591 = vpop.f32.mrb[0].mxu0
        %v592 = vadd.f32 0.0, %v591
        %v593 = vpop.f32.mrb[0].mxu0
        %594 = vdwg.mxu0
        %v596 = vsel %vm351, %v337, 0
        %v599 = vsel %vm351, %v338, 0
        %601 = vmatprep.subr.mxu0 0.0
        %602 = vmatpush1.msra.mxu0 %v342
        %603 = vmatprep.subr.mxu0 0.0
        %604 = vmatpush1.msra.mxu0 0.0
        %605 = vmatprep.subr.mxu0 0.0
        %606 = vmatpush1.msra.mxu0 0.0
        %607 = vmatprep.subr.mxu0 0.0
        %608 = vmatpush1.msra.mxu0 0.0
        %609 = vmatprep.subr.mxu0 0.0
        %610 = vmatpush1.msra.mxu0 0.0
        %611 = vmatprep.subr.mxu0 0.0
        %612 = vmatpush1.msra.mxu0 0.0
        %613 = vmatprep.subr.mxu0 0.0
        %614 = vmatpush1.msra.mxu0 0.0
        %615 = vmatprep.subr.mxu0 0.0
        %616 = vmatpush1.msra.mxu0 0.0
        %617 = vmatprep.subr.mxu0 0.0
        %618 = vmatpush1.msra.mxu0 0.0
        %619 = vmatprep.subr.mxu0 0.0
        %620 = vmatpush1.msra.mxu0 0.0
        %621 = vmatprep.subr.mxu0 0.0
        %622 = vmatpush1.msra.mxu0 0.0
        %623 = vmatprep.subr.mxu0 0.0
        %624 = vmatpush1.msra.mxu0 0.0
        %625 = vmatprep.subr.mxu0 0.0
        %626 = vmatpush1.msra.mxu0 0.0
        %627 = vmatprep.subr.mxu0 0.0
        %628 = vmatpush1.msra.mxu0 0.0
        %629 = vmatprep.subr.mxu0 0.0
        %630 = vmatpush1.msra.mxu0 0.0
        %631 = vmatprep.subr.mxu0 0.0
        %632 = vmatpush1.msra.mxu0 0.0
        %633 = vmatprep.subr.mxu0 0.0
        %634 = vmatpush1.msra.mxu0 0.0
        %635 = vmatprep.subr.mxu0 0.0
        %636 = vmatpush1.msra.mxu0 0.0
        %637 = vmatprep.subr.mxu0 0.0
        %638 = vmatpush1.msra.mxu0 0.0
        %639 = vmatprep.subr.mxu0 0.0
        %640 = vmatpush1.msra.mxu0 0.0
        %641 = vmatprep.subr.mxu0 0.0
        %642 = vmatpush1.msra.mxu0 0.0
        %643 = vmatprep.subr.mxu0 0.0
        %644 = vmatpush1.msra.mxu0 0.0
        %645 = vmatprep.subr.mxu0 0.0
        %646 = vmatpush1.msra.mxu0 0.0
        %647 = vmatprep.subr.mxu0 0.0
        %648 = vmatpush1.msra.mxu0 0.0
        %649 = vmatprep.subr.mxu0 0.0
        %650 = vmatpush1.msra.mxu0 0.0
        %651 = vmatprep.subr.mxu0 0.0
        %652 = vmatpush1.msra.mxu0 0.0
        %653 = vmatprep.subr.mxu0 0.0
        %654 = vmatpush1.msra.mxu0 0.0
        %655 = vmatprep.subr.mxu0 0.0
        %656 = vmatpush1.msra.mxu0 0.0
        %657 = vmatprep.subr.mxu0 0.0
        %658 = vmatpush1.msra.mxu0 0.0
        %659 = vmatprep.subr.mxu0 0.0
        %660 = vmatpush1.msra.mxu0 0.0
        %661 = vmatprep.subr.mxu0 0.0
        %662 = vmatpush1.msra.mxu0 0.0
        %663 = vmatprep.subr.mxu0 0.0
        %664 = vmatpush1.msra.mxu0 0.0
        %665 = vmatprep.mubr.f32.mxu0 0.0
        %666 = vmatmul.mubr.f32.gmra.mrb[0].mxu0 %v596
        %v667 = vpop.f32.mrb[0].mxu0
        %v668 = vadd.f32 0.0, %v667
        %v669 = vpop.f32.mrb[0].mxu0
        %670 = vmatprep.mubr.f32.mxu0 0.0
        %671 = vmatmul.mubr.f32.gmra.mrb[0].mxu0 %v599
        %v672 = vpop.f32.mrb[0].mxu0
        %v673 = vadd.f32 0.0, %v672
        %v674 = vpop.f32.mrb[0].mxu0
        %675 = vdwg.mxu0
        %v676 = vld [vmem:[#allocation2] sm:$0xff]
        %v677 = vld [vmem:[#allocation2 + $0x8] sm:$0xff]
        %v678 = vld [vmem:[#allocation2 + $0x10] sm:$0xff]
        %v679 = vld [vmem:[#allocation2 + $0x18] sm:$0xff]
        %v680 = vld [vmem:[#allocation2 + $0x20] sm:$0xff]
        %v681 = vld [vmem:[#allocation2 + $0x28] sm:$0xff]
        %v682 = vld [vmem:[#allocation2 + $0x30] sm:$0xff]
        %v683 = vld [vmem:[#allocation2 + $0x38] sm:$0xff]
        %vm684 = vcmask 130048
        %v685 = vsel %vm684, %v425, -inf
        %686 = vmax.xlane.f32.xlu0 %v685
        %v687 = vpop.xlane.xlu0 %686
        %v688 = vsel %vm684, %v430, -inf
        %689 = vmax.xlane.f32.xlu0 %v688
        %v690 = vpop.xlane.xlu0 %689
        %v691 = vsel %vm684, %v506, -inf
        %692 = vmax.xlane.f32.xlu0 %v691
        %v693 = vpop.xlane.xlu0 %692
        %v694 = vsel %vm684, %v511, -inf
        %695 = vmax.xlane.f32.xlu0 %v694
        %v696 = vpop.xlane.xlu0 %695
        %v697 = vsel %vm684, %v587, -inf
        %698 = vmax.xlane.f32.xlu0 %v697
        %v699 = vpop.xlane.xlu0 %698
        %v700 = vsel %vm684, %v592, -inf
        %701 = vmax.xlane.f32.xlu0 %v700
        %v702 = vpop.xlane.xlu0 %701
        %v703 = vsel %vm684, %v668, -inf
        %704 = vmax.xlane.f32.xlu0 %v703
        %v705 = vpop.xlane.xlu0 %704
        %v706 = vsel %vm684, %v673, -inf
        %707 = vmax.xlane.f32.xlu0 %v706
        %v708 = vpop.xlane.xlu0 %707
        %v709 = vmax.f32 %v676, %v687
        %v710 = vmax.f32 %v677, %v690
        %v711 = vmax.f32 %v678, %v693
        %v712 = vmax.f32 %v679, %v696
        %v713 = vmax.f32 %v680, %v699
        %v714 = vmax.f32 %v681, %v702
        %v715 = vmax.f32 %v682, %v705
        %v716 = vmax.f32 %v683, %v708
        %v717 = vsub.f32 %v676, %v709
        %v718 = vsub.f32 %v677, %v710
        %v719 = vsub.f32 %v678, %v711
        %v720 = vsub.f32 %v679, %v712
        %v721 = vsub.f32 %v680, %v713
        %v722 = vsub.f32 %v681, %v714
        %v723 = vsub.f32 %v682, %v715
        %v724 = vsub.f32 %v683, %v716
        %v725 = vmul.f32 %v717, 1.442695
        %v726 = vpow.pop %v725
        %v727 = vmul.f32 %v718, 1.442695
        %v728 = vpow.pop %v727
        %v729 = vmul.f32 %v719, 1.442695
        %v730 = vpow.pop %v729
        %v731 = vmul.f32 %v720, 1.442695
        %v732 = vpow.pop %v731
        %v733 = vmul.f32 %v721, 1.442695
        %v734 = vpow.pop %v733
        %v735 = vmul.f32 %v722, 1.442695
        %v736 = vpow.pop %v735
        %v737 = vmul.f32 %v723, 1.442695
        %v738 = vpow.pop %v737
        %v739 = vmul.f32 %v724, 1.442695
        %v740 = vpow.pop %v739
        %742 = vset.pattern.permute.xlu0 0
        %743 = vperm.xlu0 %742, %v709
        %v744 = vpop.permute.xlu0 %743
        %747 = vset.pattern.permute.xlu0 0
        %748 = vperm.xlu0 %747, %v710
        %v749 = vpop.permute.xlu0 %748
        %752 = vset.pattern.permute.xlu0 0
        %753 = vperm.xlu0 %752, %v711
        %v754 = vpop.permute.xlu0 %753
        %757 = vset.pattern.permute.xlu0 0
        %758 = vperm.xlu0 %757, %v712
        %v759 = vpop.permute.xlu0 %758
        %762 = vset.pattern.permute.xlu0 0
        %763 = vperm.xlu0 %762, %v713
        %v764 = vpop.permute.xlu0 %763
        %767 = vset.pattern.permute.xlu0 0
        %768 = vperm.xlu0 %767, %v714
        %v769 = vpop.permute.xlu0 %768
        %772 = vset.pattern.permute.xlu0 0
        %773 = vperm.xlu0 %772, %v715
        %v774 = vpop.permute.xlu0 %773
        %777 = vset.pattern.permute.xlu0 0
        %778 = vperm.xlu0 %777, %v716
        %v779 = vpop.permute.xlu0 %778
        %v781 = vsub.f32 %v425, %v744
        %v782 = vsub.f32 %v430, %v749
        %v783 = vsub.f32 %v506, %v754
        %v784 = vsub.f32 %v511, %v759
        %v785 = vsub.f32 %v587, %v764
        %v786 = vsub.f32 %v592, %v769
        %v787 = vsub.f32 %v668, %v774
        %v788 = vsub.f32 %v673, %v779
        %v789 = vmul.f32 %v781, 1.442695
        %v790 = vpow.pop %v789
        %v791 = vmul.f32 %v782, 1.442695
        %v792 = vpow.pop %v791
        %v793 = vmul.f32 %v783, 1.442695
        %v794 = vpow.pop %v793
        %v795 = vmul.f32 %v784, 1.442695
        %v796 = vpow.pop %v795
        %v797 = vmul.f32 %v785, 1.442695
        %v798 = vpow.pop %v797
        %v799 = vmul.f32 %v786, 1.442695
        %v800 = vpow.pop %v799
        %v801 = vmul.f32 %v787, 1.442695
        %v802 = vpow.pop %v801
        %v803 = vmul.f32 %v788, 1.442695
        %v804 = vpow.pop %v803
        %v805 = vld [vmem:[#allocation3] sm:$0xff]
        %v806 = vld [vmem:[#allocation3 + $0x8] sm:$0xff]
        %v807 = vld [vmem:[#allocation3 + $0x10] sm:$0xff]
        %v808 = vld [vmem:[#allocation3 + $0x18] sm:$0xff]
        %v809 = vld [vmem:[#allocation3 + $0x20] sm:$0xff]
        %v810 = vld [vmem:[#allocation3 + $0x28] sm:$0xff]
        %v811 = vld [vmem:[#allocation3 + $0x30] sm:$0xff]
        %v812 = vld [vmem:[#allocation3 + $0x38] sm:$0xff]
        %v813 = vmul.f32 %v726, %v805
        %v814 = vmul.f32 %v728, %v806
        %v815 = vmul.f32 %v730, %v807
        %v816 = vmul.f32 %v732, %v808
        %v817 = vmul.f32 %v734, %v809
        %v818 = vmul.f32 %v736, %v810
        %v819 = vmul.f32 %v738, %v811
        %v820 = vmul.f32 %v740, %v812
        %v821 = vsel %vm684, %v790, 0.0
        %822 = vadd.xlane.f32.xlu0 %v821
        %v823 = vpop.xlane.xlu0 %822
        %v824 = vsel %vm684, %v792, 0.0
        %825 = vadd.xlane.f32.xlu0 %v824
        %v826 = vpop.xlane.xlu0 %825
        %v827 = vsel %vm684, %v794, 0.0
        %828 = vadd.xlane.f32.xlu0 %v827
        %v829 = vpop.xlane.xlu0 %828
        %v830 = vsel %vm684, %v796, 0.0
        %831 = vadd.xlane.f32.xlu0 %v830
        %v832 = vpop.xlane.xlu0 %831
        %v833 = vsel %vm684, %v798, 0.0
        %834 = vadd.xlane.f32.xlu0 %v833
        %v835 = vpop.xlane.xlu0 %834
        %v836 = vsel %vm684, %v800, 0.0
        %837 = vadd.xlane.f32.xlu0 %v836
        %v838 = vpop.xlane.xlu0 %837
        %v839 = vsel %vm684, %v802, 0.0
        %840 = vadd.xlane.f32.xlu0 %v839
        %v841 = vpop.xlane.xlu0 %840
        %v842 = vsel %vm684, %v804, 0.0
        %843 = vadd.xlane.f32.xlu0 %v842
        %v844 = vpop.xlane.xlu0 %843
        %v845 = vadd.f32 %v813, %v823
        %v846 = vadd.f32 %v814, %v826
        %v847 = vadd.f32 %v815, %v829
        %v848 = vadd.f32 %v816, %v832
        %v849 = vadd.f32 %v817, %v835
        %v850 = vadd.f32 %v818, %v838
        %v851 = vadd.f32 %v819, %v841
        %v852 = vadd.f32 %v820, %v844
        %vm853 = vcmask 7168
        %854 = vst.msk [vmem:[#allocation3] sm:$0xff] %vm853, %v845
        %855 = vst.msk [vmem:[#allocation3 + $0x8] sm:$0xff] %vm853, %v846
        %856 = vst.msk [vmem:[#allocation3 + $0x10] sm:$0xff] %vm853, %v847
        %857 = vst.msk [vmem:[#allocation3 + $0x18] sm:$0xff] %vm853, %v848
        %858 = vst.msk [vmem:[#allocation3 + $0x20] sm:$0xff] %vm853, %v849
        %859 = vst.msk [vmem:[#allocation3 + $0x28] sm:$0xff] %vm853, %v850
        %860 = vst.msk [vmem:[#allocation3 + $0x30] sm:$0xff] %vm853, %v851
        %861 = vst.msk [vmem:[#allocation3 + $0x38] sm:$0xff] %vm853, %v852
        %v863 = vsel %vm684, %v790, 0
        %v866 = vsel %vm684, %v792, 0
        %868 = vmatprep.subr.mxu0 0.0
        %869 = vmatpush1.msra.mxu0 %v343
        %870 = vmatprep.subr.mxu0 0.0
        %871 = vmatpush1.msra.mxu0 %v344
        %872 = vmatprep.subr.mxu0 0.0
        %873 = vmatpush1.msra.mxu0 0.0
        %874 = vmatprep.subr.mxu0 0.0
        %875 = vmatpush1.msra.mxu0 0.0
        %876 = vmatprep.subr.mxu0 0.0
        %877 = vmatpush1.msra.mxu0 0.0
        %878 = vmatprep.subr.mxu0 0.0
        %879 = vmatpush1.msra.mxu0 0.0
        %880 = vmatprep.subr.mxu0 0.0
        %881 = vmatpush1.msra.mxu0 0.0
        %882 = vmatprep.subr.mxu0 0.0
        %883 = vmatpush1.msra.mxu0 0.0
        %884 = vmatprep.subr.mxu0 0.0
        %885 = vmatpush1.msra.mxu0 0.0
        %886 = vmatprep.subr.mxu0 0.0
        %887 = vmatpush1.msra.mxu0 0.0
        %888 = vmatprep.subr.mxu0 0.0
        %889 = vmatpush1.msra.mxu0 0.0
        %890 = vmatprep.subr.mxu0 0.0
        %891 = vmatpush1.msra.mxu0 0.0
        %892 = vmatprep.subr.mxu0 0.0
        %893 = vmatpush1.msra.mxu0 0.0
        %894 = vmatprep.subr.mxu0 0.0
        %895 = vmatpush1.msra.mxu0 0.0
        %896 = vmatprep.subr.mxu0 0.0
        %897 = vmatpush1.msra.mxu0 0.0
        %898 = vmatprep.subr.mxu0 0.0
        %899 = vmatpush1.msra.mxu0 0.0
        %900 = vmatprep.subr.mxu0 0.0
        %901 = vmatpush1.msra.mxu0 0.0
        %902 = vmatprep.subr.mxu0 0.0
        %903 = vmatpush1.msra.mxu0 0.0
        %904 = vmatprep.subr.mxu0 0.0
        %905 = vmatpush1.msra.mxu0 0.0
        %906 = vmatprep.subr.mxu0 0.0
        %907 = vmatpush1.msra.mxu0 0.0
        %908 = vmatprep.subr.mxu0 0.0
        %909 = vmatpush1.msra.mxu0 0.0
        %910 = vmatprep.subr.mxu0 0.0
        %911 = vmatpush1.msra.mxu0 0.0
        %912 = vmatprep.subr.mxu0 0.0
        %913 = vmatpush1.msra.mxu0 0.0
        %914 = vmatprep.subr.mxu0 0.0
        %915 = vmatpush1.msra.mxu0 0.0
        %916 = vmatprep.subr.mxu0 0.0
        %917 = vmatpush1.msra.mxu0 0.0
        %918 = vmatprep.subr.mxu0 0.0
        %919 = vmatpush1.msra.mxu0 0.0
        %920 = vmatprep.subr.mxu0 0.0
        %921 = vmatpush1.msra.mxu0 0.0
        %922 = vmatprep.subr.mxu0 0.0
        %923 = vmatpush1.msra.mxu0 0.0
        %924 = vmatprep.subr.mxu0 0.0
        %925 = vmatpush1.msra.mxu0 0.0
        %926 = vmatprep.subr.mxu0 0.0
        %927 = vmatpush1.msra.mxu0 0.0
        %928 = vmatprep.subr.mxu0 0.0
        %929 = vmatpush1.msra.mxu0 0.0
        %930 = vmatprep.subr.mxu0 0.0
        %931 = vmatpush1.msra.mxu0 0.0
        %932 = vmatprep.mubr.f32.mxu0 0.0
        %933 = vmatmul.mubr.f32.gmra.mrb[0].mxu0 %v863
        %v934 = vpop.f32.mrb[0].mxu0
        %v935 = vadd.f32 0.0, %v934
        %v936 = vpop.f32.mrb[0].mxu0
        %937 = vmatprep.mubr.f32.mxu0 0.0
        %938 = vmatmul.mubr.f32.gmra.mrb[0].mxu0 %v866
        %v939 = vpop.f32.mrb[0].mxu0
        %v940 = vadd.f32 0.0, %v939
        %v941 = vpop.f32.mrb[0].mxu0
        %942 = vdwg.mxu0
        %v944 = vsel %vm684, %v794, 0
        %v947 = vsel %vm684, %v796, 0
        %949 = vmatprep.subr.mxu0 0.0
        %950 = vmatpush1.msra.mxu0 %v345
        %951 = vmatprep.subr.mxu0 0.0
        %952 = vmatpush1.msra.mxu0 %v346
        %953 = vmatprep.subr.mxu0 0.0
        %954 = vmatpush1.msra.mxu0 0.0
        %955 = vmatprep.subr.mxu0 0.0
        %956 = vmatpush1.msra.mxu0 0.0
        %957 = vmatprep.subr.mxu0 0.0
        %958 = vmatpush1.msra.mxu0 0.0
        %959 = vmatprep.subr.mxu0 0.0
        %960 = vmatpush1.msra.mxu0 0.0
        %961 = vmatprep.subr.mxu0 0.0
        %962 = vmatpush1.msra.mxu0 0.0
        %963 = vmatprep.subr.mxu0 0.0
        %964 = vmatpush1.msra.mxu0 0.0
        %965 = vmatprep.subr.mxu0 0.0
        %966 = vmatpush1.msra.mxu0 0.0
        %967 = vmatprep.subr.mxu0 0.0
        %968 = vmatpush1.msra.mxu0 0.0
        %969 = vmatprep.subr.mxu0 0.0
        %970 = vmatpush1.msra.mxu0 0.0
        %971 = vmatprep.subr.mxu0 0.0
        %972 = vmatpush1.msra.mxu0 0.0
        %973 = vmatprep.subr.mxu0 0.0
        %974 = vmatpush1.msra.mxu0 0.0
        %975 = vmatprep.subr.mxu0 0.0
        %976 = vmatpush1.msra.mxu0 0.0
        %977 = vmatprep.subr.mxu0 0.0
        %978 = vmatpush1.msra.mxu0 0.0
        %979 = vmatprep.subr.mxu0 0.0
        %980 = vmatpush1.msra.mxu0 0.0
        %981 = vmatprep.subr.mxu0 0.0
        %982 = vmatpush1.msra.mxu0 0.0
        %983 = vmatprep.subr.mxu0 0.0
        %984 = vmatpush1.msra.mxu0 0.0
        %985 = vmatprep.subr.mxu0 0.0
        %986 = vmatpush1.msra.mxu0 0.0
        %987 = vmatprep.subr.mxu0 0.0
        %988 = vmatpush1.msra.mxu0 0.0
        %989 = vmatprep.subr.mxu0 0.0
        %990 = vmatpush1.msra.mxu0 0.0
        %991 = vmatprep.subr.mxu0 0.0
        %992 = vmatpush1.msra.mxu0 0.0
        %993 = vmatprep.subr.mxu0 0.0
        %994 = vmatpush1.msra.mxu0 0.0
        %995 = vmatprep.subr.mxu0 0.0
        %996 = vmatpush1.msra.mxu0 0.0
        %997 = vmatprep.subr.mxu0 0.0
        %998 = vmatpush1.msra.mxu0 0.0
        %999 = vmatprep.subr.mxu0 0.0
        %1000 = vmatpush1.msra.mxu0 0.0
        %1001 = vmatprep.subr.mxu0 0.0
        %1002 = vmatpush1.msra.mxu0 0.0
        %1003 = vmatprep.subr.mxu0 0.0
        %1004 = vmatpush1.msra.mxu0 0.0
        %1005 = vmatprep.subr.mxu0 0.0
        %1006 = vmatpush1.msra.mxu0 0.0
        %1007 = vmatprep.subr.mxu0 0.0
        %1008 = vmatpush1.msra.mxu0 0.0
        %1009 = vmatprep.subr.mxu0 0.0
        %1010 = vmatpush1.msra.mxu0 0.0
        %1011 = vmatprep.subr.mxu0 0.0
        %1012 = vmatpush1.msra.mxu0 0.0
        %1013 = vmatprep.mubr.f32.mxu0 0.0
        %1014 = vmatmul.mubr.f32.gmra.mrb[0].mxu0 %v944
        %v1015 = vpop.f32.mrb[0].mxu0
        %v1016 = vadd.f32 0.0, %v1015
        %v1017 = vpop.f32.mrb[0].mxu0
        %1018 = vmatprep.mubr.f32.mxu0 0.0
        %1019 = vmatmul.mubr.f32.gmra.mrb[0].mxu0 %v947
        %v1020 = vpop.f32.mrb[0].mxu0
        %v1021 = vadd.f32 0.0, %v1020
        %v1022 = vpop.f32.mrb[0].mxu0
        %1023 = vdwg.mxu0
        %v1025 = vsel %vm684, %v798, 0
        %v1028 = vsel %vm684, %v800, 0
        %1030 = vmatprep.subr.mxu0 0.0
        %1031 = vmatpush1.msra.mxu0 %v347
        %1032 = vmatprep.subr.mxu0 0.0
        %1033 = vmatpush1.msra.mxu0 %v348
        %1034 = vmatprep.subr.mxu0 0.0
        %1035 = vmatpush1.msra.mxu0 0.0
        %1036 = vmatprep.subr.mxu0 0.0
        %1037 = vmatpush1.msra.mxu0 0.0
        %1038 = vmatprep.subr.mxu0 0.0
        %1039 = vmatpush1.msra.mxu0 0.0
        %1040 = vmatprep.subr.mxu0 0.0
        %1041 = vmatpush1.msra.mxu0 0.0
        %1042 = vmatprep.subr.mxu0 0.0
        %1043 = vmatpush1.msra.mxu0 0.0
        %1044 = vmatprep.subr.mxu0 0.0
        %1045 = vmatpush1.msra.mxu0 0.0
        %1046 = vmatprep.subr.mxu0 0.0
        %1047 = vmatpush1.msra.mxu0 0.0
        %1048 = vmatprep.subr.mxu0 0.0
        %1049 = vmatpush1.msra.mxu0 0.0
        %1050 = vmatprep.subr.mxu0 0.0
        %1051 = vmatpush1.msra.mxu0 0.0
        %1052 = vmatprep.subr.mxu0 0.0
        %1053 = vmatpush1.msra.mxu0 0.0
        %1054 = vmatprep.subr.mxu0 0.0
        %1055 = vmatpush1.msra.mxu0 0.0
        %1056 = vmatprep.subr.mxu0 0.0
        %1057 = vmatpush1.msra.mxu0 0.0
        %1058 = vmatprep.subr.mxu0 0.0
        %1059 = vmatpush1.msra.mxu0 0.0
        %1060 = vmatprep.subr.mxu0 0.0
        %1061 = vmatpush1.msra.mxu0 0.0
        %1062 = vmatprep.subr.mxu0 0.0
        %1063 = vmatpush1.msra.mxu0 0.0
        %1064 = vmatprep.subr.mxu0 0.0
        %1065 = vmatpush1.msra.mxu0 0.0
        %1066 = vmatprep.subr.mxu0 0.0
        %1067 = vmatpush1.msra.mxu0 0.0
        %1068 = vmatprep.subr.mxu0 0.0
        %1069 = vmatpush1.msra.mxu0 0.0
        %1070 = vmatprep.subr.mxu0 0.0
        %1071 = vmatpush1.msra.mxu0 0.0
        %1072 = vmatprep.subr.mxu0 0.0
        %1073 = vmatpush1.msra.mxu0 0.0
        %1074 = vmatprep.subr.mxu0 0.0
        %1075 = vmatpush1.msra.mxu0 0.0
        %1076 = vmatprep.subr.mxu0 0.0
        %1077 = vmatpush1.msra.mxu0 0.0
        %1078 = vmatprep.subr.mxu0 0.0
        %1079 = vmatpush1.msra.mxu0 0.0
        %1080 = vmatprep.subr.mxu0 0.0
        %1081 = vmatpush1.msra.mxu0 0.0
        %1082 = vmatprep.subr.mxu0 0.0
        %1083 = vmatpush1.msra.mxu0 0.0
        %1084 = vmatprep.subr.mxu0 0.0
        %1085 = vmatpush1.msra.mxu0 0.0
        %1086 = vmatprep.subr.mxu0 0.0
        %1087 = vmatpush1.msra.mxu0 0.0
        %1088 = vmatprep.subr.mxu0 0.0
        %1089 = vmatpush1.msra.mxu0 0.0
        %1090 = vmatprep.subr.mxu0 0.0
        %1091 = vmatpush1.msra.mxu0 0.0
        %1092 = vmatprep.subr.mxu0 0.0
        %1093 = vmatpush1.msra.mxu0 0.0
        %1094 = vmatprep.mubr.f32.mxu0 0.0
        %1095 = vmatmul.mubr.f32.gmra.mrb[0].mxu0 %v1025
        %v1096 = vpop.f32.mrb[0].mxu0
        %v1097 = vadd.f32 0.0, %v1096
        %v1098 = vpop.f32.mrb[0].mxu0
        %1099 = vmatprep.mubr.f32.mxu0 0.0
        %1100 = vmatmul.mubr.f32.gmra.mrb[0].mxu0 %v1028
        %v1101 = vpop.f32.mrb[0].mxu0
        %v1102 = vadd.f32 0.0, %v1101
        %v1103 = vpop.f32.mrb[0].mxu0
        %1104 = vdwg.mxu0
        %v1106 = vsel %vm684, %v802, 0
        %v1109 = vsel %vm684, %v804, 0
        %1111 = vmatprep.subr.mxu0 0.0
        %1112 = vmatpush1.msra.mxu0 %v349
        %1113 = vmatprep.subr.mxu0 0.0
        %1114 = vmatpush1.msra.mxu0 %v350
        %1115 = vmatprep.subr.mxu0 0.0
        %1116 = vmatpush1.msra.mxu0 0.0
        %1117 = vmatprep.subr.mxu0 0.0
        %1118 = vmatpush1.msra.mxu0 0.0
        %1119 = vmatprep.subr.mxu0 0.0
        %1120 = vmatpush1.msra.mxu0 0.0
        %1121 = vmatprep.subr.mxu0 0.0
        %1122 = vmatpush1.msra.mxu0 0.0
        %1123 = vmatprep.subr.mxu0 0.0
        %1124 = vmatpush1.msra.mxu0 0.0
        %1125 = vmatprep.subr.mxu0 0.0
        %1126 = vmatpush1.msra.mxu0 0.0
        %1127 = vmatprep.subr.mxu0 0.0
        %1128 = vmatpush1.msra.mxu0 0.0
        %1129 = vmatprep.subr.mxu0 0.0
        %1130 = vmatpush1.msra.mxu0 0.0
        %1131 = vmatprep.subr.mxu0 0.0
        %1132 = vmatpush1.msra.mxu0 0.0
        %1133 = vmatprep.subr.mxu0 0.0
        %1134 = vmatpush1.msra.mxu0 0.0
        %1135 = vmatprep.subr.mxu0 0.0
        %1136 = vmatpush1.msra.mxu0 0.0
        %1137 = vmatprep.subr.mxu0 0.0
        %1138 = vmatpush1.msra.mxu0 0.0
        %1139 = vmatprep.subr.mxu0 0.0
        %1140 = vmatpush1.msra.mxu0 0.0
        %1141 = vmatprep.subr.mxu0 0.0
        %1142 = vmatpush1.msra.mxu0 0.0
        %1143 = vmatprep.subr.mxu0 0.0
        %1144 = vmatpush1.msra.mxu0 0.0
        %1145 = vmatprep.subr.mxu0 0.0
        %1146 = vmatpush1.msra.mxu0 0.0
        %1147 = vmatprep.subr.mxu0 0.0
        %1148 = vmatpush1.msra.mxu0 0.0
        %1149 = vmatprep.subr.mxu0 0.0
        %1150 = vmatpush1.msra.mxu0 0.0
        %1151 = vmatprep.subr.mxu0 0.0
        %1152 = vmatpush1.msra.mxu0 0.0
        %1153 = vmatprep.subr.mxu0 0.0
        %1154 = vmatpush1.msra.mxu0 0.0
        %1155 = vmatprep.subr.mxu0 0.0
        %1156 = vmatpush1.msra.mxu0 0.0
        %1157 = vmatprep.subr.mxu0 0.0
        %1158 = vmatpush1.msra.mxu0 0.0
        %1159 = vmatprep.subr.mxu0 0.0
        %1160 = vmatpush1.msra.mxu0 0.0
        %1161 = vmatprep.subr.mxu0 0.0
        %1162 = vmatpush1.msra.mxu0 0.0
        %1163 = vmatprep.subr.mxu0 0.0
        %1164 = vmatpush1.msra.mxu0 0.0
        %1165 = vmatprep.subr.mxu0 0.0
        %1166 = vmatpush1.msra.mxu0 0.0
        %1167 = vmatprep.subr.mxu0 0.0
        %1168 = vmatpush1.msra.mxu0 0.0
        %1169 = vmatprep.subr.mxu0 0.0
        %1170 = vmatpush1.msra.mxu0 0.0
        %1171 = vmatprep.subr.mxu0 0.0
        %1172 = vmatpush1.msra.mxu0 0.0
        %1173 = vmatprep.subr.mxu0 0.0
        %1174 = vmatpush1.msra.mxu0 0.0
        %1175 = vmatprep.mubr.f32.mxu0 0.0
        %1176 = vmatmul.mubr.f32.gmra.mrb[0].mxu0 %v1106
        %v1177 = vpop.f32.mrb[0].mxu0
        %v1178 = vadd.f32 0.0, %v1177
        %v1179 = vpop.f32.mrb[0].mxu0
        %1180 = vmatprep.mubr.f32.mxu0 0.0
        %1181 = vmatmul.mubr.f32.gmra.mrb[0].mxu0 %v1109
        %v1182 = vpop.f32.mrb[0].mxu0
        %v1183 = vadd.f32 0.0, %v1182
        %v1184 = vpop.f32.mrb[0].mxu0
        %1185 = vdwg.mxu0
        %v1186 = vld [vmem:[#allocation4] sm:$0xff]
        %v1187 = vld [vmem:[#allocation4 + $0x8] sm:$0xff]
        %v1188 = vld [vmem:[#allocation4 + $0x10] sm:$0xff]
        %v1189 = vld [vmem:[#allocation4 + $0x18] sm:$0xff]
        %v1190 = vld [vmem:[#allocation4 + $0x20] sm:$0xff]
        %v1191 = vld [vmem:[#allocation4 + $0x28] sm:$0xff]
        %v1192 = vld [vmem:[#allocation4 + $0x30] sm:$0xff]
        %v1193 = vld [vmem:[#allocation4 + $0x38] sm:$0xff]
        %1195 = vset.pattern.permute.xlu0 0
        %1196 = vperm.xlu0 %1195, %v726
        %v1197 = vpop.permute.xlu0 %1196
        %1200 = vset.pattern.permute.xlu0 0
        %1201 = vperm.xlu0 %1200, %v728
        %v1202 = vpop.permute.xlu0 %1201
        %1205 = vset.pattern.permute.xlu0 0
        %1206 = vperm.xlu0 %1205, %v730
        %v1207 = vpop.permute.xlu0 %1206
        %1210 = vset.pattern.permute.xlu0 0
        %1211 = vperm.xlu0 %1210, %v732
        %v1212 = vpop.permute.xlu0 %1211
        %1215 = vset.pattern.permute.xlu0 0
        %1216 = vperm.xlu0 %1215, %v734
        %v1217 = vpop.permute.xlu0 %1216
        %1220 = vset.pattern.permute.xlu0 0
        %1221 = vperm.xlu0 %1220, %v736
        %v1222 = vpop.permute.xlu0 %1221
        %1225 = vset.pattern.permute.xlu0 0
        %1226 = vperm.xlu0 %1225, %v738
        %v1227 = vpop.permute.xlu0 %1226
        %1230 = vset.pattern.permute.xlu0 0
        %1231 = vperm.xlu0 %1230, %v740
        %v1232 = vpop.permute.xlu0 %1231
        %v1234 = vmul.f32 %v1197, %v1186
        %v1235 = vmul.f32 %v1202, %v1187
        %v1236 = vmul.f32 %v1207, %v1188
        %v1237 = vmul.f32 %v1212, %v1189
        %v1238 = vmul.f32 %v1217, %v1190
        %v1239 = vmul.f32 %v1222, %v1191
        %v1240 = vmul.f32 %v1227, %v1192
        %v1241 = vmul.f32 %v1232, %v1193
        %v1242 = vadd.f32 %v1234, %v935
        %v1243 = vadd.f32 %v1235, %v940
        %v1244 = vadd.f32 %v1236, %v1016
        %v1245 = vadd.f32 %v1237, %v1021
        %v1246 = vadd.f32 %v1238, %v1097
        %v1247 = vadd.f32 %v1239, %v1102
        %v1248 = vadd.f32 %v1240, %v1178
        %v1249 = vadd.f32 %v1241, %v1183
        %1250 = vst.msk [vmem:[#allocation4] sm:$0xff] %vm351, %v1242
        %1251 = vst.msk [vmem:[#allocation4 + $0x8] sm:$0xff] %vm351, %v1243
        %1252 = vst.msk [vmem:[#allocation4 + $0x10] sm:$0xff] %vm351, %v1244
        %1253 = vst.msk [vmem:[#allocation4 + $0x18] sm:$0xff] %vm351, %v1245
        %1254 = vst.msk [vmem:[#allocation4 + $0x20] sm:$0xff] %vm351, %v1246
        %1255 = vst.msk [vmem:[#allocation4 + $0x28] sm:$0xff] %vm351, %v1247
        %1256 = vst.msk [vmem:[#allocation4 + $0x30] sm:$0xff] %vm351, %v1248
        %1257 = vst.msk [vmem:[#allocation4 + $0x38] sm:$0xff] %vm351, %v1249
        %1258 = vst.msk [vmem:[#allocation2] sm:$0xff] %vm853, %v709
        %1259 = vst.msk [vmem:[#allocation2 + $0x8] sm:$0xff] %vm853, %v710
        %1260 = vst.msk [vmem:[#allocation2 + $0x10] sm:$0xff] %vm853, %v711
        %1261 = vst.msk [vmem:[#allocation2 + $0x18] sm:$0xff] %vm853, %v712
        %1262 = vst.msk [vmem:[#allocation2 + $0x20] sm:$0xff] %vm853, %v713
        %1263 = vst.msk [vmem:[#allocation2 + $0x28] sm:$0xff] %vm853, %v714
        %1264 = vst.msk [vmem:[#allocation2 + $0x30] sm:$0xff] %vm853, %v715
        %1265 = vst.msk [vmem:[#allocation2 + $0x38] sm:$0xff] %vm853, %v716
        // Predicated region
        $region49: #{attention_forward.8} parent=31 // pred_check
          %p1266 = pneg %p301
        $region50: #{attention_forward.8} parent=31 // pred_check_branch
          %1268 = sbr.rel (%p1266) target = $region52
        $region51: #{attention_forward.8} parent=31 // pred_region
          %v1269 = vld [vmem:[#allocation3] sm:$0xff]
          %v1270 = vld [vmem:[#allocation3 + $0x8] sm:$0xff]
          %v1271 = vld [vmem:[#allocation3 + $0x10] sm:$0xff]
          %v1272 = vld [vmem:[#allocation3 + $0x18] sm:$0xff]
          %v1273 = vld [vmem:[#allocation3 + $0x20] sm:$0xff]
          %v1274 = vld [vmem:[#allocation3 + $0x28] sm:$0xff]
          %v1275 = vld [vmem:[#allocation3 + $0x30] sm:$0xff]
          %v1276 = vld [vmem:[#allocation3 + $0x38] sm:$0xff]
          %v1277 = vrcp.pop %v1269
          %v1278 = vrcp.pop %v1270
          %v1279 = vrcp.pop %v1271
          %v1280 = vrcp.pop %v1272
          %v1281 = vrcp.pop %v1273
          %v1282 = vrcp.pop %v1274
          %v1283 = vrcp.pop %v1275
          %v1284 = vrcp.pop %v1276
          %v1285 = vld [vmem:[#allocation4] sm:$0xff]
          %v1286 = vld [vmem:[#allocation4 + $0x8] sm:$0xff]
          %v1287 = vld [vmem:[#allocation4 + $0x10] sm:$0xff]
          %v1288 = vld [vmem:[#allocation4 + $0x18] sm:$0xff]
          %v1289 = vld [vmem:[#allocation4 + $0x20] sm:$0xff]
          %v1290 = vld [vmem:[#allocation4 + $0x28] sm:$0xff]
          %v1291 = vld [vmem:[#allocation4 + $0x30] sm:$0xff]
          %v1292 = vld [vmem:[#allocation4 + $0x38] sm:$0xff]
          %1294 = vset.pattern.permute.xlu0 0
          %1295 = vperm.xlu0 %1294, %v1277
          %v1296 = vpop.permute.xlu0 %1295
          %1299 = vset.pattern.permute.xlu0 0
          %1300 = vperm.xlu0 %1299, %v1278
          %v1301 = vpop.permute.xlu0 %1300
          %1304 = vset.pattern.permute.xlu0 0
          %1305 = vperm.xlu0 %1304, %v1279
          %v1306 = vpop.permute.xlu0 %1305
          %1309 = vset.pattern.permute.xlu0 0
          %1310 = vperm.xlu0 %1309, %v1280
          %v1311 = vpop.permute.xlu0 %1310
          %1314 = vset.pattern.permute.xlu0 0
          %1315 = vperm.xlu0 %1314, %v1281
          %v1316 = vpop.permute.xlu0 %1315
          %1319 = vset.pattern.permute.xlu0 0
          %1320 = vperm.xlu0 %1319, %v1282
          %v1321 = vpop.permute.xlu0 %1320
          %1324 = vset.pattern.permute.xlu0 0
          %1325 = vperm.xlu0 %1324, %v1283
          %v1326 = vpop.permute.xlu0 %1325
          %1329 = vset.pattern.permute.xlu0 0
          %1330 = vperm.xlu0 %1329, %v1284
          %v1331 = vpop.permute.xlu0 %1330
          %v1333 = vmul.f32 %v1285, %v1296
          %v1334 = vmul.f32 %v1286, %v1301
          %v1335 = vmul.f32 %v1287, %v1306
          %v1336 = vmul.f32 %v1288, %v1311
          %v1337 = vmul.f32 %v1289, %v1316
          %v1338 = vmul.f32 %v1290, %v1321
          %v1339 = vmul.f32 %v1291, %v1326
          %v1340 = vmul.f32 %v1292, %v1331
          %1341 = vst.msk [vmem:[%s297] sm:$0xff] %vm351, %v1333
          %1342 = vst.msk [vmem:[%s297 + $0x8] sm:$0xff] %vm351, %v1334
          %1345 = vrot.lane.b32.xlu0 %v1335, 8
          %v1346 = vpop.permute.xlu0 %1345
          %1347 = vrot.lane.b32.xlu0 %v1336, 8
          %v1348 = vpop.permute.xlu0 %1347
          %vm1351 = vcmask 130112
          %1352 = vst.msk [vmem:[%s297] sm:$0xff] %vm1351, %v1346
          %1353 = vst.msk [vmem:[%s297 + $0x8] sm:$0xff] %vm1351, %v1348
          %1356 = vrot.lane.b32.xlu0 %v1337, 16
          %v1357 = vpop.permute.xlu0 %1356
          %1358 = vrot.lane.b32.xlu0 %v1338, 16
          %v1359 = vpop.permute.xlu0 %1358
          %vm1362 = vcmask 195712
          %1363 = vst.msk [vmem:[%s297] sm:$0xff] %vm1362, %v1357
          %1364 = vst.msk [vmem:[%s297 + $0x8] sm:$0xff] %vm1362, %v1359
          %1367 = vrot.lane.b32.xlu0 %v1339, 24
          %v1368 = vpop.permute.xlu0 %1367
          %1369 = vrot.lane.b32.xlu0 %v1340, 24
          %v1370 = vpop.permute.xlu0 %1369
          %vm1373 = vcmask 261312
          %1374 = vst.msk [vmem:[%s297] sm:$0xff] %vm1373, %v1368
          %1375 = vst.msk [vmem:[%s297 + $0x8] sm:$0xff] %vm1373, %v1370
        $region52: #{attention_forward.8} parent=31 // pred_fallthru
          _
        %s1376 = sand.u32 %s136, 1
        %s1377 = scalar_lea.sflag [#allocation7], %s1376
        %s1378 = sand.u32 %s136, 1
        %s1379 = smul.addr %s1378, 16
        %s1380 = scalar_lea.vmem [#allocation11], %s1379
        // Predicated region
        $region53: #{attention_forward.8} parent=31 // pred_check
          %p1381 = pneg %p146
        $region54: #{attention_forward.8} parent=31 // pred_check_branch
          %1383 = sbr.rel (%p1381) target = $region56
        $region55: #{attention_forward.8} parent=31 // pred_region
          %s1384 = smul.u32 2, %s29
          %s1386 = ssub.s32 256, 256
          %1387 = vsyncadd %s1377, %s1386
          %s1388 = smul.addr %s28, 2
          %s1389 = sadd.s32 %s1384, %s1388
          %s1390 = smul.addr %s1389, 128
          %s1391 = scalar_lea.hbm %s3, %s1390
          %s1392 = sshll.u32 %s1380, 4
          %s1393 = int_to_ptr.vmem [resolvable:$true] %s1392
          %1398 = dma.vmem_to_hbm [thread:$0]  %s1393, 256, %s1391, %s1377, 128, 128, 8
        $region56: #{attention_forward.8} parent=31 // pred_fallthru
          _
      $region32: #{attention_forward.8} parent=5 // pred_fallthru
        _
      %p1399 = scmp.le.s32.totalorder 2, %s18
      // Predicated region
      $region57: #{attention_forward.8} parent=5 // pred_check
        %p1400 = pneg %p1399
      $region58: #{attention_forward.8} parent=5 // pred_check_branch
        %1402 = sbr.rel (%p1400) target = $region60
      $region59: #{attention_forward.8} parent=5 // pred_region
        %s1403 = ssub.s32 %s18, 2
        // Predicated region
        $region61: #{attention_forward.8} parent=59 // pred_check
          %p1404 = pneg %p152
        $region62: #{attention_forward.8} parent=59 // pred_check_branch
          %1406 = sbr.rel (%p1404) target = $region64
        $region63: #{attention_forward.8} parent=59 // pred_region
          %s1407 = sand.u32 %s137, 1
          %s1408 = scalar_lea.sflag [#allocation7], %s1407
          %s1409 = sand.u32 %s137, 1
          %s1410 = smul.addr %s1409, 16
          %s1411 = scalar_lea.vmem [#allocation11], %s1410
          %1412 = dma.done %s1408, 256
        $region64: #{attention_forward.8} parent=59 // pred_fallthru
          _
      $region60: #{attention_forward.8} parent=5 // pred_fallthru
        _
    $region6: #{attention_forward.8} parent=1 // loop_footer
      %s22 = sadd.s32 1, %s18
    $region7: #{attention_forward.8} parent=1 // loop_footer_branch
      %17 = sbr.rel target = $region3
    $region8: #{attention_forward.8} parent=1 // loop_exit
      _
    %1413 = vsyncpa [#allocation6], 1
    %s1414 = scalar_lea.sflag [#allocation6], 1
    %1415 = vsyncpa %s1414, 1
    %1416 = vsyncpa [#allocation9], 1
    %s1417 = scalar_lea.sflag [#allocation9], 1
    %1418 = vsyncpa %s1417, 1
    %1419 = vsyncpa [#allocation7], 1
    %s1420 = scalar_lea.sflag [#allocation7], 1
    %1421 = vsyncpa %s1420, 1

</llo_original>
